<compile_context>
chip_gen: v6e
topology: v6e:2x2x1
jax: 0.10.0
libtpu: 0.0.40
codegen_flags: <defaults>
</compile_context>

<pallas_src>
import jax
import jax.numpy as jnp
import numpy as np
from jax.experimental import pallas as pl
from jax.experimental.pallas import tpu as pltpu


KERNEL_SIZE = 3
NEG_SLOPE = 0.2
FEAT = 24 * 6                 # 144 rotation features (un-padded at the I/O boundary)
C_PAD = 256                   # internal lane-dense hidden-channel width
ENC_CHANNELS = [144, 192, 256]
DEC_CHANNELS = [256, 192, 144]


# ----------------------------------------------------------------------------
# In-kernel value helpers
# ----------------------------------------------------------------------------
def _bias_act(acc, b, neg_slope):
    """f32 epilogue: bias add (+ optional LeakyReLU)."""
    v = acc + b
    if neg_slope is None:
        return v
    return jnp.where(v >= 0, v, neg_slope * v)


def _shift_down(x):
    """row t <- x[t-1], row 0 <- 0 (left zero halo along time)."""
    n = x.shape[0]
    if n == 1:
        return jnp.zeros_like(x)
    if n % 8 == 0:
        # Sublane-tile aligned: XLU rotate (free slot) + boundary mask.
        r = pltpu.roll(x, shift=1, axis=0)
        row = jax.lax.broadcasted_iota(jnp.int32, (n, 1), 0)
        return jnp.where(row == 0, jnp.zeros_like(r), r)
    # Tiny / unaligned tiles (e.g. the toy test shapes): plain concat shift.
    return jnp.concatenate([jnp.zeros_like(x[:1]), x[:-1]], axis=0)


def _shift_up(x):
    """row t <- x[t+1], last row <- 0 (right zero halo along time)."""
    n = x.shape[0]
    if n == 1:
        return jnp.zeros_like(x)
    if n % 8 == 0:
        r = pltpu.roll(x, shift=n - 1, axis=0)
        row = jax.lax.broadcasted_iota(jnp.int32, (n, 1), 0)
        return jnp.where(row == n - 1, jnp.zeros_like(r), r)
    return jnp.concatenate([x[1:], jnp.zeros_like(x[:1])], axis=0)


# ----------------------------------------------------------------------------
# Fused MotionAE kernel: encoder (2x stride-2) -> latent -> decoder (2x up+conv)
# All arrays live in VMEM; each conv layer is im2col matmul(s) on the MXU.
# ----------------------------------------------------------------------------
def _motion_ae_kernel(x_ref, we0_ref, be0_ref, we1_ref, be1_ref,
                      wd0e_ref, wd0o_ref, bd0_ref,
                      wd1e_ref, wd1o_ref, bd1_ref, o_ref):
    f32, bf16 = jnp.float32, jnp.bfloat16
    x = x_ref[...]                                      # (T/4, 4*144) f32, 4-phase rows

    # --- encoder layer 0 (stride-2, K=3, pad=1): outputs produced directly in
    #     even/odd phase form, so no sublane deinterleave is ever needed. ------
    #   h_e[s] = f(W0 x[4s-1] + W1 x[4s]   + W2 x[4s+1] + b)
    #   h_o[s] = f(W0 x[4s+1] + W1 x[4s+2] + W2 x[4s+3] + b)
    x3 = x[:, 3 * FEAT:]                                # x[4s+3] phase (144 lanes)
    cols_e = jnp.concatenate([_shift_down(x3), x[:, :2 * FEAT]], axis=-1)   # (T/4, 432)
    h_e = _bias_act(jnp.dot(cols_e.astype(bf16), we0_ref[...],
                            preferred_element_type=f32), be0_ref[...], NEG_SLOPE)
    cols_o = x[:, FEAT:].astype(bf16)                   # contiguous [x1|x2|x3] (T/4, 432)
    h_o = _bias_act(jnp.dot(cols_o, we0_ref[...],
                            preferred_element_type=f32), be0_ref[...], NEG_SLOPE)

    # --- encoder layer 1 (stride-2): latent z at T/4. -------------------------
    #   z[s] = f(W0 h_o[s-1] + W1 h_e[s] + W2 h_o[s] + b)
    cols_z = jnp.concatenate([_shift_down(h_o).astype(bf16),
                              h_e.astype(bf16), h_o.astype(bf16)], axis=-1)  # (T/4, 768)
    z = _bias_act(jnp.dot(cols_z, we1_ref[...],
                          preferred_element_type=f32), be1_ref[...], NEG_SLOPE)
    zb = z.astype(bf16)

    # --- decoder layer 0: nearest-x2 upsample folded into phase weights. ------
    #   d_e[s] = f(W0 z[s-1] + (W1+W2) z[s] + b);  d_o[s] = f((W0+W1) z[s] + W2 z[s+1] + b)
    d_e = _bias_act(jnp.dot(jnp.concatenate([_shift_down(z).astype(bf16), zb], axis=-1),
                            wd0e_ref[...], preferred_element_type=f32),
                    bd0_ref[...], NEG_SLOPE)
    d_o = _bias_act(jnp.dot(jnp.concatenate([zb, _shift_up(z).astype(bf16)], axis=-1),
                            wd0o_ref[...], preferred_element_type=f32),
                    bd0_ref[...], NEG_SLOPE)
    d_eb, d_ob = d_e.astype(bf16), d_o.astype(bf16)

    # --- decoder layer 1 (output layer, no activation): four full-res phases
    #     y[4s+j]; cout = 144 (un-padded), so nothing is stored then stripped. --
    b_out = bd1_ref[...]
    cols_mid = jnp.concatenate([d_eb, d_ob], axis=-1)                        # (T/4, 512)
    y0 = jnp.dot(jnp.concatenate([_shift_down(d_o).astype(bf16), d_eb], axis=-1),
                 wd1e_ref[...], preferred_element_type=f32) + b_out
    y1 = jnp.dot(cols_mid, wd1o_ref[...], preferred_element_type=f32) + b_out
    y2 = jnp.dot(cols_mid, wd1e_ref[...], preferred_element_type=f32) + b_out
    y3 = jnp.dot(jnp.concatenate([d_ob, _shift_up(d_e).astype(bf16)], axis=-1),
                 wd1o_ref[...], preferred_element_type=f32) + b_out

    # Lane-concatenated 4-phase output row; the wrapper's contiguous reshape
    # (B, T/4, 4*144) -> (B, T, 144) undoes the interleave for free.
    o_ref[...] = jnp.concatenate([y0, y1, y2, y3], axis=-1).astype(o_ref.dtype)


# ----------------------------------------------------------------------------
# Parameters (deterministic, synthetic — no checkpoint load)
# ----------------------------------------------------------------------------
def init_params(key):
    def make_layer(k, cin, cout):
        fan_in = KERNEL_SIZE * cin
        w = jax.random.normal(k, (KERNEL_SIZE, cin, cout), jnp.float32) / np.sqrt(fan_in)
        b = jnp.zeros((cout,), jnp.float32)
        return w, b

    n_enc = len(ENC_CHANNELS) - 1
    n_dec = len(DEC_CHANNELS) - 1
    keys = jax.random.split(key, n_enc + n_dec)
    enc = [make_layer(keys[i], ENC_CHANNELS[i], ENC_CHANNELS[i + 1])
           for i in range(n_enc)]
    dec = [make_layer(keys[n_enc + i], DEC_CHANNELS[i], DEC_CHANNELS[i + 1])
           for i in range(n_dec)]
    return {"enc": enc, "dec": dec}


def prepare_params(params):
    """Flatten encoder taps into (K*cin, cout) im2col matrices, fold the decoder's
    nearest-x2 upsample into phase-specific (2*cin, cout) matrices, pad hidden
    channels to a lane-dense 256 with zero rows/cols, and cast weights to bf16
    (biases stay f32).  Layer-0 cin (144) and the output cout (144) are NOT padded,
    so no padded lanes ever cross the HBM boundary."""
    (we0_, be0_), (we1_, be1_) = params["enc"]
    (wd0_, bd0_), (wd1_, bd1_) = params["dec"]

    def pad_io(w, cin_to, cout_to):
        k, cin, cout = w.shape
        return jnp.pad(w, ((0, 0), (0, cin_to - cin), (0, cout_to - cout)))

    def pad_b(b, cout_to):
        return jnp.pad(b, (0, cout_to - b.shape[0])).reshape(1, cout_to).astype(jnp.float32)

    # Encoder layer 0: cin = 144 kept un-padded (K = 3*144), cout padded to 256.
    w = pad_io(we0_, FEAT, C_PAD)
    we0 = w.reshape(KERNEL_SIZE * FEAT, C_PAD).astype(jnp.bfloat16)
    be0 = pad_b(be0_, C_PAD)

    # Encoder layer 1: cin padded to 256, cout = 256.
    w = pad_io(we1_, C_PAD, C_PAD)
    we1 = w.reshape(KERNEL_SIZE * C_PAD, C_PAD).astype(jnp.bfloat16)
    be1 = pad_b(be1_, C_PAD)

    # Decoder layer 0: fold nearest-x2 upsample; cin = 256, cout padded to 256.
    w = pad_io(wd0_, C_PAD, C_PAD)
    wd0e = jnp.concatenate([w[0], w[1] + w[2]], axis=0).astype(jnp.bfloat16)
    wd0o = jnp.concatenate([w[0] + w[1], w[2]], axis=0).astype(jnp.bfloat16)
    bd0 = pad_b(bd0_, C_PAD)

    # Decoder layer 1 (output): cin padded to 256, cout = 144 un-padded.
    w = pad_io(wd1_, C_PAD, FEAT)
    wd1e = jnp.concatenate([w[0], w[1] + w[2]], axis=0).astype(jnp.bfloat16)
    wd1o = jnp.concatenate([w[0] + w[1], w[2]], axis=0).astype(jnp.bfloat16)
    bd1 = bd1_.reshape(1, FEAT).astype(jnp.float32)

    return (we0, be0, we1, be1, wd0e, wd0o, bd0, wd1e, wd1o, bd1)


# ----------------------------------------------------------------------------
# pallas_call plumbing
# ----------------------------------------------------------------------------
def _vmem_limit_bytes():
    # Size the scoped-VMEM request per generation (v7x: 64 MiB physical vs 128 MiB
    # on v5e/v6e).  Weights (~1.4 MiB) + double-buffered I/O blocks need only a few
    # MiB here, so <= 32 MiB leaves ample headroom everywhere.
    try:
        cap = int(pltpu.get_tpu_info().vmem_capacity_bytes)
    except Exception:
        cap = 64 * 1024 * 1024
    return min(cap // 2, 32 * 1024 * 1024)


def _cost_estimate(batch, t4, prepped):
    flops_per_row = 2 * (
        2 * (KERNEL_SIZE * FEAT) * C_PAD      # encoder layer 0 (two phase matmuls)
        + (KERNEL_SIZE * C_PAD) * C_PAD       # encoder layer 1
        + 2 * (2 * C_PAD) * C_PAD             # decoder layer 0 (two phase matmuls)
        + 4 * (2 * C_PAD) * FEAT)             # decoder layer 1 (four phase matmuls)
    io_bytes = 2 * batch * t4 * 4 * FEAT * 4  # f32 input + output, exactly 144 lanes/frame
    w_bytes = sum(int(np.prod(p.shape)) * p.dtype.itemsize for p in prepped)
    return pl.CostEstimate(flops=batch * t4 * flops_per_row,
                           transcendentals=0,
                           bytes_accessed=io_bytes + w_bytes)


def motion_ae_forward(params, seq_rot_6d):
    """(bs, T, 24*6) -> (bs, T, 24*6)."""
    B, T, F = seq_rot_6d.shape
    assert F == FEAT, f"expected {FEAT} rotation features, got {F}"
    assert T % 4 == 0, "temporal length must be divisible by 4 (two stride-2 stages)"
    T4 = T // 4

    prepped = prepare_params(params)

    # Free contiguous reshape: 4 consecutive frames share one lane-dense row, so the
    # kernel needs no wrapper-side channel pad/slice HBM passes and no in-kernel
    # sublane (de)interleave.
    x4 = seq_rot_6d.reshape(B, T4, 4 * FEAT)

    # Weight/bias specs: constant index_map -> resident in VMEM, re-fetch skipped
    # across grid steps (double-buffer cost ~1.4 MiB, negligible within the limit).
    weight_specs = [pl.BlockSpec(p.shape, lambda i: (0, 0)) for p in prepped]

    out = pl.pallas_call(
        _motion_ae_kernel,
        out_shape=jax.ShapeDtypeStruct((B, T4, 4 * FEAT), seq_rot_6d.dtype),
        grid=(B,),
        in_specs=[pl.BlockSpec((None, T4, 4 * FEAT), lambda i: (i, 0, 0))] + weight_specs,
        out_specs=pl.BlockSpec((None, T4, 4 * FEAT), lambda i: (i, 0, 0)),
        compiler_params=pltpu.CompilerParams(
            dimension_semantics=("parallel",),
            vmem_limit_bytes=_vmem_limit_bytes()),
        cost_estimate=_cost_estimate(B, T4, prepped),
    )(x4, *prepped)

    # Contiguous reshape undoes the 4-phase lane concatenation.
    return out.reshape(B, T, FEAT)


# ----------------------------------------------------------------------------
# Pure-JAX reference (mirrors the kernel's bf16-matmul / f32-epilogue math)
# ----------------------------------------------------------------------------
def _conv1d_ref(x, w, b, *, stride, padding, neg_slope):
    y = jax.lax.conv_general_dilated(
        x.astype(jnp.bfloat16), w.astype(jnp.bfloat16),
        window_strides=(stride,), padding=[(padding, padding)],
        dimension_numbers=("NWC", "WIO", "NWC"),
        preferred_element_type=jnp.float32,
    )
    y = y + b[None, None, :]
    if neg_slope is not None:
        y = jnp.where(y >= 0, y, neg_slope * y)
    return y


def _forward_ref(params, x):
    h = x
    for (w, b) in params["enc"]:
        h = _conv1d_ref(h, w, b, stride=2, padding=1, neg_slope=NEG_SLOPE)
    n = len(params["dec"])
    for i, (w, b) in enumerate(params["dec"]):
        h = jnp.repeat(h, 2, axis=1)                      # nearest temporal x2
        ns = NEG_SLOPE if i < n - 1 else None
        h = _conv1d_ref(h, w, b, stride=1, padding=1, neg_slope=ns)
    return h


if __name__ == "__main__":
    key = jax.random.PRNGKey(0)
    pkey, xkey = jax.random.split(key)

    params = init_params(pkey)

    bs, T = 2, 8
    seq_rot_6d = jax.random.normal(xkey, (bs, T, FEAT), jnp.float32)

    rec = jax.block_until_ready(motion_ae_forward(params, seq_rot_6d))
    assert rec.shape == (bs, T, FEAT), rec.shape

    ref = jax.block_until_ready(_forward_ref(params, seq_rot_6d))
    np.testing.assert_allclose(np.asarray(rec), np.asarray(ref),
                               rtol=2e-2, atol=2e-2)

    print("KERNEL_OK")
</pallas_src>

<mosaic_0001>
module attributes {stable_mosaic.version = 11 : i64} {
  func.func @_motion_ae_kernel(%arg0: i32, %arg1: memref<1x2x576xf32, #tpu.memory_space<vmem>>, %arg2: memref<432x256xbf16, #tpu.memory_space<vmem>>, %arg3: memref<1x256xf32, #tpu.memory_space<vmem>>, %arg4: memref<768x256xbf16, #tpu.memory_space<vmem>>, %arg5: memref<1x256xf32, #tpu.memory_space<vmem>>, %arg6: memref<512x256xbf16, #tpu.memory_space<vmem>>, %arg7: memref<512x256xbf16, #tpu.memory_space<vmem>>, %arg8: memref<1x256xf32, #tpu.memory_space<vmem>>, %arg9: memref<512x144xbf16, #tpu.memory_space<vmem>>, %arg10: memref<512x144xbf16, #tpu.memory_space<vmem>>, %arg11: memref<1x144xf32, #tpu.memory_space<vmem>>, %arg12: memref<1x2x576xf32, #tpu.memory_space<vmem>>) attributes {dimension_semantics = [#tpu.dimension_semantics<parallel>], iteration_bounds = array<i64: 2>, scalar_prefetch = 0 : i64, scratch_operands = 0 : i64, tpu.core_type = #tpu.core_type<tc>, window_params = [{transform_indices = @transform_0, window_bounds = array<i64: 1, 2, 576>}, {pipeline_mode = #tpu.pipeline_mode<synchronous>, transform_indices = @transform_1, window_bounds = array<i64: 432, 256>}, {pipeline_mode = #tpu.pipeline_mode<synchronous>, transform_indices = @transform_2, window_bounds = array<i64: 1, 256>}, {pipeline_mode = #tpu.pipeline_mode<synchronous>, transform_indices = @transform_3, window_bounds = array<i64: 768, 256>}, {pipeline_mode = #tpu.pipeline_mode<synchronous>, transform_indices = @transform_4, window_bounds = array<i64: 1, 256>}, {pipeline_mode = #tpu.pipeline_mode<synchronous>, transform_indices = @transform_5, window_bounds = array<i64: 512, 256>}, {pipeline_mode = #tpu.pipeline_mode<synchronous>, transform_indices = @transform_6, window_bounds = array<i64: 512, 256>}, {pipeline_mode = #tpu.pipeline_mode<synchronous>, transform_indices = @transform_7, window_bounds = array<i64: 1, 256>}, {pipeline_mode = #tpu.pipeline_mode<synchronous>, transform_indices = @transform_8, window_bounds = array<i64: 512, 144>}, {pipeline_mode = #tpu.pipeline_mode<synchronous>, transform_indices = @transform_9, window_bounds = array<i64: 512, 144>}, {pipeline_mode = #tpu.pipeline_mode<synchronous>, transform_indices = @transform_10, window_bounds = array<i64: 1, 144>}, {transform_indices = @transform_11, window_bounds = array<i64: 1, 2, 576>}]} {
    %c0 = arith.constant 0 : index
    %c0_0 = arith.constant 0 : index
    %c0_1 = arith.constant 0 : index
    %0 = vector.load %arg1[%c0, %c0_0, %c0_1] : memref<1x2x576xf32, #tpu.memory_space<vmem>>, vector<1x2x576xf32>
    %1 = vector.shape_cast %0 : vector<1x2x576xf32> to vector<2x576xf32>
    %2 = vector.extract_strided_slice %1 {offsets = [0, 432], sizes = [2, 144], strides = [1, 1]} : vector<2x576xf32> to vector<2x144xf32>
    %cst = arith.constant 0.000000e+00 : f32
    %3 = vector.broadcast %cst : f32 to vector<1x144xf32>
    %4 = vector.extract_strided_slice %2 {offsets = [0, 0], sizes = [1, 144], strides = [1, 1]} : vector<2x144xf32> to vector<1x144xf32>
    %5 = tpu.concatenate %3, %4 in 0 : vector<1x144xf32>, vector<1x144xf32> -> vector<2x144xf32>
    %6 = vector.extract_strided_slice %1 {offsets = [0, 0], sizes = [2, 288], strides = [1, 1]} : vector<2x576xf32> to vector<2x288xf32>
    %7 = tpu.concatenate %5, %6 in 1 : vector<2x144xf32>, vector<2x288xf32> -> vector<2x432xf32>
    %8 = arith.truncf %7 : vector<2x432xf32> to vector<2x432xbf16>
    %c0_2 = arith.constant 0 : index
    %c0_3 = arith.constant 0 : index
    %9 = vector.load %arg2[%c0_2, %c0_3] : memref<432x256xbf16, #tpu.memory_space<vmem>>, vector<432x256xbf16>
    %cst_4 = arith.constant dense<0.000000e+00> : vector<2x256xf32>
    %10 = tpu.matmul %8, %9, %cst_4 {dimension_numbers = #tpu.dot_dimension_numbers<[1], [0], [0], [1], [0, 0, 1, 1], [], []>} : vector<2x432xbf16>, vector<432x256xbf16>, vector<2x256xf32> -> vector<2x256xf32>
    %c0_5 = arith.constant 0 : index
    %c0_6 = arith.constant 0 : index
    %11 = vector.load %arg3[%c0_5, %c0_6] : memref<1x256xf32, #tpu.memory_space<vmem>>, vector<1x256xf32>
    %12 = vector.broadcast %11 : vector<1x256xf32> to vector<2x256xf32>
    %13 = arith.addf %10, %12 : vector<2x256xf32>
    %cst_7 = arith.constant 0.000000e+00 : f32
    %14 = vector.broadcast %cst_7 : f32 to vector<2x256xf32>
    %15 = arith.cmpf oge, %13, %14 : vector<2x256xf32>
    %cst_8 = arith.constant 2.000000e-01 : f32
    %16 = vector.broadcast %cst_8 : f32 to vector<2x256xf32>
    %17 = arith.mulf %16, %13 : vector<2x256xf32>
    %18 = arith.select %15, %13, %17 : vector<2x256xi1>, vector<2x256xf32>
    %19 = vector.extract_strided_slice %1 {offsets = [0, 144], sizes = [2, 432], strides = [1, 1]} : vector<2x576xf32> to vector<2x432xf32>
    %20 = arith.truncf %19 : vector<2x432xf32> to vector<2x432xbf16>
    %c0_9 = arith.constant 0 : index
    %c0_10 = arith.constant 0 : index
    %21 = vector.load %arg2[%c0_9, %c0_10] : memref<432x256xbf16, #tpu.memory_space<vmem>>, vector<432x256xbf16>
    %cst_11 = arith.constant dense<0.000000e+00> : vector<2x256xf32>
    %22 = tpu.matmul %20, %21, %cst_11 {dimension_numbers = #tpu.dot_dimension_numbers<[1], [0], [0], [1], [0, 0, 1, 1], [], []>} : vector<2x432xbf16>, vector<432x256xbf16>, vector<2x256xf32> -> vector<2x256xf32>
    %c0_12 = arith.constant 0 : index
    %c0_13 = arith.constant 0 : index
    %23 = vector.load %arg3[%c0_12, %c0_13] : memref<1x256xf32, #tpu.memory_space<vmem>>, vector<1x256xf32>
    %24 = vector.broadcast %23 : vector<1x256xf32> to vector<2x256xf32>
    %25 = arith.addf %22, %24 : vector<2x256xf32>
    %cst_14 = arith.constant 0.000000e+00 : f32
    %26 = vector.broadcast %cst_14 : f32 to vector<2x256xf32>
    %27 = arith.cmpf oge, %25, %26 : vector<2x256xf32>
    %cst_15 = arith.constant 2.000000e-01 : f32
    %28 = vector.broadcast %cst_15 : f32 to vector<2x256xf32>
    %29 = arith.mulf %28, %25 : vector<2x256xf32>
    %30 = arith.select %27, %25, %29 : vector<2x256xi1>, vector<2x256xf32>
    %cst_16 = arith.constant 0.000000e+00 : f32
    %31 = vector.broadcast %cst_16 : f32 to vector<1x256xf32>
    %32 = vector.extract_strided_slice %30 {offsets = [0, 0], sizes = [1, 256], strides = [1, 1]} : vector<2x256xf32> to vector<1x256xf32>
    %33 = tpu.concatenate %31, %32 in 0 : vector<1x256xf32>, vector<1x256xf32> -> vector<2x256xf32>
    %34 = arith.truncf %33 : vector<2x256xf32> to vector<2x256xbf16>
    %35 = arith.truncf %18 : vector<2x256xf32> to vector<2x256xbf16>
    %36 = arith.truncf %30 : vector<2x256xf32> to vector<2x256xbf16>
    %37 = tpu.concatenate %34, %35, %36 in 1 : vector<2x256xbf16>, vector<2x256xbf16>, vector<2x256xbf16> -> vector<2x768xbf16>
    %c0_17 = arith.constant 0 : index
    %c0_18 = arith.constant 0 : index
    %38 = vector.load %arg4[%c0_17, %c0_18] : memref<768x256xbf16, #tpu.memory_space<vmem>>, vector<768x256xbf16>
    %cst_19 = arith.constant dense<0.000000e+00> : vector<2x256xf32>
    %39 = tpu.matmul %37, %38, %cst_19 {dimension_numbers = #tpu.dot_dimension_numbers<[1], [0], [0], [1], [0, 0, 1, 1], [], []>} : vector<2x768xbf16>, vector<768x256xbf16>, vector<2x256xf32> -> vector<2x256xf32>
    %c0_20 = arith.constant 0 : index
    %c0_21 = arith.constant 0 : index
    %40 = vector.load %arg5[%c0_20, %c0_21] : memref<1x256xf32, #tpu.memory_space<vmem>>, vector<1x256xf32>
    %41 = vector.broadcast %40 : vector<1x256xf32> to vector<2x256xf32>
    %42 = arith.addf %39, %41 : vector<2x256xf32>
    %cst_22 = arith.constant 0.000000e+00 : f32
    %43 = vector.broadcast %cst_22 : f32 to vector<2x256xf32>
    %44 = arith.cmpf oge, %42, %43 : vector<2x256xf32>
    %cst_23 = arith.constant 2.000000e-01 : f32
    %45 = vector.broadcast %cst_23 : f32 to vector<2x256xf32>
    %46 = arith.mulf %45, %42 : vector<2x256xf32>
    %47 = arith.select %44, %42, %46 : vector<2x256xi1>, vector<2x256xf32>
    %48 = arith.truncf %47 : vector<2x256xf32> to vector<2x256xbf16>
    %cst_24 = arith.constant 0.000000e+00 : f32
    %49 = vector.broadcast %cst_24 : f32 to vector<1x256xf32>
    %50 = vector.extract_strided_slice %47 {offsets = [0, 0], sizes = [1, 256], strides = [1, 1]} : vector<2x256xf32> to vector<1x256xf32>
    %51 = tpu.concatenate %49, %50 in 0 : vector<1x256xf32>, vector<1x256xf32> -> vector<2x256xf32>
    %52 = arith.truncf %51 : vector<2x256xf32> to vector<2x256xbf16>
    %53 = tpu.concatenate %52, %48 in 1 : vector<2x256xbf16>, vector<2x256xbf16> -> vector<2x512xbf16>
    %c0_25 = arith.constant 0 : index
    %c0_26 = arith.constant 0 : index
    %54 = vector.load %arg6[%c0_25, %c0_26] : memref<512x256xbf16, #tpu.memory_space<vmem>>, vector<512x256xbf16>
    %cst_27 = arith.constant dense<0.000000e+00> : vector<2x256xf32>
    %55 = tpu.matmul %53, %54, %cst_27 {dimension_numbers = #tpu.dot_dimension_numbers<[1], [0], [0], [1], [0, 0, 1, 1], [], []>} : vector<2x512xbf16>, vector<512x256xbf16>, vector<2x256xf32> -> vector<2x256xf32>
    %c0_28 = arith.constant 0 : index
    %c0_29 = arith.constant 0 : index
    %56 = vector.load %arg8[%c0_28, %c0_29] : memref<1x256xf32, #tpu.memory_space<vmem>>, vector<1x256xf32>
    %57 = vector.broadcast %56 : vector<1x256xf32> to vector<2x256xf32>
    %58 = arith.addf %55, %57 : vector<2x256xf32>
    %cst_30 = arith.constant 0.000000e+00 : f32
    %59 = vector.broadcast %cst_30 : f32 to vector<2x256xf32>
    %60 = arith.cmpf oge, %58, %59 : vector<2x256xf32>
    %cst_31 = arith.constant 2.000000e-01 : f32
    %61 = vector.broadcast %cst_31 : f32 to vector<2x256xf32>
    %62 = arith.mulf %61, %58 : vector<2x256xf32>
    %63 = arith.select %60, %58, %62 : vector<2x256xi1>, vector<2x256xf32>
    %64 = vector.extract_strided_slice %47 {offsets = [1, 0], sizes = [1, 256], strides = [1, 1]} : vector<2x256xf32> to vector<1x256xf32>
    %cst_32 = arith.constant 0.000000e+00 : f32
    %65 = vector.broadcast %cst_32 : f32 to vector<1x256xf32>
    %66 = tpu.concatenate %64, %65 in 0 : vector<1x256xf32>, vector<1x256xf32> -> vector<2x256xf32>
    %67 = arith.truncf %66 : vector<2x256xf32> to vector<2x256xbf16>
    %68 = tpu.concatenate %48, %67 in 1 : vector<2x256xbf16>, vector<2x256xbf16> -> vector<2x512xbf16>
    %c0_33 = arith.constant 0 : index
    %c0_34 = arith.constant 0 : index
    %69 = vector.load %arg7[%c0_33, %c0_34] : memref<512x256xbf16, #tpu.memory_space<vmem>>, vector<512x256xbf16>
    %cst_35 = arith.constant dense<0.000000e+00> : vector<2x256xf32>
    %70 = tpu.matmul %68, %69, %cst_35 {dimension_numbers = #tpu.dot_dimension_numbers<[1], [0], [0], [1], [0, 0, 1, 1], [], []>} : vector<2x512xbf16>, vector<512x256xbf16>, vector<2x256xf32> -> vector<2x256xf32>
    %c0_36 = arith.constant 0 : index
    %c0_37 = arith.constant 0 : index
    %71 = vector.load %arg8[%c0_36, %c0_37] : memref<1x256xf32, #tpu.memory_space<vmem>>, vector<1x256xf32>
    %72 = vector.broadcast %71 : vector<1x256xf32> to vector<2x256xf32>
    %73 = arith.addf %70, %72 : vector<2x256xf32>
    %cst_38 = arith.constant 0.000000e+00 : f32
    %74 = vector.broadcast %cst_38 : f32 to vector<2x256xf32>
    %75 = arith.cmpf oge, %73, %74 : vector<2x256xf32>
    %cst_39 = arith.constant 2.000000e-01 : f32
    %76 = vector.broadcast %cst_39 : f32 to vector<2x256xf32>
    %77 = arith.mulf %76, %73 : vector<2x256xf32>
    %78 = arith.select %75, %73, %77 : vector<2x256xi1>, vector<2x256xf32>
    %79 = arith.truncf %63 : vector<2x256xf32> to vector<2x256xbf16>
    %80 = arith.truncf %78 : vector<2x256xf32> to vector<2x256xbf16>
    %c0_40 = arith.constant 0 : index
    %c0_41 = arith.constant 0 : index
    %81 = vector.load %arg11[%c0_40, %c0_41] : memref<1x144xf32, #tpu.memory_space<vmem>>, vector<1x144xf32>
    %82 = tpu.concatenate %79, %80 in 1 : vector<2x256xbf16>, vector<2x256xbf16> -> vector<2x512xbf16>
    %cst_42 = arith.constant 0.000000e+00 : f32
    %83 = vector.broadcast %cst_42 : f32 to vector<1x256xf32>
    %84 = vector.extract_strided_slice %78 {offsets = [0, 0], sizes = [1, 256], strides = [1, 1]} : vector<2x256xf32> to vector<1x256xf32>
    %85 = tpu.concatenate %83, %84 in 0 : vector<1x256xf32>, vector<1x256xf32> -> vector<2x256xf32>
    %86 = arith.truncf %85 : vector<2x256xf32> to vector<2x256xbf16>
    %87 = tpu.concatenate %86, %79 in 1 : vector<2x256xbf16>, vector<2x256xbf16> -> vector<2x512xbf16>
    %c0_43 = arith.constant 0 : index
    %c0_44 = arith.constant 0 : index
    %88 = vector.load %arg9[%c0_43, %c0_44] : memref<512x144xbf16, #tpu.memory_space<vmem>>, vector<512x144xbf16>
    %cst_45 = arith.constant dense<0.000000e+00> : vector<2x144xf32>
    %89 = tpu.matmul %87, %88, %cst_45 {dimension_numbers = #tpu.dot_dimension_numbers<[1], [0], [0], [1], [0, 0, 1, 1], [], []>} : vector<2x512xbf16>, vector<512x144xbf16>, vector<2x144xf32> -> vector<2x144xf32>
    %90 = vector.broadcast %81 : vector<1x144xf32> to vector<2x144xf32>
    %91 = arith.addf %89, %90 : vector<2x144xf32>
    %c0_46 = arith.constant 0 : index
    %c0_47 = arith.constant 0 : index
    %92 = vector.load %arg10[%c0_46, %c0_47] : memref<512x144xbf16, #tpu.memory_space<vmem>>, vector<512x144xbf16>
    %cst_48 = arith.constant dense<0.000000e+00> : vector<2x144xf32>
    %93 = tpu.matmul %82, %92, %cst_48 {dimension_numbers = #tpu.dot_dimension_numbers<[1], [0], [0], [1], [0, 0, 1, 1], [], []>} : vector<2x512xbf16>, vector<512x144xbf16>, vector<2x144xf32> -> vector<2x144xf32>
    %94 = vector.broadcast %81 : vector<1x144xf32> to vector<2x144xf32>
    %95 = arith.addf %93, %94 : vector<2x144xf32>
    %c0_49 = arith.constant 0 : index
    %c0_50 = arith.constant 0 : index
    %96 = vector.load %arg9[%c0_49, %c0_50] : memref<512x144xbf16, #tpu.memory_space<vmem>>, vector<512x144xbf16>
    %cst_51 = arith.constant dense<0.000000e+00> : vector<2x144xf32>
    %97 = tpu.matmul %82, %96, %cst_51 {dimension_numbers = #tpu.dot_dimension_numbers<[1], [0], [0], [1], [0, 0, 1, 1], [], []>} : vector<2x512xbf16>, vector<512x144xbf16>, vector<2x144xf32> -> vector<2x144xf32>
    %98 = vector.broadcast %81 : vector<1x144xf32> to vector<2x144xf32>
    %99 = arith.addf %97, %98 : vector<2x144xf32>
    %100 = vector.extract_strided_slice %63 {offsets = [1, 0], sizes = [1, 256], strides = [1, 1]} : vector<2x256xf32> to vector<1x256xf32>
    %cst_52 = arith.constant 0.000000e+00 : f32
    %101 = vector.broadcast %cst_52 : f32 to vector<1x256xf32>
    %102 = tpu.concatenate %100, %101 in 0 : vector<1x256xf32>, vector<1x256xf32> -> vector<2x256xf32>
    %103 = arith.truncf %102 : vector<2x256xf32> to vector<2x256xbf16>
    %104 = tpu.concatenate %80, %103 in 1 : vector<2x256xbf16>, vector<2x256xbf16> -> vector<2x512xbf16>
    %c0_53 = arith.constant 0 : index
    %c0_54 = arith.constant 0 : index
    %105 = vector.load %arg10[%c0_53, %c0_54] : memref<512x144xbf16, #tpu.memory_space<vmem>>, vector<512x144xbf16>
    %cst_55 = arith.constant dense<0.000000e+00> : vector<2x144xf32>
    %106 = tpu.matmul %104, %105, %cst_55 {dimension_numbers = #tpu.dot_dimension_numbers<[1], [0], [0], [1], [0, 0, 1, 1], [], []>} : vector<2x512xbf16>, vector<512x144xbf16>, vector<2x144xf32> -> vector<2x144xf32>
    %107 = vector.broadcast %81 : vector<1x144xf32> to vector<2x144xf32>
    %108 = arith.addf %106, %107 : vector<2x144xf32>
    %109 = tpu.concatenate %91, %95, %99, %108 in 1 : vector<2x144xf32>, vector<2x144xf32>, vector<2x144xf32>, vector<2x144xf32> -> vector<2x576xf32>
    %c0_56 = arith.constant 0 : index
    %c0_57 = arith.constant 0 : index
    %c0_58 = arith.constant 0 : index
    %110 = vector.load %arg12[%c0_56, %c0_57, %c0_58] : memref<1x2x576xf32, #tpu.memory_space<vmem>>, vector<1x2x576xf32>
    %111 = vector.shape_cast %110 : vector<1x2x576xf32> to vector<2x576xf32>
    %112 = vector.shape_cast %109 : vector<2x576xf32> to vector<1x2x576xf32>
    tpu.vector_store %arg12[%c0_56, %c0_57, %c0_58], %112 {strides = array<i32>} : memref<1x2x576xf32, #tpu.memory_space<vmem>>, vector<1x2x576xf32>,
    return
  }
  func.func @transform_0(%arg0: i32) -> (i32, i32, i32) {
    %c0_i32 = arith.constant 0 : i32
    %c0_i32_0 = arith.constant 0 : i32
    %c0_i32_1 = arith.constant 0 : i32
    return %arg0, %c0_i32, %c0_i32_0 : i32, i32, i32
  }
  func.func @transform_1(%arg0: i32) -> (i32, i32) {
    %c0_i32 = arith.constant 0 : i32
    %c0_i32_0 = arith.constant 0 : i32
    %c0_i32_1 = arith.constant 0 : i32
    return %c0_i32, %c0_i32_0 : i32, i32
  }
  func.func @transform_2(%arg0: i32) -> (i32, i32) {
    %c0_i32 = arith.constant 0 : i32
    %c0_i32_0 = arith.constant 0 : i32
    %c0_i32_1 = arith.constant 0 : i32
    return %c0_i32, %c0_i32_0 : i32, i32
  }
  func.func @transform_3(%arg0: i32) -> (i32, i32) {
    %c0_i32 = arith.constant 0 : i32
    %c0_i32_0 = arith.constant 0 : i32
    %c0_i32_1 = arith.constant 0 : i32
    return %c0_i32, %c0_i32_0 : i32, i32
  }
  func.func @transform_4(%arg0: i32) -> (i32, i32) {
    %c0_i32 = arith.constant 0 : i32
    %c0_i32_0 = arith.constant 0 : i32
    %c0_i32_1 = arith.constant 0 : i32
    return %c0_i32, %c0_i32_0 : i32, i32
  }
  func.func @transform_5(%arg0: i32) -> (i32, i32) {
    %c0_i32 = arith.constant 0 : i32
    %c0_i32_0 = arith.constant 0 : i32
    %c0_i32_1 = arith.constant 0 : i32
    return %c0_i32, %c0_i32_0 : i32, i32
  }
  func.func @transform_6(%arg0: i32) -> (i32, i32) {
    %c0_i32 = arith.constant 0 : i32
    %c0_i32_0 = arith.constant 0 : i32
    %c0_i32_1 = arith.constant 0 : i32
    return %c0_i32, %c0_i32_0 : i32, i32
  }
  func.func @transform_7(%arg0: i32) -> (i32, i32) {
    %c0_i32 = arith.constant 0 : i32
    %c0_i32_0 = arith.constant 0 : i32
    %c0_i32_1 = arith.constant 0 : i32
    return %c0_i32, %c0_i32_0 : i32, i32
  }
  func.func @transform_8(%arg0: i32) -> (i32, i32) {
    %c0_i32 = arith.constant 0 : i32
    %c0_i32_0 = arith.constant 0 : i32
    %c0_i32_1 = arith.constant 0 : i32
    return %c0_i32, %c0_i32_0 : i32, i32
  }
  func.func @transform_9(%arg0: i32) -> (i32, i32) {
    %c0_i32 = arith.constant 0 : i32
    %c0_i32_0 = arith.constant 0 : i32
    %c0_i32_1 = arith.constant 0 : i32
    return %c0_i32, %c0_i32_0 : i32, i32
  }
  func.func @transform_10(%arg0: i32) -> (i32, i32) {
    %c0_i32 = arith.constant 0 : i32
    %c0_i32_0 = arith.constant 0 : i32
    %c0_i32_1 = arith.constant 0 : i32
    return %c0_i32, %c0_i32_0 : i32, i32
  }
  func.func @transform_11(%arg0: i32) -> (i32, i32, i32) {
    %c0_i32 = arith.constant 0 : i32
    %c0_i32_0 = arith.constant 0 : i32
    %c0_i32_1 = arith.constant 0 : i32
    return %arg0, %c0_i32, %c0_i32_0 : i32, i32, i32
  }
}

</mosaic_0001>

<llo_original>
// kernel: tpu_custom_call.1
$region0: #{tpu_custom_call.1}
  #allocation0 [shape = 'u32[]', space=smem, size = 0x4, offset = 0x4, fixed_abs, tag = 'smem constant byte address 0x4 - core index']
  #allocation1 [shape = 'u32[144,128]{1,0:T(1,128)}', space=vmem, size = 0x12000, scoped, tag = 'internal scratch']
  %s0 = inlined_call_operand.vmem [shape: f32[2,2,576], index: 0, kind: input, shape index: {}]
  %s1 = inlined_call_operand.hbm [shape: bf16[432,256], index: 1, kind: input, shape index: {}]
  %s2 = inlined_call_operand.vmem [shape: f32[1,256], index: 2, kind: input, shape index: {}]
  %s3 = inlined_call_operand.vmem [shape: bf16[768,256], index: 3, kind: input, shape index: {}]
  %s4 = inlined_call_operand.vmem [shape: f32[1,256], index: 4, kind: input, shape index: {}]
  %s5 = inlined_call_operand.vmem [shape: bf16[512,256], index: 5, kind: input, shape index: {}]
  %s6 = inlined_call_operand.hbm [shape: bf16[512,256], index: 6, kind: input, shape index: {}]
  %s7 = inlined_call_operand.vmem [shape: f32[1,256], index: 7, kind: input, shape index: {}]
  %s8 = inlined_call_operand.vmem [shape: bf16[512,144], index: 8, kind: input, shape index: {}]
  %s9 = inlined_call_operand.vmem [shape: bf16[512,144], index: 9, kind: input, shape index: {}]
  %s10 = inlined_call_operand.vmem [shape: f32[1,144], index: 10, kind: input, shape index: {}]
  %s11 = inlined_call_operand.hbm [shape: f32[2,2,576], index: 11, kind: output, shape index: {}]
  %s12 = sld [smem:[#allocation0]]
  $region85: #{tpu_custom_call.1} parent=0
    _
  %s14 = ssub.s32 1, %s12
  %s15 = scalar_select 0, %s14, %s12
  $region1: #{tpu_custom_call.1} parent=0
    #allocation2 [shape = 'u8[221184]{0}', space=vmem, size = 0x36000, scoped, tag = 'input window, operand 1, single buffered']
    #allocation3 [shape = 's32[2]{0}', space=sflag, size = 0x8, scoped, tag = 'scoped memory for tpu_custom_call.1']
    #allocation4 [shape = 's32[2]{0}', space=sflag, size = 0x8, scoped, tag = 'scoped memory for tpu_custom_call.1']
    #allocation5 [shape = 'u8[262144]{0}', space=vmem, size = 0x40000, scoped, tag = 'input window, operand 6, single buffered']
    #allocation6 [shape = 's32[1]{0}', space=sflag, size = 0x4, scoped, tag = 'scoped memory for tpu_custom_call.1']
    #allocation7 [shape = 'u8[10240]{0}', space=vmem, size = 0x2800, scoped, tag = 'output window, operand 0']
    %16 = vsyncpa [#allocation3], 0
    %17 = vsyncpa [#allocation6], 0
    %18 = vsyncpa [#allocation4], 0
    %s19 = scalar_lea.sflag [#allocation4], 1
    %20 = vsyncpa %s19, 0
    loop: start=0, step=1, limit=4
    $region2: #{tpu_custom_call.1} parent=1 // loop_pre_header
      _
    $region3: #{tpu_custom_call.1} parent=1 // loop_header
      %s22 = sphi 0, %s26
      %p23 = scmp.ge.s32.totalorder %s22, 4
      %s32 = sphi 0, %s34
      %s35 = sphi 0, %s32
      %s36 = sphi 0, %s35
      %s52 = sphi 0, %s36
      %s56 = sphi 0, %s56
      %s58 = sphi 0, %s56
      %s59 = sphi 0, %s58
      %s73 = sphi 0, %s59
      %s77 = sphi 0, %s77
      %s79 = sphi 0, %s77
      %s80 = sphi 0, %s79
      %s94 = sphi 0, %s80
      %s98 = sphi 0, %s98
      %s100 = sphi 0, %s98
      %s101 = sphi 0, %s100
      %s115 = sphi 0, %s101
      %s119 = sphi 0, %s119
      %s121 = sphi 0, %s119
      %s122 = sphi 0, %s121
      %s136 = sphi 0, %s122
      %s140 = sphi 0, %s140
      %s142 = sphi 0, %s140
      %s143 = sphi 0, %s142
      %s157 = sphi 0, %s143
      %s161 = sphi 0, %s161
      %s163 = sphi 0, %s161
      %s164 = sphi 0, %s163
      %s178 = sphi 0, %s164
      %s182 = sphi 0, %s182
      %s184 = sphi 0, %s182
      %s185 = sphi 0, %s184
      %s199 = sphi 0, %s185
      %s203 = sphi 0, %s203
      %s205 = sphi 0, %s203
      %s206 = sphi 0, %s205
      %s220 = sphi 0, %s206
      %s224 = sphi 0, %s224
      %s226 = sphi 0, %s224
      %s227 = sphi 0, %s226
      %s241 = sphi 0, %s227
      %s245 = sphi 0, %s245
      %s247 = sphi 0, %s245
      %s248 = sphi 0, %s247
      %s262 = sphi 0, %s248
      %s268 = sphi 0, %s270
      %s271 = sphi 0, %s268
      %s272 = sphi 0, %s271
      %s288 = sphi 0, %s272
    $region4: #{tpu_custom_call.1} parent=1 // loop_header_branch
      %25 = sbr.rel (%p23) target = $region8
    $region5: #{tpu_custom_call.1} parent=1 // loop_body
      %s27 = ssub.s32 %s22, 1
      %s28 = ssub.s32 %s22, 2
      %s29 = sadd.s32 %s22, 1
      %s30 = ssub.s32 %s22, %s29
      %p31 = scmp.eq.s32.totalorder %s30, 0
      %s33 = sadd.s32 %s32, 1
      %s34 = scalar_select %p31, %s32, %s33
      %p37 = pneg %p31
      %p38 = scmp.eq.s32.totalorder %s22, 1
      %p39 = por %p37, %p38
      %p40 = scmp.ne.s32.totalorder %s32, %s35
      %p41 = scmp.eq.s32.totalorder %s22, 0
      %p42 = por %p40, %p41
      %p43 = scmp.ne.s32.totalorder %s32, %s35
      %p44 = scmp.eq.s32.totalorder %s27, 1
      %p45 = por %p43, %p44
      %p46 = scmp.ne.s32.totalorder %s35, %s36
      %p47 = scmp.eq.s32.totalorder %s27, 0
      %p48 = por %p46, %p47
      %p49 = scmp.ne.s32.totalorder %s35, %s36
      %p50 = scmp.eq.s32.totalorder %s28, 1
      %p51 = por %p49, %p50
      %p53 = scmp.ne.s32.totalorder %s36, %s52
      %p54 = scmp.eq.s32.totalorder %s28, 0
      %p55 = por %p53, %p54
      %s57 = sadd.s32 %s56, 1
      %p60 = scmp.eq.s32.totalorder %s22, 1
      %p61 = scmp.ne.s32.totalorder %s56, %s58
      %p62 = scmp.eq.s32.totalorder %s22, 0
      %p63 = por %p61, %p62
      %p64 = scmp.ne.s32.totalorder %s56, %s58
      %p65 = scmp.eq.s32.totalorder %s27, 1
      %p66 = por %p64, %p65
      %p67 = scmp.ne.s32.totalorder %s58, %s59
      %p68 = scmp.eq.s32.totalorder %s27, 0
      %p69 = por %p67, %p68
      %p70 = scmp.ne.s32.totalorder %s58, %s59
      %p71 = scmp.eq.s32.totalorder %s28, 1
      %p72 = por %p70, %p71
      %p74 = scmp.ne.s32.totalorder %s59, %s73
      %p75 = scmp.eq.s32.totalorder %s28, 0
      %p76 = por %p74, %p75
      %s78 = sadd.s32 %s77, 1
      %p81 = scmp.eq.s32.totalorder %s22, 1
      %p82 = scmp.ne.s32.totalorder %s77, %s79
      %p83 = scmp.eq.s32.totalorder %s22, 0
      %p84 = por %p82, %p83
      %p85 = scmp.ne.s32.totalorder %s77, %s79
      %p86 = scmp.eq.s32.totalorder %s27, 1
      %p87 = por %p85, %p86
      %p88 = scmp.ne.s32.totalorder %s79, %s80
      %p89 = scmp.eq.s32.totalorder %s27, 0
      %p90 = por %p88, %p89
      %p91 = scmp.ne.s32.totalorder %s79, %s80
      %p92 = scmp.eq.s32.totalorder %s28, 1
      %p93 = por %p91, %p92
      %p95 = scmp.ne.s32.totalorder %s80, %s94
      %p96 = scmp.eq.s32.totalorder %s28, 0
      %p97 = por %p95, %p96
      %s99 = sadd.s32 %s98, 1
      %p102 = scmp.eq.s32.totalorder %s22, 1
      %p103 = scmp.ne.s32.totalorder %s98, %s100
      %p104 = scmp.eq.s32.totalorder %s22, 0
      %p105 = por %p103, %p104
      %p106 = scmp.ne.s32.totalorder %s98, %s100
      %p107 = scmp.eq.s32.totalorder %s27, 1
      %p108 = por %p106, %p107
      %p109 = scmp.ne.s32.totalorder %s100, %s101
      %p110 = scmp.eq.s32.totalorder %s27, 0
      %p111 = por %p109, %p110
      %p112 = scmp.ne.s32.totalorder %s100, %s101
      %p113 = scmp.eq.s32.totalorder %s28, 1
      %p114 = por %p112, %p113
      %p116 = scmp.ne.s32.totalorder %s101, %s115
      %p117 = scmp.eq.s32.totalorder %s28, 0
      %p118 = por %p116, %p117
      %s120 = sadd.s32 %s119, 1
      %p123 = scmp.eq.s32.totalorder %s22, 1
      %p124 = scmp.ne.s32.totalorder %s119, %s121
      %p125 = scmp.eq.s32.totalorder %s22, 0
      %p126 = por %p124, %p125
      %p127 = scmp.ne.s32.totalorder %s119, %s121
      %p128 = scmp.eq.s32.totalorder %s27, 1
      %p129 = por %p127, %p128
      %p130 = scmp.ne.s32.totalorder %s121, %s122
      %p131 = scmp.eq.s32.totalorder %s27, 0
      %p132 = por %p130, %p131
      %p133 = scmp.ne.s32.totalorder %s121, %s122
      %p134 = scmp.eq.s32.totalorder %s28, 1
      %p135 = por %p133, %p134
      %p137 = scmp.ne.s32.totalorder %s122, %s136
      %p138 = scmp.eq.s32.totalorder %s28, 0
      %p139 = por %p137, %p138
      %s141 = sadd.s32 %s140, 1
      %p144 = scmp.eq.s32.totalorder %s22, 1
      %p145 = scmp.ne.s32.totalorder %s140, %s142
      %p146 = scmp.eq.s32.totalorder %s22, 0
      %p147 = por %p145, %p146
      %p148 = scmp.ne.s32.totalorder %s140, %s142
      %p149 = scmp.eq.s32.totalorder %s27, 1
      %p150 = por %p148, %p149
      %p151 = scmp.ne.s32.totalorder %s142, %s143
      %p152 = scmp.eq.s32.totalorder %s27, 0
      %p153 = por %p151, %p152
      %p154 = scmp.ne.s32.totalorder %s142, %s143
      %p155 = scmp.eq.s32.totalorder %s28, 1
      %p156 = por %p154, %p155
      %p158 = scmp.ne.s32.totalorder %s143, %s157
      %p159 = scmp.eq.s32.totalorder %s28, 0
      %p160 = por %p158, %p159
      %s162 = sadd.s32 %s161, 1
      %p165 = scmp.eq.s32.totalorder %s22, 1
      %p166 = scmp.ne.s32.totalorder %s161, %s163
      %p167 = scmp.eq.s32.totalorder %s22, 0
      %p168 = por %p166, %p167
      %p169 = scmp.ne.s32.totalorder %s161, %s163
      %p170 = scmp.eq.s32.totalorder %s27, 1
      %p171 = por %p169, %p170
      %p172 = scmp.ne.s32.totalorder %s163, %s164
      %p173 = scmp.eq.s32.totalorder %s27, 0
      %p174 = por %p172, %p173
      %p175 = scmp.ne.s32.totalorder %s163, %s164
      %p176 = scmp.eq.s32.totalorder %s28, 1
      %p177 = por %p175, %p176
      %p179 = scmp.ne.s32.totalorder %s164, %s178
      %p180 = scmp.eq.s32.totalorder %s28, 0
      %p181 = por %p179, %p180
      %s183 = sadd.s32 %s182, 1
      %p186 = scmp.eq.s32.totalorder %s22, 1
      %p187 = scmp.ne.s32.totalorder %s182, %s184
      %p188 = scmp.eq.s32.totalorder %s22, 0
      %p189 = por %p187, %p188
      %p190 = scmp.ne.s32.totalorder %s182, %s184
      %p191 = scmp.eq.s32.totalorder %s27, 1
      %p192 = por %p190, %p191
      %p193 = scmp.ne.s32.totalorder %s184, %s185
      %p194 = scmp.eq.s32.totalorder %s27, 0
      %p195 = por %p193, %p194
      %p196 = scmp.ne.s32.totalorder %s184, %s185
      %p197 = scmp.eq.s32.totalorder %s28, 1
      %p198 = por %p196, %p197
      %p200 = scmp.ne.s32.totalorder %s185, %s199
      %p201 = scmp.eq.s32.totalorder %s28, 0
      %p202 = por %p200, %p201
      %s204 = sadd.s32 %s203, 1
      %p207 = scmp.eq.s32.totalorder %s22, 1
      %p208 = scmp.ne.s32.totalorder %s203, %s205
      %p209 = scmp.eq.s32.totalorder %s22, 0
      %p210 = por %p208, %p209
      %p211 = scmp.ne.s32.totalorder %s203, %s205
      %p212 = scmp.eq.s32.totalorder %s27, 1
      %p213 = por %p211, %p212
      %p214 = scmp.ne.s32.totalorder %s205, %s206
      %p215 = scmp.eq.s32.totalorder %s27, 0
      %p216 = por %p214, %p215
      %p217 = scmp.ne.s32.totalorder %s205, %s206
      %p218 = scmp.eq.s32.totalorder %s28, 1
      %p219 = por %p217, %p218
      %p221 = scmp.ne.s32.totalorder %s206, %s220
      %p222 = scmp.eq.s32.totalorder %s28, 0
      %p223 = por %p221, %p222
      %s225 = sadd.s32 %s224, 1
      %p228 = scmp.eq.s32.totalorder %s22, 1
      %p229 = scmp.ne.s32.totalorder %s224, %s226
      %p230 = scmp.eq.s32.totalorder %s22, 0
      %p231 = por %p229, %p230
      %p232 = scmp.ne.s32.totalorder %s224, %s226
      %p233 = scmp.eq.s32.totalorder %s27, 1
      %p234 = por %p232, %p233
      %p235 = scmp.ne.s32.totalorder %s226, %s227
      %p236 = scmp.eq.s32.totalorder %s27, 0
      %p237 = por %p235, %p236
      %p238 = scmp.ne.s32.totalorder %s226, %s227
      %p239 = scmp.eq.s32.totalorder %s28, 1
      %p240 = por %p238, %p239
      %p242 = scmp.ne.s32.totalorder %s227, %s241
      %p243 = scmp.eq.s32.totalorder %s28, 0
      %p244 = por %p242, %p243
      %s246 = sadd.s32 %s245, 1
      %p249 = scmp.eq.s32.totalorder %s22, 1
      %p250 = scmp.ne.s32.totalorder %s245, %s247
      %p251 = scmp.eq.s32.totalorder %s22, 0
      %p252 = por %p250, %p251
      %p253 = scmp.ne.s32.totalorder %s245, %s247
      %p254 = scmp.eq.s32.totalorder %s27, 1
      %p255 = por %p253, %p254
      %p256 = scmp.ne.s32.totalorder %s247, %s248
      %p257 = scmp.eq.s32.totalorder %s27, 0
      %p258 = por %p256, %p257
      %p259 = scmp.ne.s32.totalorder %s247, %s248
      %p260 = scmp.eq.s32.totalorder %s28, 1
      %p261 = por %p259, %p260
      %p263 = scmp.ne.s32.totalorder %s248, %s262
      %p264 = scmp.eq.s32.totalorder %s28, 0
      %p265 = por %p263, %p264
      %s266 = ssub.s32 %s22, %s29
      %p267 = scmp.eq.s32.totalorder %s266, 0
      %s269 = sadd.s32 %s268, 1
      %s270 = scalar_select %p267, %s268, %s269
      %p273 = pneg %p267
      %p274 = scmp.eq.s32.totalorder %s22, 1
      %p275 = por %p273, %p274
      %p276 = scmp.ne.s32.totalorder %s268, %s271
      %p277 = scmp.eq.s32.totalorder %s22, 0
      %p278 = por %p276, %p277
      %p279 = scmp.ne.s32.totalorder %s268, %s271
      %p280 = scmp.eq.s32.totalorder %s27, 1
      %p281 = por %p279, %p280
      %p282 = scmp.ne.s32.totalorder %s271, %s272
      %p283 = scmp.eq.s32.totalorder %s27, 0
      %p284 = por %p282, %p283
      %p285 = scmp.ne.s32.totalorder %s271, %s272
      %p286 = scmp.eq.s32.totalorder %s28, 1
      %p287 = por %p285, %p286
      %p289 = scmp.ne.s32.totalorder %s272, %s288
      %p290 = scmp.eq.s32.totalorder %s28, 0
      %p291 = por %p289, %p290
      %p292 = scmp.le.s32.totalorder 1, %s22
      %p293 = scmp.lt.s32.totalorder %s22, 3
      %p294 = pnand %p292, %p293
      %p295 = pneg %p294
      // Predicated region
      $region9: #{tpu_custom_call.1} parent=5 // pred_check
        _
      $region10: #{tpu_custom_call.1} parent=5 // pred_check_branch
        %297 = sbr.rel (%p294) target = $region12
      $region11: #{tpu_custom_call.1} parent=5 // pred_region
        %s298 = ssub.s32 %s22, 1
        // Predicated region
        $region13: #{tpu_custom_call.1} parent=11 // pred_check
          %p299 = pneg %p69
        $region14: #{tpu_custom_call.1} parent=11 // pred_check_branch
          %301 = sbr.rel (%p299) target = $region16
        $region15: #{tpu_custom_call.1} parent=11 // pred_region
          %s303 = ssub.s32 6912, 6912
          %304 = vsyncadd [#allocation3], %s303
          %s305 = sshll.u32 [#allocation2], 4
          %s306 = int_to_ptr.vmem [resolvable:$true] %s305
          %311 = dma.hbm_to_vmem [thread:$0]  %s1, 6912, %s306, [#allocation3], 128, 128, 8
        $region16: #{tpu_custom_call.1} parent=11 // pred_fallthru
          _
        // Predicated region
        $region17: #{tpu_custom_call.1} parent=11 // pred_check
          %p312 = pneg %p90
        $region18: #{tpu_custom_call.1} parent=11 // pred_check_branch
          %314 = sbr.rel (%p312) target = $region20
        $region19: #{tpu_custom_call.1} parent=11 // pred_region
          _
        $region20: #{tpu_custom_call.1} parent=11 // pred_fallthru
          _
        // Predicated region
        $region21: #{tpu_custom_call.1} parent=11 // pred_check
          %p315 = pneg %p111
        $region22: #{tpu_custom_call.1} parent=11 // pred_check_branch
          %317 = sbr.rel (%p315) target = $region24
        $region23: #{tpu_custom_call.1} parent=11 // pred_region
          _
        $region24: #{tpu_custom_call.1} parent=11 // pred_fallthru
          _
        // Predicated region
        $region25: #{tpu_custom_call.1} parent=11 // pred_check
          %p318 = pneg %p132
        $region26: #{tpu_custom_call.1} parent=11 // pred_check_branch
          %320 = sbr.rel (%p318) target = $region28
        $region27: #{tpu_custom_call.1} parent=11 // pred_region
          _
        $region28: #{tpu_custom_call.1} parent=11 // pred_fallthru
          _
        // Predicated region
        $region29: #{tpu_custom_call.1} parent=11 // pred_check
          %p321 = pneg %p153
        $region30: #{tpu_custom_call.1} parent=11 // pred_check_branch
          %323 = sbr.rel (%p321) target = $region32
        $region31: #{tpu_custom_call.1} parent=11 // pred_region
          _
        $region32: #{tpu_custom_call.1} parent=11 // pred_fallthru
          _
        // Predicated region
        $region33: #{tpu_custom_call.1} parent=11 // pred_check
          %p324 = pneg %p174
        $region34: #{tpu_custom_call.1} parent=11 // pred_check_branch
          %326 = sbr.rel (%p324) target = $region36
        $region35: #{tpu_custom_call.1} parent=11 // pred_region
          %s328 = ssub.s32 8192, 8192
          %329 = vsyncadd [#allocation6], %s328
          %s330 = sshll.u32 [#allocation5], 4
          %s331 = int_to_ptr.vmem [resolvable:$true] %s330
          %336 = dma.hbm_to_vmem [thread:$0]  %s6, 8192, %s331, [#allocation6], 128, 128, 8
        $region36: #{tpu_custom_call.1} parent=11 // pred_fallthru
          _
        // Predicated region
        $region37: #{tpu_custom_call.1} parent=11 // pred_check
          %p337 = pneg %p195
        $region38: #{tpu_custom_call.1} parent=11 // pred_check_branch
          %339 = sbr.rel (%p337) target = $region40
        $region39: #{tpu_custom_call.1} parent=11 // pred_region
          _
        $region40: #{tpu_custom_call.1} parent=11 // pred_fallthru
          _
        // Predicated region
        $region41: #{tpu_custom_call.1} parent=11 // pred_check
          %p340 = pneg %p216
        $region42: #{tpu_custom_call.1} parent=11 // pred_check_branch
          %342 = sbr.rel (%p340) target = $region44
        $region43: #{tpu_custom_call.1} parent=11 // pred_region
          _
        $region44: #{tpu_custom_call.1} parent=11 // pred_fallthru
          _
        // Predicated region
        $region45: #{tpu_custom_call.1} parent=11 // pred_check
          %p343 = pneg %p237
        $region46: #{tpu_custom_call.1} parent=11 // pred_check_branch
          %345 = sbr.rel (%p343) target = $region48
        $region47: #{tpu_custom_call.1} parent=11 // pred_region
          _
        $region48: #{tpu_custom_call.1} parent=11 // pred_fallthru
          _
        // Predicated region
        $region49: #{tpu_custom_call.1} parent=11 // pred_check
          %p346 = pneg %p258
        $region50: #{tpu_custom_call.1} parent=11 // pred_check_branch
          %348 = sbr.rel (%p346) target = $region52
        $region51: #{tpu_custom_call.1} parent=11 // pred_region
          _
        $region52: #{tpu_custom_call.1} parent=11 // pred_fallthru
          _
      $region12: #{tpu_custom_call.1} parent=5 // pred_fallthru
        _
      %p349 = scmp.lt.s32.totalorder %s22, 2
      // Predicated region
      $region53: #{tpu_custom_call.1} parent=5 // pred_check
        %p350 = pneg %p349
      $region54: #{tpu_custom_call.1} parent=5 // pred_check_branch
        %352 = sbr.rel (%p350) target = $region56
      $region55: #{tpu_custom_call.1} parent=5 // pred_region
        // Predicated region
        $region57: #{tpu_custom_call.1} parent=55 // pred_check
          %p353 = pneg %p42
        $region58: #{tpu_custom_call.1} parent=55 // pred_check_branch
          %355 = sbr.rel (%p353) target = $region60
        $region59: #{tpu_custom_call.1} parent=55 // pred_region
          %p356 = scmp.lt.s32.totalorder %s22, 1
          %s357 = scalar_select %p356, %s22, 1
          %s358 = smul.addr %s357, 5
          %s359 = smul.addr %s358, 2
          %s360 = scalar_lea.vmem %s0, %s359
        $region60: #{tpu_custom_call.1} parent=55 // pred_fallthru
          _
      $region56: #{tpu_custom_call.1} parent=5 // pred_fallthru
        _
      %p361 = scmp.le.s32.totalorder 1, %s22
      %p362 = scmp.lt.s32.totalorder %s22, 3
      %p363 = pnand %p361, %p362
      %p364 = pneg %p363
      // Predicated region
      $region61: #{tpu_custom_call.1} parent=5 // pred_check
        _
      $region62: #{tpu_custom_call.1} parent=5 // pred_check_branch
        %366 = sbr.rel (%p363) target = $region64
      $region63: #{tpu_custom_call.1} parent=5 // pred_region
        %s367 = ssub.s32 %s22, 1
        // Predicated region
        $region65: #{tpu_custom_call.1} parent=63 // pred_check
          %p368 = pneg %p69
        $region66: #{tpu_custom_call.1} parent=63 // pred_check_branch
          %370 = sbr.rel (%p368) target = $region68
        $region67: #{tpu_custom_call.1} parent=63 // pred_region
          %371 = dma.done [#allocation3], 6912
        $region68: #{tpu_custom_call.1} parent=63 // pred_fallthru
          _
        // Predicated region
        $region69: #{tpu_custom_call.1} parent=63 // pred_check
          %p372 = pneg %p174
        $region70: #{tpu_custom_call.1} parent=63 // pred_check_branch
          %374 = sbr.rel (%p372) target = $region72
        $region71: #{tpu_custom_call.1} parent=63 // pred_region
          %375 = dma.done [#allocation6], 8192
        $region72: #{tpu_custom_call.1} parent=63 // pred_fallthru
          _
        %p376 = scmp.lt.s32.totalorder %s27, 1
        %s377 = scalar_select %p376, %s27, 1
        %s378 = smul.addr %s377, 5
        %s379 = smul.addr %s378, 2
        %s380 = scalar_lea.vmem %s0, %s379
        %p381 = pneg %p48
        %p382 = pneg %p45
        %p383 = pneg %p69
        %p384 = pneg %p66
        %p385 = pneg %p90
        %p386 = pneg %p87
        %p387 = pneg %p111
        %p388 = pneg %p108
        %p389 = pneg %p132
        %p390 = pneg %p129
        %p391 = pneg %p153
        %p392 = pneg %p150
        %p393 = pneg %p174
        %p394 = pneg %p171
        %p395 = pneg %p195
        %p396 = pneg %p192
        %p397 = pneg %p216
        %p398 = pneg %p213
        %p399 = pneg %p237
        %p400 = pneg %p234
        %p401 = pneg %p258
        %p402 = pneg %p255
        %p403 = pneg %p284
        %p404 = pneg %p281
        %s405 = sand.u32 %s271, 1
        %s406 = scalar_lea.sflag [#allocation4], %s405
        %s407 = sand.u32 %s271, 1
        %s408 = smul.addr %s407, 10
        %s409 = scalar_lea.vmem [#allocation7], %s408
        %p410 = scmp.lt.s32.totalorder %s27, 1
        %s411 = scalar_select %p410, %s27, 1
        %s412 = smul.addr %s411, 5
        %s413 = smul.addr %s412, 2
        %s414 = scalar_lea.vmem %s0, %s413
        %v416 = vld [vmem:[%s414] sm:$0xff]
        %v417 = vld [vmem:[%s414 + $0x8] sm:$0x3]
        %v420 = vlaneseq
        %v421 = vshrl.u32 %v420, 7
        %v422 = vsub.s32 6, %v421
        %v423 = vrot.slane %v416, %v422
        %v424 = vlaneseq
        %v425 = vshrl.u32 %v424, 7
        %v426 = vsub.s32 0, %v425
        %v427 = vrot.slane %v417, %v426
        %428 = vrot.lane.b32.xlu0 %v423, 80
        %v429 = vpop.permute.xlu0 %428
        %430 = vrot.lane.b32.xlu0 %v427, 80
        %v431 = vpop.permute.xlu0 %430
        %vm432 = vcmask 654336
        %v433 = vsel %vm432, %v429, %v431
        %vm436 = vcmask 1040384
        %v437 = vsel %vm436, 0.0, %v433
        %v438 = vsel %vm436, 0.0, %v431
        %v439 = vcombine.high %v416, %v416
        %v441 = vunpack.c.l.s4 1983009808
        %v442 = vunpack.c.0.s8 %v441
        %v443 = vlaneseq
        %v444 = vshrl.u32 %v443, 7
        %v445 = vsub.s32 %v442, %v444
        %v446 = vrot.slane %v416, %v445
        %v448 = vunpack.c.l.s4 1983009808
        %v449 = vunpack.c.0.s8 %v448
        %v450 = vlaneseq
        %v451 = vshrl.u32 %v450, 7
        %v452 = vsub.s32 %v449, %v451
        %v453 = vrot.slane %v439, %v452
        %v454 = vcombine.high %v446, %v446
        %455 = vrot.lane.b32.xlu0 %v446, 16
        %v456 = vpop.permute.xlu0 %455
        %457 = vrot.lane.b32.xlu0 %v454, 16
        %v458 = vpop.permute.xlu0 %457
        %459 = vrot.lane.b32.xlu0 %v453, 16
        %v460 = vpop.permute.xlu0 %459
        %vm461 = vcmask 130048
        %v462 = vsel %vm461, %v456, %v458
        %v463 = vsel %vm461, %v458, %v460
        %v467 = vsel %vm461, %v438, %v456
        %v468 = vpack.c.bf16 %v437, %v437
        %v469 = vpack.c.bf16 %v467, %v467
        %v470 = vpack.c.bf16 %v462, %v462
        %v471 = vpack.c.bf16 %v463, %v463
        %v472 = vld [vmem:[#allocation2] sm:$0xff]
        %v473 = vld [vmem:[#allocation2 + $0x8] sm:$0xff]
        %v474 = vld [vmem:[#allocation2 + $0x10] sm:$0xff]
        %v475 = vld [vmem:[#allocation2 + $0x18] sm:$0xff]
        %v476 = vld [vmem:[#allocation2 + $0x20] sm:$0xff]
        %v477 = vld [vmem:[#allocation2 + $0x28] sm:$0xff]
        %v478 = vld [vmem:[#allocation2 + $0x30] sm:$0xff]
        %v479 = vld [vmem:[#allocation2 + $0x38] sm:$0xff]
        %v480 = vld [vmem:[#allocation2 + $0x40] sm:$0xff]
        %v481 = vld [vmem:[#allocation2 + $0x48] sm:$0xff]
        %v482 = vld [vmem:[#allocation2 + $0x50] sm:$0xff]
        %v483 = vld [vmem:[#allocation2 + $0x58] sm:$0xff]
        %v484 = vld [vmem:[#allocation2 + $0x60] sm:$0xff]
        %v485 = vld [vmem:[#allocation2 + $0x68] sm:$0xff]
        %v486 = vld [vmem:[#allocation2 + $0x70] sm:$0xff]
        %v487 = vld [vmem:[#allocation2 + $0x78] sm:$0xff]
        %v488 = vld [vmem:[#allocation2 + $0x80] sm:$0xff]
        %v489 = vld [vmem:[#allocation2 + $0x88] sm:$0xff]
        %v490 = vld [vmem:[#allocation2 + $0x90] sm:$0xff]
        %v491 = vld [vmem:[#allocation2 + $0x98] sm:$0xff]
        %v492 = vld [vmem:[#allocation2 + $0xa0] sm:$0xff]
        %v493 = vld [vmem:[#allocation2 + $0xa8] sm:$0xff]
        %v494 = vld [vmem:[#allocation2 + $0xb0] sm:$0xff]
        %v495 = vld [vmem:[#allocation2 + $0xb8] sm:$0xff]
        %v496 = vld [vmem:[#allocation2 + $0xc0] sm:$0xff]
        %v497 = vld [vmem:[#allocation2 + $0xc8] sm:$0xff]
        %v498 = vld [vmem:[#allocation2 + $0xd0] sm:$0xff]
        %v499 = vld [vmem:[#allocation2 + $0xd8] sm:$0xff]
        %v500 = vld [vmem:[#allocation2 + $0xe0] sm:$0xff]
        %v501 = vld [vmem:[#allocation2 + $0xe8] sm:$0xff]
        %v502 = vld [vmem:[#allocation2 + $0xf0] sm:$0xff]
        %v503 = vld [vmem:[#allocation2 + $0xf8] sm:$0xff]
        %v504 = vld [vmem:[#allocation2 + $0x100] sm:$0xff]
        %v505 = vld [vmem:[#allocation2 + $0x108] sm:$0xff]
        %v506 = vld [vmem:[#allocation2 + $0x110] sm:$0xff]
        %v507 = vld [vmem:[#allocation2 + $0x118] sm:$0xff]
        %v508 = vld [vmem:[#allocation2 + $0x120] sm:$0xff]
        %v509 = vld [vmem:[#allocation2 + $0x128] sm:$0xff]
        %v510 = vld [vmem:[#allocation2 + $0x130] sm:$0xff]
        %v511 = vld [vmem:[#allocation2 + $0x138] sm:$0xff]
        %v512 = vld [vmem:[#allocation2 + $0x140] sm:$0xff]
        %v513 = vld [vmem:[#allocation2 + $0x148] sm:$0xff]
        %v514 = vld [vmem:[#allocation2 + $0x150] sm:$0xff]
        %v515 = vld [vmem:[#allocation2 + $0x158] sm:$0xff]
        %v516 = vld [vmem:[#allocation2 + $0x160] sm:$0xff]
        %v517 = vld [vmem:[#allocation2 + $0x168] sm:$0xff]
        %v518 = vld [vmem:[#allocation2 + $0x170] sm:$0xff]
        %v519 = vld [vmem:[#allocation2 + $0x178] sm:$0xff]
        %v520 = vld [vmem:[#allocation2 + $0x180] sm:$0xff]
        %v521 = vld [vmem:[#allocation2 + $0x188] sm:$0xff]
        %v522 = vld [vmem:[#allocation2 + $0x190] sm:$0xff]
        %v523 = vld [vmem:[#allocation2 + $0x198] sm:$0xff]
        %v524 = vld [vmem:[#allocation2 + $0x1a0] sm:$0xff]
        %v525 = vld [vmem:[#allocation2 + $0x1a8] sm:$0xff]
        %v526 = vld [vmem:[%s2] sm:$0x3]
        %v528 = vlaneseq
        %v529 = vshrl.u32 %v528, 7
        %v530 = vsub.s32 0, %v529
        %v531 = vrot.slane %v526, %v530
        %v532 = vlaneseq
        %v533 = vshrl.u32 %v532, 7
        %v534 = vsub.s32 1, %v533
        %v535 = vrot.slane %v526, %v534
        %v592 = vunpack.c.l.b16 %v472
        %v593 = vunpack.c.h.b16 %v472
        %v594 = vunpack.c.l.b16 %v473
        %v595 = vunpack.c.h.b16 %v473
        %v596 = vunpack.c.l.b16 %v474
        %v597 = vunpack.c.h.b16 %v474
        %v598 = vunpack.c.l.b16 %v475
        %v599 = vunpack.c.h.b16 %v475
        %v600 = vunpack.c.l.b16 %v476
        %v601 = vunpack.c.h.b16 %v476
        %v602 = vunpack.c.l.b16 %v477
        %v603 = vunpack.c.h.b16 %v477
        %v604 = vunpack.c.l.b16 %v478
        %v605 = vunpack.c.h.b16 %v478
        %v606 = vunpack.c.l.b16 %v479
        %v607 = vunpack.c.h.b16 %v479
        %v608 = vunpack.c.l.b16 %v480
        %v609 = vunpack.c.h.b16 %v480
        %v610 = vunpack.c.l.b16 %v481
        %v611 = vunpack.c.h.b16 %v481
        %v612 = vunpack.c.l.b16 %v482
        %v613 = vunpack.c.h.b16 %v482
        %v614 = vunpack.c.l.b16 %v483
        %v615 = vunpack.c.h.b16 %v483
        %v616 = vunpack.c.l.b16 %v484
        %v617 = vunpack.c.h.b16 %v484
        %v618 = vunpack.c.l.b16 %v485
        %v619 = vunpack.c.h.b16 %v485
        %v620 = vunpack.c.l.b16 %v486
        %v621 = vunpack.c.h.b16 %v486
        %v622 = vunpack.c.l.b16 %v487
        %v623 = vunpack.c.h.b16 %v487
        %v624 = vunpack.c.l.b16 %v488
        %v625 = vunpack.c.h.b16 %v488
        %v626 = vunpack.c.l.b16 %v489
        %v627 = vunpack.c.h.b16 %v489
        %v628 = vunpack.c.l.b16 %v490
        %v629 = vunpack.c.h.b16 %v490
        %v630 = vunpack.c.l.b16 %v491
        %v631 = vunpack.c.h.b16 %v491
        %v632 = vunpack.c.l.b16 %v492
        %v633 = vunpack.c.h.b16 %v492
        %v634 = vunpack.c.l.b16 %v493
        %v635 = vunpack.c.h.b16 %v493
        %v636 = vunpack.c.l.b16 %v494
        %v637 = vunpack.c.h.b16 %v494
        %v638 = vunpack.c.l.b16 %v495
        %v639 = vunpack.c.h.b16 %v495
        %v640 = vunpack.c.l.b16 %v496
        %v641 = vunpack.c.h.b16 %v496
        %v642 = vunpack.c.l.b16 %v497
        %v643 = vunpack.c.h.b16 %v497
        %v644 = vunpack.c.l.b16 %v498
        %v645 = vunpack.c.h.b16 %v498
        %v646 = vunpack.c.l.b16 %v499
        %v647 = vunpack.c.h.b16 %v499
        %v648 = vunpack.c.l.b16 %v500
        %v649 = vunpack.c.h.b16 %v500
        %v650 = vunpack.c.l.b16 %v501
        %v651 = vunpack.c.h.b16 %v501
        %v652 = vunpack.c.l.b16 %v502
        %v653 = vunpack.c.h.b16 %v502
        %v654 = vunpack.c.l.b16 %v503
        %v655 = vunpack.c.h.b16 %v503
        %v656 = vunpack.c.l.b16 %v504
        %v657 = vunpack.c.h.b16 %v504
        %v658 = vunpack.c.l.b16 %v505
        %v659 = vunpack.c.h.b16 %v505
        %v660 = vunpack.c.l.b16 %v506
        %v661 = vunpack.c.h.b16 %v506
        %v662 = vunpack.c.l.b16 %v507
        %v663 = vunpack.c.h.b16 %v507
        %v664 = vunpack.c.l.b16 %v508
        %v665 = vunpack.c.h.b16 %v508
        %v666 = vunpack.c.l.b16 %v509
        %v667 = vunpack.c.h.b16 %v509
        %v668 = vunpack.c.l.b16 %v510
        %v669 = vunpack.c.h.b16 %v510
        %v670 = vunpack.c.l.b16 %v511
        %v671 = vunpack.c.h.b16 %v511
        %v672 = vunpack.c.l.b16 %v512
        %v673 = vunpack.c.h.b16 %v512
        %v674 = vunpack.c.l.b16 %v513
        %v675 = vunpack.c.h.b16 %v513
        %v676 = vunpack.c.l.b16 %v514
        %v677 = vunpack.c.h.b16 %v514
        %v678 = vunpack.c.l.b16 %v515
        %v679 = vunpack.c.h.b16 %v515
        %v680 = vunpack.c.l.b16 %v516
        %v681 = vunpack.c.h.b16 %v516
        %v682 = vunpack.c.l.b16 %v517
        %v683 = vunpack.c.h.b16 %v517
        %v684 = vunpack.c.l.b16 %v518
        %v685 = vunpack.c.h.b16 %v518
        %v686 = vunpack.c.l.b16 %v519
        %v687 = vunpack.c.h.b16 %v519
        %v688 = vunpack.c.l.b16 %v520
        %v689 = vunpack.c.h.b16 %v520
        %v690 = vunpack.c.l.b16 %v521
        %v691 = vunpack.c.h.b16 %v521
        %v692 = vunpack.c.l.b16 %v522
        %v693 = vunpack.c.h.b16 %v522
        %v694 = vunpack.c.l.b16 %v523
        %v695 = vunpack.c.h.b16 %v523
        %v696 = vunpack.c.l.b16 %v524
        %v697 = vunpack.c.h.b16 %v524
        %v698 = vunpack.c.l.b16 %v525
        %v699 = vunpack.c.h.b16 %v525
        %v700 = vpack.c.b16 %v594, %v592
        %v701 = vpack.c.b16 %v595, %v593
        %v702 = vpack.c.b16 %v598, %v596
        %v703 = vpack.c.b16 %v599, %v597
        %v704 = vpack.c.b16 %v602, %v600
        %v705 = vpack.c.b16 %v603, %v601
        %v706 = vpack.c.b16 %v606, %v604
        %v707 = vpack.c.b16 %v607, %v605
        %v708 = vpack.c.b16 %v610, %v608
        %v709 = vpack.c.b16 %v611, %v609
        %v710 = vpack.c.b16 %v614, %v612
        %v711 = vpack.c.b16 %v615, %v613
        %v712 = vpack.c.b16 %v618, %v616
        %v713 = vpack.c.b16 %v619, %v617
        %v714 = vpack.c.b16 %v622, %v620
        %v715 = vpack.c.b16 %v623, %v621
        %v716 = vpack.c.b16 %v626, %v624
        %v717 = vpack.c.b16 %v627, %v625
        %v718 = vpack.c.b16 %v630, %v628
        %v719 = vpack.c.b16 %v631, %v629
        %v720 = vpack.c.b16 %v634, %v632
        %v721 = vpack.c.b16 %v635, %v633
        %v722 = vpack.c.b16 %v638, %v636
        %v723 = vpack.c.b16 %v639, %v637
        %v724 = vpack.c.b16 %v642, %v640
        %v725 = vpack.c.b16 %v643, %v641
        %v726 = vpack.c.b16 %v646, %v644
        %v727 = vpack.c.b16 %v647, %v645
        %v728 = vpack.c.b16 %v650, %v648
        %v729 = vpack.c.b16 %v651, %v649
        %v730 = vpack.c.b16 %v654, %v652
        %v731 = vpack.c.b16 %v655, %v653
        %v732 = vpack.c.b16 %v658, %v656
        %v733 = vpack.c.b16 %v659, %v657
        %v734 = vpack.c.b16 %v662, %v660
        %v735 = vpack.c.b16 %v663, %v661
        %v736 = vpack.c.b16 %v666, %v664
        %v737 = vpack.c.b16 %v667, %v665
        %v738 = vpack.c.b16 %v670, %v668
        %v739 = vpack.c.b16 %v671, %v669
        %v740 = vpack.c.b16 %v674, %v672
        %v741 = vpack.c.b16 %v675, %v673
        %v742 = vpack.c.b16 %v678, %v676
        %v743 = vpack.c.b16 %v679, %v677
        %v744 = vpack.c.b16 %v682, %v680
        %v745 = vpack.c.b16 %v683, %v681
        %v746 = vpack.c.b16 %v686, %v684
        %v747 = vpack.c.b16 %v687, %v685
        %v748 = vpack.c.b16 %v690, %v688
        %v749 = vpack.c.b16 %v691, %v689
        %v750 = vpack.c.b16 %v694, %v692
        %v751 = vpack.c.b16 %v695, %v693
        %v752 = vpack.c.b16 %v698, %v696
        %v753 = vpack.c.b16 %v699, %v697
        %vm808 = vcmask 392192
        %v810 = vsel %vm808, %v471, 0
        %812 = vmatprep.subr.bf16.mxu0 %v715
        %813 = vmatpush1.bf16.msra.mxu0 %v714
        %814 = vmatprep.subr.bf16.mxu0 %v713
        %815 = vmatpush1.bf16.msra.mxu0 %v712
        %816 = vmatprep.subr.bf16.mxu0 %v711
        %817 = vmatpush1.bf16.msra.mxu0 %v710
        %818 = vmatprep.subr.bf16.mxu0 %v709
        %819 = vmatpush1.bf16.msra.mxu0 %v708
        %820 = vmatprep.subr.bf16.mxu0 %v707
        %821 = vmatpush1.bf16.msra.mxu0 %v706
        %822 = vmatprep.subr.bf16.mxu0 %v705
        %823 = vmatpush1.bf16.msra.mxu0 %v704
        %824 = vmatprep.subr.bf16.mxu0 %v703
        %825 = vmatpush1.bf16.msra.mxu0 %v702
        %826 = vmatprep.subr.bf16.mxu0 %v701
        %827 = vmatpush1.bf16.msra.mxu0 %v700
        %828 = vmatprep.subr.bf16.mxu0 %v731
        %829 = vmatpush2.bf16.msra.mxu0 %v730
        %830 = vmatprep.subr.bf16.mxu0 %v729
        %831 = vmatpush2.bf16.msra.mxu0 %v728
        %832 = vmatprep.subr.bf16.mxu0 %v727
        %833 = vmatpush2.bf16.msra.mxu0 %v726
        %834 = vmatprep.subr.bf16.mxu0 %v725
        %835 = vmatpush2.bf16.msra.mxu0 %v724
        %836 = vmatprep.subr.bf16.mxu0 %v723
        %837 = vmatpush2.bf16.msra.mxu0 %v722
        %838 = vmatprep.subr.bf16.mxu0 %v721
        %839 = vmatpush2.bf16.msra.mxu0 %v720
        %840 = vmatprep.subr.bf16.mxu0 %v719
        %841 = vmatpush2.bf16.msra.mxu0 %v718
        %842 = vmatprep.subr.bf16.mxu0 %v717
        %843 = vmatpush2.bf16.msra.mxu0 %v716
        %844 = vmatprep.mubr.bf16.mxu0 %v469
        %845 = vmatmul.mubr.bf16.gmra.mxu0 %v468
        %v846 = vpop.f32.mrf.mxu0
        %v847 = vadd.f32 %v531, %v846
        %v848 = vpop.f32.mrf.mxu0
        %v849 = vadd.f32 %v535, %v848
        %v850 = vpop.f32.mrf.mxu0
        %v851 = vpop.f32.mrf.mxu0
        %852 = vdwg.mxu0
        %853 = vmatprep.subr.bf16.mxu0 %v747
        %854 = vmatpush1.bf16.msra.mxu0 %v746
        %855 = vmatprep.subr.bf16.mxu0 %v745
        %856 = vmatpush1.bf16.msra.mxu0 %v744
        %857 = vmatprep.subr.bf16.mxu0 %v743
        %858 = vmatpush1.bf16.msra.mxu0 %v742
        %859 = vmatprep.subr.bf16.mxu0 %v741
        %860 = vmatpush1.bf16.msra.mxu0 %v740
        %861 = vmatprep.subr.bf16.mxu0 %v739
        %862 = vmatpush1.bf16.msra.mxu0 %v738
        %863 = vmatprep.subr.bf16.mxu0 %v737
        %864 = vmatpush1.bf16.msra.mxu0 %v736
        %865 = vmatprep.subr.bf16.mxu0 %v735
        %866 = vmatpush1.bf16.msra.mxu0 %v734
        %867 = vmatprep.subr.bf16.mxu0 %v733
        %868 = vmatpush1.bf16.msra.mxu0 %v732
        %869 = vmatprep.subr.bf16.mxu0 0
        %870 = vmatpush2.bf16.msra.mxu0 0
        %871 = vmatprep.subr.bf16.mxu0 0
        %872 = vmatpush2.bf16.msra.mxu0 0
        %873 = vmatprep.subr.bf16.mxu0 0
        %874 = vmatpush2.bf16.msra.mxu0 0
        %875 = vmatprep.subr.bf16.mxu0 0
        %876 = vmatpush2.bf16.msra.mxu0 0
        %877 = vmatprep.subr.bf16.mxu0 0
        %878 = vmatpush2.bf16.msra.mxu0 0
        %879 = vmatprep.subr.bf16.mxu0 %v753
        %880 = vmatpush2.bf16.msra.mxu0 %v752
        %881 = vmatprep.subr.bf16.mxu0 %v751
        %882 = vmatpush2.bf16.msra.mxu0 %v750
        %883 = vmatprep.subr.bf16.mxu0 %v749
        %884 = vmatpush2.bf16.msra.mxu0 %v748
        %885 = vmatprep.mubr.bf16.mxu0 %v810
        %886 = vmatmul.mubr.bf16.gmra.mxu0 %v470
        %v887 = vpop.f32.mrf.mxu0
        %v888 = vadd.f32 %v847, %v887
        %v889 = vpop.f32.mrf.mxu0
        %v890 = vadd.f32 %v849, %v889
        %v891 = vpop.f32.mrf.mxu0
        %v892 = vpop.f32.mrf.mxu0
        %893 = vdwg.mxu0
        %vm894 = vcmp.ge.f32.partialorder %v888, 0.0
        %vm895 = vcmp.ge.f32.partialorder %v890, 0.0
        %v896 = vmul.f32 %v888, 0.2
        %v897 = vmul.f32 %v890, 0.2
        %v898 = vsel %vm894, %v888, %v896
        %v899 = vsel %vm895, %v890, %v897
        %v900 = vcombine.high %v453, %v453
        %v902 = vunpack.c.l.s4 1983009808
        %v903 = vunpack.c.0.s8 %v902
        %v904 = vlaneseq
        %v905 = vshrl.u32 %v904, 7
        %v906 = vsub.s32 %v903, %v905
        %v907 = vrot.slane %v417, %v906
        %908 = vrot.lane.b32.xlu0 %v454, 112
        %v909 = vpop.permute.xlu0 %908
        %910 = vrot.lane.b32.xlu0 %v453, 112
        %v911 = vpop.permute.xlu0 %910
        %912 = vrot.lane.b32.xlu0 %v900, 112
        %v913 = vpop.permute.xlu0 %912
        %914 = vrot.lane.b32.xlu0 %v907, 112
        %v915 = vpop.permute.xlu0 %914
        %vm916 = vcmask 916480
        %v917 = vsel %vm916, %v909, %v911
        %v918 = vsel %vm916, %v911, %v913
        %v919 = vsel %vm916, %v913, %v915
        %v924 = vpack.c.bf16 %v917, %v917
        %v925 = vpack.c.bf16 %v918, %v918
        %v926 = vpack.c.bf16 %v919, %v919
        %v927 = vpack.c.bf16 %v915, %v915
        %v929 = vsel %vm808, %v927, 0
        %931 = vmatprep.subr.bf16.mxu0 %v715
        %932 = vmatpush1.bf16.msra.mxu0 %v714
        %933 = vmatprep.subr.bf16.mxu0 %v713
        %934 = vmatpush1.bf16.msra.mxu0 %v712
        %935 = vmatprep.subr.bf16.mxu0 %v711
        %936 = vmatpush1.bf16.msra.mxu0 %v710
        %937 = vmatprep.subr.bf16.mxu0 %v709
        %938 = vmatpush1.bf16.msra.mxu0 %v708
        %939 = vmatprep.subr.bf16.mxu0 %v707
        %940 = vmatpush1.bf16.msra.mxu0 %v706
        %941 = vmatprep.subr.bf16.mxu0 %v705
        %942 = vmatpush1.bf16.msra.mxu0 %v704
        %943 = vmatprep.subr.bf16.mxu0 %v703
        %944 = vmatpush1.bf16.msra.mxu0 %v702
        %945 = vmatprep.subr.bf16.mxu0 %v701
        %946 = vmatpush1.bf16.msra.mxu0 %v700
        %947 = vmatprep.subr.bf16.mxu0 %v731
        %948 = vmatpush2.bf16.msra.mxu0 %v730
        %949 = vmatprep.subr.bf16.mxu0 %v729
        %950 = vmatpush2.bf16.msra.mxu0 %v728
        %951 = vmatprep.subr.bf16.mxu0 %v727
        %952 = vmatpush2.bf16.msra.mxu0 %v726
        %953 = vmatprep.subr.bf16.mxu0 %v725
        %954 = vmatpush2.bf16.msra.mxu0 %v724
        %955 = vmatprep.subr.bf16.mxu0 %v723
        %956 = vmatpush2.bf16.msra.mxu0 %v722
        %957 = vmatprep.subr.bf16.mxu0 %v721
        %958 = vmatpush2.bf16.msra.mxu0 %v720
        %959 = vmatprep.subr.bf16.mxu0 %v719
        %960 = vmatpush2.bf16.msra.mxu0 %v718
        %961 = vmatprep.subr.bf16.mxu0 %v717
        %962 = vmatpush2.bf16.msra.mxu0 %v716
        %963 = vmatprep.mubr.bf16.mxu0 %v925
        %964 = vmatmul.mubr.bf16.gmra.mxu0 %v924
        %v965 = vpop.f32.mrf.mxu0
        %v966 = vadd.f32 %v531, %v965
        %v967 = vpop.f32.mrf.mxu0
        %v968 = vadd.f32 %v535, %v967
        %v969 = vpop.f32.mrf.mxu0
        %v970 = vpop.f32.mrf.mxu0
        %971 = vdwg.mxu0
        %972 = vmatprep.subr.bf16.mxu0 %v747
        %973 = vmatpush1.bf16.msra.mxu0 %v746
        %974 = vmatprep.subr.bf16.mxu0 %v745
        %975 = vmatpush1.bf16.msra.mxu0 %v744
        %976 = vmatprep.subr.bf16.mxu0 %v743
        %977 = vmatpush1.bf16.msra.mxu0 %v742
        %978 = vmatprep.subr.bf16.mxu0 %v741
        %979 = vmatpush1.bf16.msra.mxu0 %v740
        %980 = vmatprep.subr.bf16.mxu0 %v739
        %981 = vmatpush1.bf16.msra.mxu0 %v738
        %982 = vmatprep.subr.bf16.mxu0 %v737
        %983 = vmatpush1.bf16.msra.mxu0 %v736
        %984 = vmatprep.subr.bf16.mxu0 %v735
        %985 = vmatpush1.bf16.msra.mxu0 %v734
        %986 = vmatprep.subr.bf16.mxu0 %v733
        %987 = vmatpush1.bf16.msra.mxu0 %v732
        %988 = vmatprep.subr.bf16.mxu0 0
        %989 = vmatpush2.bf16.msra.mxu0 0
        %990 = vmatprep.subr.bf16.mxu0 0
        %991 = vmatpush2.bf16.msra.mxu0 0
        %992 = vmatprep.subr.bf16.mxu0 0
        %993 = vmatpush2.bf16.msra.mxu0 0
        %994 = vmatprep.subr.bf16.mxu0 0
        %995 = vmatpush2.bf16.msra.mxu0 0
        %996 = vmatprep.subr.bf16.mxu0 0
        %997 = vmatpush2.bf16.msra.mxu0 0
        %998 = vmatprep.subr.bf16.mxu0 %v753
        %999 = vmatpush2.bf16.msra.mxu0 %v752
        %1000 = vmatprep.subr.bf16.mxu0 %v751
        %1001 = vmatpush2.bf16.msra.mxu0 %v750
        %1002 = vmatprep.subr.bf16.mxu0 %v749
        %1003 = vmatpush2.bf16.msra.mxu0 %v748
        %1004 = vmatprep.mubr.bf16.mxu0 %v929
        %1005 = vmatmul.mubr.bf16.gmra.mxu0 %v926
        %v1006 = vpop.f32.mrf.mxu0
        %v1007 = vadd.f32 %v966, %v1006
        %v1008 = vpop.f32.mrf.mxu0
        %v1009 = vadd.f32 %v968, %v1008
        %v1010 = vpop.f32.mrf.mxu0
        %v1011 = vpop.f32.mrf.mxu0
        %1012 = vdwg.mxu0
        %vm1013 = vcmp.ge.f32.partialorder %v1007, 0.0
        %vm1014 = vcmp.ge.f32.partialorder %v1009, 0.0
        %v1015 = vmul.f32 %v1007, 0.2
        %v1016 = vmul.f32 %v1009, 0.2
        %v1017 = vsel %vm1013, %v1007, %v1015
        %v1018 = vsel %vm1014, %v1009, %v1016
        %v1021 = vrot.slane %v1017, 7
        %v1022 = vrot.slane %v1018, 7
        %v1025 = vsel %vm436, 0.0, %v1021
        %v1026 = vsel %vm436, 0.0, %v1022
        %v1027 = vpack.c.bf16 %v1025, %v1025
        %v1028 = vpack.c.bf16 %v1026, %v1026
        %v1029 = vpack.c.bf16 %v898, %v898
        %v1030 = vpack.c.bf16 %v899, %v899
        %v1031 = vpack.c.bf16 %v1017, %v1017
        %v1032 = vpack.c.bf16 %v1018, %v1018
        %v1033 = vld [vmem:[%s3] sm:$0xff]
        %v1034 = vld [vmem:[%s3 + $0x8] sm:$0xff]
        %v1035 = vld [vmem:[%s3 + $0x10] sm:$0xff]
        %v1036 = vld [vmem:[%s3 + $0x18] sm:$0xff]
        %v1037 = vld [vmem:[%s3 + $0x20] sm:$0xff]
        %v1038 = vld [vmem:[%s3 + $0x28] sm:$0xff]
        %v1039 = vld [vmem:[%s3 + $0x30] sm:$0xff]
        %v1040 = vld [vmem:[%s3 + $0x38] sm:$0xff]
        %v1041 = vld [vmem:[%s3 + $0x40] sm:$0xff]
        %v1042 = vld [vmem:[%s3 + $0x48] sm:$0xff]
        %v1043 = vld [vmem:[%s3 + $0x50] sm:$0xff]
        %v1044 = vld [vmem:[%s3 + $0x58] sm:$0xff]
        %v1045 = vld [vmem:[%s3 + $0x60] sm:$0xff]
        %v1046 = vld [vmem:[%s3 + $0x68] sm:$0xff]
        %v1047 = vld [vmem:[%s3 + $0x70] sm:$0xff]
        %v1048 = vld [vmem:[%s3 + $0x78] sm:$0xff]
        %v1049 = vld [vmem:[%s3 + $0x80] sm:$0xff]
        %v1050 = vld [vmem:[%s3 + $0x88] sm:$0xff]
        %v1051 = vld [vmem:[%s3 + $0x90] sm:$0xff]
        %v1052 = vld [vmem:[%s3 + $0x98] sm:$0xff]
        %v1053 = vld [vmem:[%s3 + $0xa0] sm:$0xff]
        %v1054 = vld [vmem:[%s3 + $0xa8] sm:$0xff]
        %v1055 = vld [vmem:[%s3 + $0xb0] sm:$0xff]
        %v1056 = vld [vmem:[%s3 + $0xb8] sm:$0xff]
        %v1057 = vld [vmem:[%s3 + $0xc0] sm:$0xff]
        %v1058 = vld [vmem:[%s3 + $0xc8] sm:$0xff]
        %v1059 = vld [vmem:[%s3 + $0xd0] sm:$0xff]
        %v1060 = vld [vmem:[%s3 + $0xd8] sm:$0xff]
        %v1061 = vld [vmem:[%s3 + $0xe0] sm:$0xff]
        %v1062 = vld [vmem:[%s3 + $0xe8] sm:$0xff]
        %v1063 = vld [vmem:[%s3 + $0xf0] sm:$0xff]
        %v1064 = vld [vmem:[%s3 + $0xf8] sm:$0xff]
        %v1065 = vld [vmem:[%s3 + $0x100] sm:$0xff]
        %v1066 = vld [vmem:[%s3 + $0x108] sm:$0xff]
        %v1067 = vld [vmem:[%s3 + $0x110] sm:$0xff]
        %v1068 = vld [vmem:[%s3 + $0x118] sm:$0xff]
        %v1069 = vld [vmem:[%s3 + $0x120] sm:$0xff]
        %v1070 = vld [vmem:[%s3 + $0x128] sm:$0xff]
        %v1071 = vld [vmem:[%s3 + $0x130] sm:$0xff]
        %v1072 = vld [vmem:[%s3 + $0x138] sm:$0xff]
        %v1073 = vld [vmem:[%s3 + $0x140] sm:$0xff]
        %v1074 = vld [vmem:[%s3 + $0x148] sm:$0xff]
        %v1075 = vld [vmem:[%s3 + $0x150] sm:$0xff]
        %v1076 = vld [vmem:[%s3 + $0x158] sm:$0xff]
        %v1077 = vld [vmem:[%s3 + $0x160] sm:$0xff]
        %v1078 = vld [vmem:[%s3 + $0x168] sm:$0xff]
        %v1079 = vld [vmem:[%s3 + $0x170] sm:$0xff]
        %v1080 = vld [vmem:[%s3 + $0x178] sm:$0xff]
        %v1081 = vld [vmem:[%s3 + $0x180] sm:$0xff]
        %v1082 = vld [vmem:[%s3 + $0x188] sm:$0xff]
        %v1083 = vld [vmem:[%s3 + $0x190] sm:$0xff]
        %v1084 = vld [vmem:[%s3 + $0x198] sm:$0xff]
        %v1085 = vld [vmem:[%s3 + $0x1a0] sm:$0xff]
        %v1086 = vld [vmem:[%s3 + $0x1a8] sm:$0xff]
        %v1087 = vld [vmem:[%s3 + $0x1b0] sm:$0xff]
        %v1088 = vld [vmem:[%s3 + $0x1b8] sm:$0xff]
        %v1089 = vld [vmem:[%s3 + $0x1c0] sm:$0xff]
        %v1090 = vld [vmem:[%s3 + $0x1c8] sm:$0xff]
        %v1091 = vld [vmem:[%s3 + $0x1d0] sm:$0xff]
        %v1092 = vld [vmem:[%s3 + $0x1d8] sm:$0xff]
        %v1093 = vld [vmem:[%s3 + $0x1e0] sm:$0xff]
        %v1094 = vld [vmem:[%s3 + $0x1e8] sm:$0xff]
        %v1095 = vld [vmem:[%s3 + $0x1f0] sm:$0xff]
        %v1096 = vld [vmem:[%s3 + $0x1f8] sm:$0xff]
        %v1097 = vld [vmem:[%s3 + $0x200] sm:$0xff]
        %v1098 = vld [vmem:[%s3 + $0x208] sm:$0xff]
        %v1099 = vld [vmem:[%s3 + $0x210] sm:$0xff]
        %v1100 = vld [vmem:[%s3 + $0x218] sm:$0xff]
        %v1101 = vld [vmem:[%s3 + $0x220] sm:$0xff]
        %v1102 = vld [vmem:[%s3 + $0x228] sm:$0xff]
        %v1103 = vld [vmem:[%s3 + $0x230] sm:$0xff]
        %v1104 = vld [vmem:[%s3 + $0x238] sm:$0xff]
        %v1105 = vld [vmem:[%s3 + $0x240] sm:$0xff]
        %v1106 = vld [vmem:[%s3 + $0x248] sm:$0xff]
        %v1107 = vld [vmem:[%s3 + $0x250] sm:$0xff]
        %v1108 = vld [vmem:[%s3 + $0x258] sm:$0xff]
        %v1109 = vld [vmem:[%s3 + $0x260] sm:$0xff]
        %v1110 = vld [vmem:[%s3 + $0x268] sm:$0xff]
        %v1111 = vld [vmem:[%s3 + $0x270] sm:$0xff]
        %v1112 = vld [vmem:[%s3 + $0x278] sm:$0xff]
        %v1113 = vld [vmem:[%s3 + $0x280] sm:$0xff]
        %v1114 = vld [vmem:[%s3 + $0x288] sm:$0xff]
        %v1115 = vld [vmem:[%s3 + $0x290] sm:$0xff]
        %v1116 = vld [vmem:[%s3 + $0x298] sm:$0xff]
        %v1117 = vld [vmem:[%s3 + $0x2a0] sm:$0xff]
        %v1118 = vld [vmem:[%s3 + $0x2a8] sm:$0xff]
        %v1119 = vld [vmem:[%s3 + $0x2b0] sm:$0xff]
        %v1120 = vld [vmem:[%s3 + $0x2b8] sm:$0xff]
        %v1121 = vld [vmem:[%s3 + $0x2c0] sm:$0xff]
        %v1122 = vld [vmem:[%s3 + $0x2c8] sm:$0xff]
        %v1123 = vld [vmem:[%s3 + $0x2d0] sm:$0xff]
        %v1124 = vld [vmem:[%s3 + $0x2d8] sm:$0xff]
        %v1125 = vld [vmem:[%s3 + $0x2e0] sm:$0xff]
        %v1126 = vld [vmem:[%s3 + $0x2e8] sm:$0xff]
        %v1127 = vld [vmem:[%s3 + $0x2f0] sm:$0xff]
        %v1128 = vld [vmem:[%s3 + $0x2f8] sm:$0xff]
        %v1129 = vld [vmem:[%s4] sm:$0x3]
        %v1131 = vlaneseq
        %v1132 = vshrl.u32 %v1131, 7
        %v1133 = vsub.s32 0, %v1132
        %v1134 = vrot.slane %v1129, %v1133
        %v1135 = vlaneseq
        %v1136 = vshrl.u32 %v1135, 7
        %v1137 = vsub.s32 1, %v1136
        %v1138 = vrot.slane %v1129, %v1137
        %v1237 = vunpack.c.l.b16 %v1033
        %v1238 = vunpack.c.h.b16 %v1033
        %v1239 = vunpack.c.l.b16 %v1034
        %v1240 = vunpack.c.h.b16 %v1034
        %v1241 = vunpack.c.l.b16 %v1035
        %v1242 = vunpack.c.h.b16 %v1035
        %v1243 = vunpack.c.l.b16 %v1036
        %v1244 = vunpack.c.h.b16 %v1036
        %v1245 = vunpack.c.l.b16 %v1037
        %v1246 = vunpack.c.h.b16 %v1037
        %v1247 = vunpack.c.l.b16 %v1038
        %v1248 = vunpack.c.h.b16 %v1038
        %v1249 = vunpack.c.l.b16 %v1039
        %v1250 = vunpack.c.h.b16 %v1039
        %v1251 = vunpack.c.l.b16 %v1040
        %v1252 = vunpack.c.h.b16 %v1040
        %v1253 = vunpack.c.l.b16 %v1041
        %v1254 = vunpack.c.h.b16 %v1041
        %v1255 = vunpack.c.l.b16 %v1042
        %v1256 = vunpack.c.h.b16 %v1042
        %v1257 = vunpack.c.l.b16 %v1043
        %v1258 = vunpack.c.h.b16 %v1043
        %v1259 = vunpack.c.l.b16 %v1044
        %v1260 = vunpack.c.h.b16 %v1044
        %v1261 = vunpack.c.l.b16 %v1045
        %v1262 = vunpack.c.h.b16 %v1045
        %v1263 = vunpack.c.l.b16 %v1046
        %v1264 = vunpack.c.h.b16 %v1046
        %v1265 = vunpack.c.l.b16 %v1047
        %v1266 = vunpack.c.h.b16 %v1047
        %v1267 = vunpack.c.l.b16 %v1048
        %v1268 = vunpack.c.h.b16 %v1048
        %v1269 = vunpack.c.l.b16 %v1049
        %v1270 = vunpack.c.h.b16 %v1049
        %v1271 = vunpack.c.l.b16 %v1050
        %v1272 = vunpack.c.h.b16 %v1050
        %v1273 = vunpack.c.l.b16 %v1051
        %v1274 = vunpack.c.h.b16 %v1051
        %v1275 = vunpack.c.l.b16 %v1052
        %v1276 = vunpack.c.h.b16 %v1052
        %v1277 = vunpack.c.l.b16 %v1053
        %v1278 = vunpack.c.h.b16 %v1053
        %v1279 = vunpack.c.l.b16 %v1054
        %v1280 = vunpack.c.h.b16 %v1054
        %v1281 = vunpack.c.l.b16 %v1055
        %v1282 = vunpack.c.h.b16 %v1055
        %v1283 = vunpack.c.l.b16 %v1056
        %v1284 = vunpack.c.h.b16 %v1056
        %v1285 = vunpack.c.l.b16 %v1057
        %v1286 = vunpack.c.h.b16 %v1057
        %v1287 = vunpack.c.l.b16 %v1058
        %v1288 = vunpack.c.h.b16 %v1058
        %v1289 = vunpack.c.l.b16 %v1059
        %v1290 = vunpack.c.h.b16 %v1059
        %v1291 = vunpack.c.l.b16 %v1060
        %v1292 = vunpack.c.h.b16 %v1060
        %v1293 = vunpack.c.l.b16 %v1061
        %v1294 = vunpack.c.h.b16 %v1061
        %v1295 = vunpack.c.l.b16 %v1062
        %v1296 = vunpack.c.h.b16 %v1062
        %v1297 = vunpack.c.l.b16 %v1063
        %v1298 = vunpack.c.h.b16 %v1063
        %v1299 = vunpack.c.l.b16 %v1064
        %v1300 = vunpack.c.h.b16 %v1064
        %v1301 = vunpack.c.l.b16 %v1065
        %v1302 = vunpack.c.h.b16 %v1065
        %v1303 = vunpack.c.l.b16 %v1066
        %v1304 = vunpack.c.h.b16 %v1066
        %v1305 = vunpack.c.l.b16 %v1067
        %v1306 = vunpack.c.h.b16 %v1067
        %v1307 = vunpack.c.l.b16 %v1068
        %v1308 = vunpack.c.h.b16 %v1068
        %v1309 = vunpack.c.l.b16 %v1069
        %v1310 = vunpack.c.h.b16 %v1069
        %v1311 = vunpack.c.l.b16 %v1070
        %v1312 = vunpack.c.h.b16 %v1070
        %v1313 = vunpack.c.l.b16 %v1071
        %v1314 = vunpack.c.h.b16 %v1071
        %v1315 = vunpack.c.l.b16 %v1072
        %v1316 = vunpack.c.h.b16 %v1072
        %v1317 = vunpack.c.l.b16 %v1073
        %v1318 = vunpack.c.h.b16 %v1073
        %v1319 = vunpack.c.l.b16 %v1074
        %v1320 = vunpack.c.h.b16 %v1074
        %v1321 = vunpack.c.l.b16 %v1075
        %v1322 = vunpack.c.h.b16 %v1075
        %v1323 = vunpack.c.l.b16 %v1076
        %v1324 = vunpack.c.h.b16 %v1076
        %v1325 = vunpack.c.l.b16 %v1077
        %v1326 = vunpack.c.h.b16 %v1077
        %v1327 = vunpack.c.l.b16 %v1078
        %v1328 = vunpack.c.h.b16 %v1078
        %v1329 = vunpack.c.l.b16 %v1079
        %v1330 = vunpack.c.h.b16 %v1079
        %v1331 = vunpack.c.l.b16 %v1080
        %v1332 = vunpack.c.h.b16 %v1080
        %v1333 = vunpack.c.l.b16 %v1081
        %v1334 = vunpack.c.h.b16 %v1081
        %v1335 = vunpack.c.l.b16 %v1082
        %v1336 = vunpack.c.h.b16 %v1082
        %v1337 = vunpack.c.l.b16 %v1083
        %v1338 = vunpack.c.h.b16 %v1083
        %v1339 = vunpack.c.l.b16 %v1084
        %v1340 = vunpack.c.h.b16 %v1084
        %v1341 = vunpack.c.l.b16 %v1085
        %v1342 = vunpack.c.h.b16 %v1085
        %v1343 = vunpack.c.l.b16 %v1086
        %v1344 = vunpack.c.h.b16 %v1086
        %v1345 = vunpack.c.l.b16 %v1087
        %v1346 = vunpack.c.h.b16 %v1087
        %v1347 = vunpack.c.l.b16 %v1088
        %v1348 = vunpack.c.h.b16 %v1088
        %v1349 = vunpack.c.l.b16 %v1089
        %v1350 = vunpack.c.h.b16 %v1089
        %v1351 = vunpack.c.l.b16 %v1090
        %v1352 = vunpack.c.h.b16 %v1090
        %v1353 = vunpack.c.l.b16 %v1091
        %v1354 = vunpack.c.h.b16 %v1091
        %v1355 = vunpack.c.l.b16 %v1092
        %v1356 = vunpack.c.h.b16 %v1092
        %v1357 = vunpack.c.l.b16 %v1093
        %v1358 = vunpack.c.h.b16 %v1093
        %v1359 = vunpack.c.l.b16 %v1094
        %v1360 = vunpack.c.h.b16 %v1094
        %v1361 = vunpack.c.l.b16 %v1095
        %v1362 = vunpack.c.h.b16 %v1095
        %v1363 = vunpack.c.l.b16 %v1096
        %v1364 = vunpack.c.h.b16 %v1096
        %v1365 = vunpack.c.l.b16 %v1097
        %v1366 = vunpack.c.h.b16 %v1097
        %v1367 = vunpack.c.l.b16 %v1098
        %v1368 = vunpack.c.h.b16 %v1098
        %v1369 = vunpack.c.l.b16 %v1099
        %v1370 = vunpack.c.h.b16 %v1099
        %v1371 = vunpack.c.l.b16 %v1100
        %v1372 = vunpack.c.h.b16 %v1100
        %v1373 = vunpack.c.l.b16 %v1101
        %v1374 = vunpack.c.h.b16 %v1101
        %v1375 = vunpack.c.l.b16 %v1102
        %v1376 = vunpack.c.h.b16 %v1102
        %v1377 = vunpack.c.l.b16 %v1103
        %v1378 = vunpack.c.h.b16 %v1103
        %v1379 = vunpack.c.l.b16 %v1104
        %v1380 = vunpack.c.h.b16 %v1104
        %v1381 = vunpack.c.l.b16 %v1105
        %v1382 = vunpack.c.h.b16 %v1105
        %v1383 = vunpack.c.l.b16 %v1106
        %v1384 = vunpack.c.h.b16 %v1106
        %v1385 = vunpack.c.l.b16 %v1107
        %v1386 = vunpack.c.h.b16 %v1107
        %v1387 = vunpack.c.l.b16 %v1108
        %v1388 = vunpack.c.h.b16 %v1108
        %v1389 = vunpack.c.l.b16 %v1109
        %v1390 = vunpack.c.h.b16 %v1109
        %v1391 = vunpack.c.l.b16 %v1110
        %v1392 = vunpack.c.h.b16 %v1110
        %v1393 = vunpack.c.l.b16 %v1111
        %v1394 = vunpack.c.h.b16 %v1111
        %v1395 = vunpack.c.l.b16 %v1112
        %v1396 = vunpack.c.h.b16 %v1112
        %v1397 = vunpack.c.l.b16 %v1113
        %v1398 = vunpack.c.h.b16 %v1113
        %v1399 = vunpack.c.l.b16 %v1114
        %v1400 = vunpack.c.h.b16 %v1114
        %v1401 = vunpack.c.l.b16 %v1115
        %v1402 = vunpack.c.h.b16 %v1115
        %v1403 = vunpack.c.l.b16 %v1116
        %v1404 = vunpack.c.h.b16 %v1116
        %v1405 = vunpack.c.l.b16 %v1117
        %v1406 = vunpack.c.h.b16 %v1117
        %v1407 = vunpack.c.l.b16 %v1118
        %v1408 = vunpack.c.h.b16 %v1118
        %v1409 = vunpack.c.l.b16 %v1119
        %v1410 = vunpack.c.h.b16 %v1119
        %v1411 = vunpack.c.l.b16 %v1120
        %v1412 = vunpack.c.h.b16 %v1120
        %v1413 = vunpack.c.l.b16 %v1121
        %v1414 = vunpack.c.h.b16 %v1121
        %v1415 = vunpack.c.l.b16 %v1122
        %v1416 = vunpack.c.h.b16 %v1122
        %v1417 = vunpack.c.l.b16 %v1123
        %v1418 = vunpack.c.h.b16 %v1123
        %v1419 = vunpack.c.l.b16 %v1124
        %v1420 = vunpack.c.h.b16 %v1124
        %v1421 = vunpack.c.l.b16 %v1125
        %v1422 = vunpack.c.h.b16 %v1125
        %v1423 = vunpack.c.l.b16 %v1126
        %v1424 = vunpack.c.h.b16 %v1126
        %v1425 = vunpack.c.l.b16 %v1127
        %v1426 = vunpack.c.h.b16 %v1127
        %v1427 = vunpack.c.l.b16 %v1128
        %v1428 = vunpack.c.h.b16 %v1128
        %v1429 = vpack.c.b16 %v1239, %v1237
        %v1430 = vpack.c.b16 %v1240, %v1238
        %v1431 = vpack.c.b16 %v1243, %v1241
        %v1432 = vpack.c.b16 %v1244, %v1242
        %v1433 = vpack.c.b16 %v1247, %v1245
        %v1434 = vpack.c.b16 %v1248, %v1246
        %v1435 = vpack.c.b16 %v1251, %v1249
        %v1436 = vpack.c.b16 %v1252, %v1250
        %v1437 = vpack.c.b16 %v1255, %v1253
        %v1438 = vpack.c.b16 %v1256, %v1254
        %v1439 = vpack.c.b16 %v1259, %v1257
        %v1440 = vpack.c.b16 %v1260, %v1258
        %v1441 = vpack.c.b16 %v1263, %v1261
        %v1442 = vpack.c.b16 %v1264, %v1262
        %v1443 = vpack.c.b16 %v1267, %v1265
        %v1444 = vpack.c.b16 %v1268, %v1266
        %v1445 = vpack.c.b16 %v1271, %v1269
        %v1446 = vpack.c.b16 %v1272, %v1270
        %v1447 = vpack.c.b16 %v1275, %v1273
        %v1448 = vpack.c.b16 %v1276, %v1274
        %v1449 = vpack.c.b16 %v1279, %v1277
        %v1450 = vpack.c.b16 %v1280, %v1278
        %v1451 = vpack.c.b16 %v1283, %v1281
        %v1452 = vpack.c.b16 %v1284, %v1282
        %v1453 = vpack.c.b16 %v1287, %v1285
        %v1454 = vpack.c.b16 %v1288, %v1286
        %v1455 = vpack.c.b16 %v1291, %v1289
        %v1456 = vpack.c.b16 %v1292, %v1290
        %v1457 = vpack.c.b16 %v1295, %v1293
        %v1458 = vpack.c.b16 %v1296, %v1294
        %v1459 = vpack.c.b16 %v1299, %v1297
        %v1460 = vpack.c.b16 %v1300, %v1298
        %v1461 = vpack.c.b16 %v1303, %v1301
        %v1462 = vpack.c.b16 %v1304, %v1302
        %v1463 = vpack.c.b16 %v1307, %v1305
        %v1464 = vpack.c.b16 %v1308, %v1306
        %v1465 = vpack.c.b16 %v1311, %v1309
        %v1466 = vpack.c.b16 %v1312, %v1310
        %v1467 = vpack.c.b16 %v1315, %v1313
        %v1468 = vpack.c.b16 %v1316, %v1314
        %v1469 = vpack.c.b16 %v1319, %v1317
        %v1470 = vpack.c.b16 %v1320, %v1318
        %v1471 = vpack.c.b16 %v1323, %v1321
        %v1472 = vpack.c.b16 %v1324, %v1322
        %v1473 = vpack.c.b16 %v1327, %v1325
        %v1474 = vpack.c.b16 %v1328, %v1326
        %v1475 = vpack.c.b16 %v1331, %v1329
        %v1476 = vpack.c.b16 %v1332, %v1330
        %v1477 = vpack.c.b16 %v1335, %v1333
        %v1478 = vpack.c.b16 %v1336, %v1334
        %v1479 = vpack.c.b16 %v1339, %v1337
        %v1480 = vpack.c.b16 %v1340, %v1338
        %v1481 = vpack.c.b16 %v1343, %v1341
        %v1482 = vpack.c.b16 %v1344, %v1342
        %v1483 = vpack.c.b16 %v1347, %v1345
        %v1484 = vpack.c.b16 %v1348, %v1346
        %v1485 = vpack.c.b16 %v1351, %v1349
        %v1486 = vpack.c.b16 %v1352, %v1350
        %v1487 = vpack.c.b16 %v1355, %v1353
        %v1488 = vpack.c.b16 %v1356, %v1354
        %v1489 = vpack.c.b16 %v1359, %v1357
        %v1490 = vpack.c.b16 %v1360, %v1358
        %v1491 = vpack.c.b16 %v1363, %v1361
        %v1492 = vpack.c.b16 %v1364, %v1362
        %v1493 = vpack.c.b16 %v1367, %v1365
        %v1494 = vpack.c.b16 %v1368, %v1366
        %v1495 = vpack.c.b16 %v1371, %v1369
        %v1496 = vpack.c.b16 %v1372, %v1370
        %v1497 = vpack.c.b16 %v1375, %v1373
        %v1498 = vpack.c.b16 %v1376, %v1374
        %v1499 = vpack.c.b16 %v1379, %v1377
        %v1500 = vpack.c.b16 %v1380, %v1378
        %v1501 = vpack.c.b16 %v1383, %v1381
        %v1502 = vpack.c.b16 %v1384, %v1382
        %v1503 = vpack.c.b16 %v1387, %v1385
        %v1504 = vpack.c.b16 %v1388, %v1386
        %v1505 = vpack.c.b16 %v1391, %v1389
        %v1506 = vpack.c.b16 %v1392, %v1390
        %v1507 = vpack.c.b16 %v1395, %v1393
        %v1508 = vpack.c.b16 %v1396, %v1394
        %v1509 = vpack.c.b16 %v1399, %v1397
        %v1510 = vpack.c.b16 %v1400, %v1398
        %v1511 = vpack.c.b16 %v1403, %v1401
        %v1512 = vpack.c.b16 %v1404, %v1402
        %v1513 = vpack.c.b16 %v1407, %v1405
        %v1514 = vpack.c.b16 %v1408, %v1406
        %v1515 = vpack.c.b16 %v1411, %v1409
        %v1516 = vpack.c.b16 %v1412, %v1410
        %v1517 = vpack.c.b16 %v1415, %v1413
        %v1518 = vpack.c.b16 %v1416, %v1414
        %v1519 = vpack.c.b16 %v1419, %v1417
        %v1520 = vpack.c.b16 %v1420, %v1418
        %v1521 = vpack.c.b16 %v1423, %v1421
        %v1522 = vpack.c.b16 %v1424, %v1422
        %v1523 = vpack.c.b16 %v1427, %v1425
        %v1524 = vpack.c.b16 %v1428, %v1426
        %1621 = vmatprep.subr.bf16.mxu0 %v1444
        %1622 = vmatpush1.bf16.msra.mxu0 %v1443
        %1623 = vmatprep.subr.bf16.mxu0 %v1442
        %1624 = vmatpush1.bf16.msra.mxu0 %v1441
        %1625 = vmatprep.subr.bf16.mxu0 %v1440
        %1626 = vmatpush1.bf16.msra.mxu0 %v1439
        %1627 = vmatprep.subr.bf16.mxu0 %v1438
        %1628 = vmatpush1.bf16.msra.mxu0 %v1437
        %1629 = vmatprep.subr.bf16.mxu0 %v1436
        %1630 = vmatpush1.bf16.msra.mxu0 %v1435
        %1631 = vmatprep.subr.bf16.mxu0 %v1434
        %1632 = vmatpush1.bf16.msra.mxu0 %v1433
        %1633 = vmatprep.subr.bf16.mxu0 %v1432
        %1634 = vmatpush1.bf16.msra.mxu0 %v1431
        %1635 = vmatprep.subr.bf16.mxu0 %v1430
        %1636 = vmatpush1.bf16.msra.mxu0 %v1429
        %1637 = vmatprep.subr.bf16.mxu0 %v1460
        %1638 = vmatpush2.bf16.msra.mxu0 %v1459
        %1639 = vmatprep.subr.bf16.mxu0 %v1458
        %1640 = vmatpush2.bf16.msra.mxu0 %v1457
        %1641 = vmatprep.subr.bf16.mxu0 %v1456
        %1642 = vmatpush2.bf16.msra.mxu0 %v1455
        %1643 = vmatprep.subr.bf16.mxu0 %v1454
        %1644 = vmatpush2.bf16.msra.mxu0 %v1453
        %1645 = vmatprep.subr.bf16.mxu0 %v1452
        %1646 = vmatpush2.bf16.msra.mxu0 %v1451
        %1647 = vmatprep.subr.bf16.mxu0 %v1450
        %1648 = vmatpush2.bf16.msra.mxu0 %v1449
        %1649 = vmatprep.subr.bf16.mxu0 %v1448
        %1650 = vmatpush2.bf16.msra.mxu0 %v1447
        %1651 = vmatprep.subr.bf16.mxu0 %v1446
        %1652 = vmatpush2.bf16.msra.mxu0 %v1445
        %1653 = vmatprep.mubr.bf16.mxu0 %v1028
        %1654 = vmatmul.mubr.bf16.gmra.mxu0 %v1027
        %v1655 = vpop.f32.mrf.mxu0
        %v1656 = vadd.f32 %v1134, %v1655
        %v1657 = vpop.f32.mrf.mxu0
        %v1658 = vadd.f32 %v1138, %v1657
        %v1659 = vpop.f32.mrf.mxu0
        %v1660 = vpop.f32.mrf.mxu0
        %1661 = vdwg.mxu0
        %1662 = vmatprep.subr.bf16.mxu0 %v1476
        %1663 = vmatpush1.bf16.msra.mxu0 %v1475
        %1664 = vmatprep.subr.bf16.mxu0 %v1474
        %1665 = vmatpush1.bf16.msra.mxu0 %v1473
        %1666 = vmatprep.subr.bf16.mxu0 %v1472
        %1667 = vmatpush1.bf16.msra.mxu0 %v1471
        %1668 = vmatprep.subr.bf16.mxu0 %v1470
        %1669 = vmatpush1.bf16.msra.mxu0 %v1469
        %1670 = vmatprep.subr.bf16.mxu0 %v1468
        %1671 = vmatpush1.bf16.msra.mxu0 %v1467
        %1672 = vmatprep.subr.bf16.mxu0 %v1466
        %1673 = vmatpush1.bf16.msra.mxu0 %v1465
        %1674 = vmatprep.subr.bf16.mxu0 %v1464
        %1675 = vmatpush1.bf16.msra.mxu0 %v1463
        %1676 = vmatprep.subr.bf16.mxu0 %v1462
        %1677 = vmatpush1.bf16.msra.mxu0 %v1461
        %1678 = vmatprep.subr.bf16.mxu0 %v1492
        %1679 = vmatpush2.bf16.msra.mxu0 %v1491
        %1680 = vmatprep.subr.bf16.mxu0 %v1490
        %1681 = vmatpush2.bf16.msra.mxu0 %v1489
        %1682 = vmatprep.subr.bf16.mxu0 %v1488
        %1683 = vmatpush2.bf16.msra.mxu0 %v1487
        %1684 = vmatprep.subr.bf16.mxu0 %v1486
        %1685 = vmatpush2.bf16.msra.mxu0 %v1485
        %1686 = vmatprep.subr.bf16.mxu0 %v1484
        %1687 = vmatpush2.bf16.msra.mxu0 %v1483
        %1688 = vmatprep.subr.bf16.mxu0 %v1482
        %1689 = vmatpush2.bf16.msra.mxu0 %v1481
        %1690 = vmatprep.subr.bf16.mxu0 %v1480
        %1691 = vmatpush2.bf16.msra.mxu0 %v1479
        %1692 = vmatprep.subr.bf16.mxu0 %v1478
        %1693 = vmatpush2.bf16.msra.mxu0 %v1477
        %1694 = vmatprep.mubr.bf16.mxu0 %v1030
        %1695 = vmatmul.mubr.bf16.gmra.mxu0 %v1029
        %v1696 = vpop.f32.mrf.mxu0
        %v1697 = vadd.f32 %v1656, %v1696
        %v1698 = vpop.f32.mrf.mxu0
        %v1699 = vadd.f32 %v1658, %v1698
        %v1700 = vpop.f32.mrf.mxu0
        %v1701 = vpop.f32.mrf.mxu0
        %1702 = vdwg.mxu0
        %1703 = vmatprep.subr.bf16.mxu0 %v1508
        %1704 = vmatpush1.bf16.msra.mxu0 %v1507
        %1705 = vmatprep.subr.bf16.mxu0 %v1506
        %1706 = vmatpush1.bf16.msra.mxu0 %v1505
        %1707 = vmatprep.subr.bf16.mxu0 %v1504
        %1708 = vmatpush1.bf16.msra.mxu0 %v1503
        %1709 = vmatprep.subr.bf16.mxu0 %v1502
        %1710 = vmatpush1.bf16.msra.mxu0 %v1501
        %1711 = vmatprep.subr.bf16.mxu0 %v1500
        %1712 = vmatpush1.bf16.msra.mxu0 %v1499
        %1713 = vmatprep.subr.bf16.mxu0 %v1498
        %1714 = vmatpush1.bf16.msra.mxu0 %v1497
        %1715 = vmatprep.subr.bf16.mxu0 %v1496
        %1716 = vmatpush1.bf16.msra.mxu0 %v1495
        %1717 = vmatprep.subr.bf16.mxu0 %v1494
        %1718 = vmatpush1.bf16.msra.mxu0 %v1493
        %1719 = vmatprep.subr.bf16.mxu0 %v1524
        %1720 = vmatpush2.bf16.msra.mxu0 %v1523
        %1721 = vmatprep.subr.bf16.mxu0 %v1522
        %1722 = vmatpush2.bf16.msra.mxu0 %v1521
        %1723 = vmatprep.subr.bf16.mxu0 %v1520
        %1724 = vmatpush2.bf16.msra.mxu0 %v1519
        %1725 = vmatprep.subr.bf16.mxu0 %v1518
        %1726 = vmatpush2.bf16.msra.mxu0 %v1517
        %1727 = vmatprep.subr.bf16.mxu0 %v1516
        %1728 = vmatpush2.bf16.msra.mxu0 %v1515
        %1729 = vmatprep.subr.bf16.mxu0 %v1514
        %1730 = vmatpush2.bf16.msra.mxu0 %v1513
        %1731 = vmatprep.subr.bf16.mxu0 %v1512
        %1732 = vmatpush2.bf16.msra.mxu0 %v1511
        %1733 = vmatprep.subr.bf16.mxu0 %v1510
        %1734 = vmatpush2.bf16.msra.mxu0 %v1509
        %1735 = vmatprep.mubr.bf16.mxu0 %v1032
        %1736 = vmatmul.mubr.bf16.gmra.mxu0 %v1031
        %v1737 = vpop.f32.mrf.mxu0
        %v1738 = vadd.f32 %v1697, %v1737
        %v1739 = vpop.f32.mrf.mxu0
        %v1740 = vadd.f32 %v1699, %v1739
        %v1741 = vpop.f32.mrf.mxu0
        %v1742 = vpop.f32.mrf.mxu0
        %1743 = vdwg.mxu0
        %vm1744 = vcmp.ge.f32.partialorder %v1738, 0.0
        %vm1745 = vcmp.ge.f32.partialorder %v1740, 0.0
        %v1746 = vmul.f32 %v1738, 0.2
        %v1747 = vmul.f32 %v1740, 0.2
        %v1748 = vsel %vm1744, %v1738, %v1746
        %v1749 = vsel %vm1745, %v1740, %v1747
        %v1750 = vpack.c.bf16 %v1748, %v1748
        %v1751 = vpack.c.bf16 %v1749, %v1749
        %v1754 = vrot.slane %v1748, 7
        %v1755 = vrot.slane %v1749, 7
        %v1758 = vsel %vm436, 0.0, %v1754
        %v1759 = vsel %vm436, 0.0, %v1755
        %v1760 = vpack.c.bf16 %v1758, %v1758
        %v1761 = vpack.c.bf16 %v1759, %v1759
        %v1762 = vld [vmem:[%s5] sm:$0xff]
        %v1763 = vld [vmem:[%s5 + $0x8] sm:$0xff]
        %v1764 = vld [vmem:[%s5 + $0x10] sm:$0xff]
        %v1765 = vld [vmem:[%s5 + $0x18] sm:$0xff]
        %v1766 = vld [vmem:[%s5 + $0x20] sm:$0xff]
        %v1767 = vld [vmem:[%s5 + $0x28] sm:$0xff]
        %v1768 = vld [vmem:[%s5 + $0x30] sm:$0xff]
        %v1769 = vld [vmem:[%s5 + $0x38] sm:$0xff]
        %v1770 = vld [vmem:[%s5 + $0x40] sm:$0xff]
        %v1771 = vld [vmem:[%s5 + $0x48] sm:$0xff]
        %v1772 = vld [vmem:[%s5 + $0x50] sm:$0xff]
        %v1773 = vld [vmem:[%s5 + $0x58] sm:$0xff]
        %v1774 = vld [vmem:[%s5 + $0x60] sm:$0xff]
        %v1775 = vld [vmem:[%s5 + $0x68] sm:$0xff]
        %v1776 = vld [vmem:[%s5 + $0x70] sm:$0xff]
        %v1777 = vld [vmem:[%s5 + $0x78] sm:$0xff]
        %v1778 = vld [vmem:[%s5 + $0x80] sm:$0xff]
        %v1779 = vld [vmem:[%s5 + $0x88] sm:$0xff]
        %v1780 = vld [vmem:[%s5 + $0x90] sm:$0xff]
        %v1781 = vld [vmem:[%s5 + $0x98] sm:$0xff]
        %v1782 = vld [vmem:[%s5 + $0xa0] sm:$0xff]
        %v1783 = vld [vmem:[%s5 + $0xa8] sm:$0xff]
        %v1784 = vld [vmem:[%s5 + $0xb0] sm:$0xff]
        %v1785 = vld [vmem:[%s5 + $0xb8] sm:$0xff]
        %v1786 = vld [vmem:[%s5 + $0xc0] sm:$0xff]
        %v1787 = vld [vmem:[%s5 + $0xc8] sm:$0xff]
        %v1788 = vld [vmem:[%s5 + $0xd0] sm:$0xff]
        %v1789 = vld [vmem:[%s5 + $0xd8] sm:$0xff]
        %v1790 = vld [vmem:[%s5 + $0xe0] sm:$0xff]
        %v1791 = vld [vmem:[%s5 + $0xe8] sm:$0xff]
        %v1792 = vld [vmem:[%s5 + $0xf0] sm:$0xff]
        %v1793 = vld [vmem:[%s5 + $0xf8] sm:$0xff]
        %v1794 = vld [vmem:[%s5 + $0x100] sm:$0xff]
        %v1795 = vld [vmem:[%s5 + $0x108] sm:$0xff]
        %v1796 = vld [vmem:[%s5 + $0x110] sm:$0xff]
        %v1797 = vld [vmem:[%s5 + $0x118] sm:$0xff]
        %v1798 = vld [vmem:[%s5 + $0x120] sm:$0xff]
        %v1799 = vld [vmem:[%s5 + $0x128] sm:$0xff]
        %v1800 = vld [vmem:[%s5 + $0x130] sm:$0xff]
        %v1801 = vld [vmem:[%s5 + $0x138] sm:$0xff]
        %v1802 = vld [vmem:[%s5 + $0x140] sm:$0xff]
        %v1803 = vld [vmem:[%s5 + $0x148] sm:$0xff]
        %v1804 = vld [vmem:[%s5 + $0x150] sm:$0xff]
        %v1805 = vld [vmem:[%s5 + $0x158] sm:$0xff]
        %v1806 = vld [vmem:[%s5 + $0x160] sm:$0xff]
        %v1807 = vld [vmem:[%s5 + $0x168] sm:$0xff]
        %v1808 = vld [vmem:[%s5 + $0x170] sm:$0xff]
        %v1809 = vld [vmem:[%s5 + $0x178] sm:$0xff]
        %v1810 = vld [vmem:[%s5 + $0x180] sm:$0xff]
        %v1811 = vld [vmem:[%s5 + $0x188] sm:$0xff]
        %v1812 = vld [vmem:[%s5 + $0x190] sm:$0xff]
        %v1813 = vld [vmem:[%s5 + $0x198] sm:$0xff]
        %v1814 = vld [vmem:[%s5 + $0x1a0] sm:$0xff]
        %v1815 = vld [vmem:[%s5 + $0x1a8] sm:$0xff]
        %v1816 = vld [vmem:[%s5 + $0x1b0] sm:$0xff]
        %v1817 = vld [vmem:[%s5 + $0x1b8] sm:$0xff]
        %v1818 = vld [vmem:[%s5 + $0x1c0] sm:$0xff]
        %v1819 = vld [vmem:[%s5 + $0x1c8] sm:$0xff]
        %v1820 = vld [vmem:[%s5 + $0x1d0] sm:$0xff]
        %v1821 = vld [vmem:[%s5 + $0x1d8] sm:$0xff]
        %v1822 = vld [vmem:[%s5 + $0x1e0] sm:$0xff]
        %v1823 = vld [vmem:[%s5 + $0x1e8] sm:$0xff]
        %v1824 = vld [vmem:[%s5 + $0x1f0] sm:$0xff]
        %v1825 = vld [vmem:[%s5 + $0x1f8] sm:$0xff]
        %v1826 = vld [vmem:[%s7] sm:$0x3]
        %v1828 = vlaneseq
        %v1829 = vshrl.u32 %v1828, 7
        %v1830 = vsub.s32 0, %v1829
        %v1831 = vrot.slane %v1826, %v1830
        %v1832 = vlaneseq
        %v1833 = vshrl.u32 %v1832, 7
        %v1834 = vsub.s32 1, %v1833
        %v1835 = vrot.slane %v1826, %v1834
        %v1902 = vunpack.c.l.b16 %v1762
        %v1903 = vunpack.c.h.b16 %v1762
        %v1904 = vunpack.c.l.b16 %v1763
        %v1905 = vunpack.c.h.b16 %v1763
        %v1906 = vunpack.c.l.b16 %v1764
        %v1907 = vunpack.c.h.b16 %v1764
        %v1908 = vunpack.c.l.b16 %v1765
        %v1909 = vunpack.c.h.b16 %v1765
        %v1910 = vunpack.c.l.b16 %v1766
        %v1911 = vunpack.c.h.b16 %v1766
        %v1912 = vunpack.c.l.b16 %v1767
        %v1913 = vunpack.c.h.b16 %v1767
        %v1914 = vunpack.c.l.b16 %v1768
        %v1915 = vunpack.c.h.b16 %v1768
        %v1916 = vunpack.c.l.b16 %v1769
        %v1917 = vunpack.c.h.b16 %v1769
        %v1918 = vunpack.c.l.b16 %v1770
        %v1919 = vunpack.c.h.b16 %v1770
        %v1920 = vunpack.c.l.b16 %v1771
        %v1921 = vunpack.c.h.b16 %v1771
        %v1922 = vunpack.c.l.b16 %v1772
        %v1923 = vunpack.c.h.b16 %v1772
        %v1924 = vunpack.c.l.b16 %v1773
        %v1925 = vunpack.c.h.b16 %v1773
        %v1926 = vunpack.c.l.b16 %v1774
        %v1927 = vunpack.c.h.b16 %v1774
        %v1928 = vunpack.c.l.b16 %v1775
        %v1929 = vunpack.c.h.b16 %v1775
        %v1930 = vunpack.c.l.b16 %v1776
        %v1931 = vunpack.c.h.b16 %v1776
        %v1932 = vunpack.c.l.b16 %v1777
        %v1933 = vunpack.c.h.b16 %v1777
        %v1934 = vunpack.c.l.b16 %v1778
        %v1935 = vunpack.c.h.b16 %v1778
        %v1936 = vunpack.c.l.b16 %v1779
        %v1937 = vunpack.c.h.b16 %v1779
        %v1938 = vunpack.c.l.b16 %v1780
        %v1939 = vunpack.c.h.b16 %v1780
        %v1940 = vunpack.c.l.b16 %v1781
        %v1941 = vunpack.c.h.b16 %v1781
        %v1942 = vunpack.c.l.b16 %v1782
        %v1943 = vunpack.c.h.b16 %v1782
        %v1944 = vunpack.c.l.b16 %v1783
        %v1945 = vunpack.c.h.b16 %v1783
        %v1946 = vunpack.c.l.b16 %v1784
        %v1947 = vunpack.c.h.b16 %v1784
        %v1948 = vunpack.c.l.b16 %v1785
        %v1949 = vunpack.c.h.b16 %v1785
        %v1950 = vunpack.c.l.b16 %v1786
        %v1951 = vunpack.c.h.b16 %v1786
        %v1952 = vunpack.c.l.b16 %v1787
        %v1953 = vunpack.c.h.b16 %v1787
        %v1954 = vunpack.c.l.b16 %v1788
        %v1955 = vunpack.c.h.b16 %v1788
        %v1956 = vunpack.c.l.b16 %v1789
        %v1957 = vunpack.c.h.b16 %v1789
        %v1958 = vunpack.c.l.b16 %v1790
        %v1959 = vunpack.c.h.b16 %v1790
        %v1960 = vunpack.c.l.b16 %v1791
        %v1961 = vunpack.c.h.b16 %v1791
        %v1962 = vunpack.c.l.b16 %v1792
        %v1963 = vunpack.c.h.b16 %v1792
        %v1964 = vunpack.c.l.b16 %v1793
        %v1965 = vunpack.c.h.b16 %v1793
        %v1966 = vunpack.c.l.b16 %v1794
        %v1967 = vunpack.c.h.b16 %v1794
        %v1968 = vunpack.c.l.b16 %v1795
        %v1969 = vunpack.c.h.b16 %v1795
        %v1970 = vunpack.c.l.b16 %v1796
        %v1971 = vunpack.c.h.b16 %v1796
        %v1972 = vunpack.c.l.b16 %v1797
        %v1973 = vunpack.c.h.b16 %v1797
        %v1974 = vunpack.c.l.b16 %v1798
        %v1975 = vunpack.c.h.b16 %v1798
        %v1976 = vunpack.c.l.b16 %v1799
        %v1977 = vunpack.c.h.b16 %v1799
        %v1978 = vunpack.c.l.b16 %v1800
        %v1979 = vunpack.c.h.b16 %v1800
        %v1980 = vunpack.c.l.b16 %v1801
        %v1981 = vunpack.c.h.b16 %v1801
        %v1982 = vunpack.c.l.b16 %v1802
        %v1983 = vunpack.c.h.b16 %v1802
        %v1984 = vunpack.c.l.b16 %v1803
        %v1985 = vunpack.c.h.b16 %v1803
        %v1986 = vunpack.c.l.b16 %v1804
        %v1987 = vunpack.c.h.b16 %v1804
        %v1988 = vunpack.c.l.b16 %v1805
        %v1989 = vunpack.c.h.b16 %v1805
        %v1990 = vunpack.c.l.b16 %v1806
        %v1991 = vunpack.c.h.b16 %v1806
        %v1992 = vunpack.c.l.b16 %v1807
        %v1993 = vunpack.c.h.b16 %v1807
        %v1994 = vunpack.c.l.b16 %v1808
        %v1995 = vunpack.c.h.b16 %v1808
        %v1996 = vunpack.c.l.b16 %v1809
        %v1997 = vunpack.c.h.b16 %v1809
        %v1998 = vunpack.c.l.b16 %v1810
        %v1999 = vunpack.c.h.b16 %v1810
        %v2000 = vunpack.c.l.b16 %v1811
        %v2001 = vunpack.c.h.b16 %v1811
        %v2002 = vunpack.c.l.b16 %v1812
        %v2003 = vunpack.c.h.b16 %v1812
        %v2004 = vunpack.c.l.b16 %v1813
        %v2005 = vunpack.c.h.b16 %v1813
        %v2006 = vunpack.c.l.b16 %v1814
        %v2007 = vunpack.c.h.b16 %v1814
        %v2008 = vunpack.c.l.b16 %v1815
        %v2009 = vunpack.c.h.b16 %v1815
        %v2010 = vunpack.c.l.b16 %v1816
        %v2011 = vunpack.c.h.b16 %v1816
        %v2012 = vunpack.c.l.b16 %v1817
        %v2013 = vunpack.c.h.b16 %v1817
        %v2014 = vunpack.c.l.b16 %v1818
        %v2015 = vunpack.c.h.b16 %v1818
        %v2016 = vunpack.c.l.b16 %v1819
        %v2017 = vunpack.c.h.b16 %v1819
        %v2018 = vunpack.c.l.b16 %v1820
        %v2019 = vunpack.c.h.b16 %v1820
        %v2020 = vunpack.c.l.b16 %v1821
        %v2021 = vunpack.c.h.b16 %v1821
        %v2022 = vunpack.c.l.b16 %v1822
        %v2023 = vunpack.c.h.b16 %v1822
        %v2024 = vunpack.c.l.b16 %v1823
        %v2025 = vunpack.c.h.b16 %v1823
        %v2026 = vunpack.c.l.b16 %v1824
        %v2027 = vunpack.c.h.b16 %v1824
        %v2028 = vunpack.c.l.b16 %v1825
        %v2029 = vunpack.c.h.b16 %v1825
        %v2030 = vpack.c.b16 %v1904, %v1902
        %v2031 = vpack.c.b16 %v1905, %v1903
        %v2032 = vpack.c.b16 %v1908, %v1906
        %v2033 = vpack.c.b16 %v1909, %v1907
        %v2034 = vpack.c.b16 %v1912, %v1910
        %v2035 = vpack.c.b16 %v1913, %v1911
        %v2036 = vpack.c.b16 %v1916, %v1914
        %v2037 = vpack.c.b16 %v1917, %v1915
        %v2038 = vpack.c.b16 %v1920, %v1918
        %v2039 = vpack.c.b16 %v1921, %v1919
        %v2040 = vpack.c.b16 %v1924, %v1922
        %v2041 = vpack.c.b16 %v1925, %v1923
        %v2042 = vpack.c.b16 %v1928, %v1926
        %v2043 = vpack.c.b16 %v1929, %v1927
        %v2044 = vpack.c.b16 %v1932, %v1930
        %v2045 = vpack.c.b16 %v1933, %v1931
        %v2046 = vpack.c.b16 %v1936, %v1934
        %v2047 = vpack.c.b16 %v1937, %v1935
        %v2048 = vpack.c.b16 %v1940, %v1938
        %v2049 = vpack.c.b16 %v1941, %v1939
        %v2050 = vpack.c.b16 %v1944, %v1942
        %v2051 = vpack.c.b16 %v1945, %v1943
        %v2052 = vpack.c.b16 %v1948, %v1946
        %v2053 = vpack.c.b16 %v1949, %v1947
        %v2054 = vpack.c.b16 %v1952, %v1950
        %v2055 = vpack.c.b16 %v1953, %v1951
        %v2056 = vpack.c.b16 %v1956, %v1954
        %v2057 = vpack.c.b16 %v1957, %v1955
        %v2058 = vpack.c.b16 %v1960, %v1958
        %v2059 = vpack.c.b16 %v1961, %v1959
        %v2060 = vpack.c.b16 %v1964, %v1962
        %v2061 = vpack.c.b16 %v1965, %v1963
        %v2062 = vpack.c.b16 %v1968, %v1966
        %v2063 = vpack.c.b16 %v1969, %v1967
        %v2064 = vpack.c.b16 %v1972, %v1970
        %v2065 = vpack.c.b16 %v1973, %v1971
        %v2066 = vpack.c.b16 %v1976, %v1974
        %v2067 = vpack.c.b16 %v1977, %v1975
        %v2068 = vpack.c.b16 %v1980, %v1978
        %v2069 = vpack.c.b16 %v1981, %v1979
        %v2070 = vpack.c.b16 %v1984, %v1982
        %v2071 = vpack.c.b16 %v1985, %v1983
        %v2072 = vpack.c.b16 %v1988, %v1986
        %v2073 = vpack.c.b16 %v1989, %v1987
        %v2074 = vpack.c.b16 %v1992, %v1990
        %v2075 = vpack.c.b16 %v1993, %v1991
        %v2076 = vpack.c.b16 %v1996, %v1994
        %v2077 = vpack.c.b16 %v1997, %v1995
        %v2078 = vpack.c.b16 %v2000, %v1998
        %v2079 = vpack.c.b16 %v2001, %v1999
        %v2080 = vpack.c.b16 %v2004, %v2002
        %v2081 = vpack.c.b16 %v2005, %v2003
        %v2082 = vpack.c.b16 %v2008, %v2006
        %v2083 = vpack.c.b16 %v2009, %v2007
        %v2084 = vpack.c.b16 %v2012, %v2010
        %v2085 = vpack.c.b16 %v2013, %v2011
        %v2086 = vpack.c.b16 %v2016, %v2014
        %v2087 = vpack.c.b16 %v2017, %v2015
        %v2088 = vpack.c.b16 %v2020, %v2018
        %v2089 = vpack.c.b16 %v2021, %v2019
        %v2090 = vpack.c.b16 %v2024, %v2022
        %v2091 = vpack.c.b16 %v2025, %v2023
        %v2092 = vpack.c.b16 %v2028, %v2026
        %v2093 = vpack.c.b16 %v2029, %v2027
        %2158 = vmatprep.subr.bf16.mxu0 %v2045
        %2159 = vmatpush1.bf16.msra.mxu0 %v2044
        %2160 = vmatprep.subr.bf16.mxu0 %v2043
        %2161 = vmatpush1.bf16.msra.mxu0 %v2042
        %2162 = vmatprep.subr.bf16.mxu0 %v2041
        %2163 = vmatpush1.bf16.msra.mxu0 %v2040
        %2164 = vmatprep.subr.bf16.mxu0 %v2039
        %2165 = vmatpush1.bf16.msra.mxu0 %v2038
        %2166 = vmatprep.subr.bf16.mxu0 %v2037
        %2167 = vmatpush1.bf16.msra.mxu0 %v2036
        %2168 = vmatprep.subr.bf16.mxu0 %v2035
        %2169 = vmatpush1.bf16.msra.mxu0 %v2034
        %2170 = vmatprep.subr.bf16.mxu0 %v2033
        %2171 = vmatpush1.bf16.msra.mxu0 %v2032
        %2172 = vmatprep.subr.bf16.mxu0 %v2031
        %2173 = vmatpush1.bf16.msra.mxu0 %v2030
        %2174 = vmatprep.subr.bf16.mxu0 %v2061
        %2175 = vmatpush2.bf16.msra.mxu0 %v2060
        %2176 = vmatprep.subr.bf16.mxu0 %v2059
        %2177 = vmatpush2.bf16.msra.mxu0 %v2058
        %2178 = vmatprep.subr.bf16.mxu0 %v2057
        %2179 = vmatpush2.bf16.msra.mxu0 %v2056
        %2180 = vmatprep.subr.bf16.mxu0 %v2055
        %2181 = vmatpush2.bf16.msra.mxu0 %v2054
        %2182 = vmatprep.subr.bf16.mxu0 %v2053
        %2183 = vmatpush2.bf16.msra.mxu0 %v2052
        %2184 = vmatprep.subr.bf16.mxu0 %v2051
        %2185 = vmatpush2.bf16.msra.mxu0 %v2050
        %2186 = vmatprep.subr.bf16.mxu0 %v2049
        %2187 = vmatpush2.bf16.msra.mxu0 %v2048
        %2188 = vmatprep.subr.bf16.mxu0 %v2047
        %2189 = vmatpush2.bf16.msra.mxu0 %v2046
        %2190 = vmatprep.mubr.bf16.mxu0 %v1761
        %2191 = vmatmul.mubr.bf16.gmra.mxu0 %v1760
        %v2192 = vpop.f32.mrf.mxu0
        %v2193 = vadd.f32 %v1831, %v2192
        %v2194 = vpop.f32.mrf.mxu0
        %v2195 = vadd.f32 %v1835, %v2194
        %v2196 = vpop.f32.mrf.mxu0
        %v2197 = vpop.f32.mrf.mxu0
        %2198 = vdwg.mxu0
        %2199 = vmatprep.subr.bf16.mxu0 %v2077
        %2200 = vmatpush1.bf16.msra.mxu0 %v2076
        %2201 = vmatprep.subr.bf16.mxu0 %v2075
        %2202 = vmatpush1.bf16.msra.mxu0 %v2074
        %2203 = vmatprep.subr.bf16.mxu0 %v2073
        %2204 = vmatpush1.bf16.msra.mxu0 %v2072
        %2205 = vmatprep.subr.bf16.mxu0 %v2071
        %2206 = vmatpush1.bf16.msra.mxu0 %v2070
        %2207 = vmatprep.subr.bf16.mxu0 %v2069
        %2208 = vmatpush1.bf16.msra.mxu0 %v2068
        %2209 = vmatprep.subr.bf16.mxu0 %v2067
        %2210 = vmatpush1.bf16.msra.mxu0 %v2066
        %2211 = vmatprep.subr.bf16.mxu0 %v2065
        %2212 = vmatpush1.bf16.msra.mxu0 %v2064
        %2213 = vmatprep.subr.bf16.mxu0 %v2063
        %2214 = vmatpush1.bf16.msra.mxu0 %v2062
        %2215 = vmatprep.subr.bf16.mxu0 %v2093
        %2216 = vmatpush2.bf16.msra.mxu0 %v2092
        %2217 = vmatprep.subr.bf16.mxu0 %v2091
        %2218 = vmatpush2.bf16.msra.mxu0 %v2090
        %2219 = vmatprep.subr.bf16.mxu0 %v2089
        %2220 = vmatpush2.bf16.msra.mxu0 %v2088
        %2221 = vmatprep.subr.bf16.mxu0 %v2087
        %2222 = vmatpush2.bf16.msra.mxu0 %v2086
        %2223 = vmatprep.subr.bf16.mxu0 %v2085
        %2224 = vmatpush2.bf16.msra.mxu0 %v2084
        %2225 = vmatprep.subr.bf16.mxu0 %v2083
        %2226 = vmatpush2.bf16.msra.mxu0 %v2082
        %2227 = vmatprep.subr.bf16.mxu0 %v2081
        %2228 = vmatpush2.bf16.msra.mxu0 %v2080
        %2229 = vmatprep.subr.bf16.mxu0 %v2079
        %2230 = vmatpush2.bf16.msra.mxu0 %v2078
        %2231 = vmatprep.mubr.bf16.mxu0 %v1751
        %2232 = vmatmul.mubr.bf16.gmra.mxu0 %v1750
        %v2233 = vpop.f32.mrf.mxu0
        %v2234 = vadd.f32 %v2193, %v2233
        %v2235 = vpop.f32.mrf.mxu0
        %v2236 = vadd.f32 %v2195, %v2235
        %v2237 = vpop.f32.mrf.mxu0
        %v2238 = vpop.f32.mrf.mxu0
        %2239 = vdwg.mxu0
        %vm2240 = vcmp.ge.f32.partialorder %v2234, 0.0
        %vm2241 = vcmp.ge.f32.partialorder %v2236, 0.0
        %v2242 = vmul.f32 %v2234, 0.2
        %v2243 = vmul.f32 %v2236, 0.2
        %v2244 = vsel %vm2240, %v2234, %v2242
        %v2245 = vsel %vm2241, %v2236, %v2243
        %v2246 = vrot.slane %v1748, 1
        %v2247 = vrot.slane %v1749, 1
        %v2250 = vsel %vm436, %v2246, 0.0
        %v2251 = vsel %vm436, %v2247, 0.0
        %v2252 = vpack.c.bf16 %v2250, %v2250
        %v2253 = vpack.c.bf16 %v2251, %v2251
        %v2254 = vld [vmem:[#allocation5] sm:$0xff]
        %v2255 = vld [vmem:[#allocation5 + $0x8] sm:$0xff]
        %v2256 = vld [vmem:[#allocation5 + $0x10] sm:$0xff]
        %v2257 = vld [vmem:[#allocation5 + $0x18] sm:$0xff]
        %v2258 = vld [vmem:[#allocation5 + $0x20] sm:$0xff]
        %v2259 = vld [vmem:[#allocation5 + $0x28] sm:$0xff]
        %v2260 = vld [vmem:[#allocation5 + $0x30] sm:$0xff]
        %v2261 = vld [vmem:[#allocation5 + $0x38] sm:$0xff]
        %v2262 = vld [vmem:[#allocation5 + $0x40] sm:$0xff]
        %v2263 = vld [vmem:[#allocation5 + $0x48] sm:$0xff]
        %v2264 = vld [vmem:[#allocation5 + $0x50] sm:$0xff]
        %v2265 = vld [vmem:[#allocation5 + $0x58] sm:$0xff]
        %v2266 = vld [vmem:[#allocation5 + $0x60] sm:$0xff]
        %v2267 = vld [vmem:[#allocation5 + $0x68] sm:$0xff]
        %v2268 = vld [vmem:[#allocation5 + $0x70] sm:$0xff]
        %v2269 = vld [vmem:[#allocation5 + $0x78] sm:$0xff]
        %v2270 = vld [vmem:[#allocation5 + $0x80] sm:$0xff]
        %v2271 = vld [vmem:[#allocation5 + $0x88] sm:$0xff]
        %v2272 = vld [vmem:[#allocation5 + $0x90] sm:$0xff]
        %v2273 = vld [vmem:[#allocation5 + $0x98] sm:$0xff]
        %v2274 = vld [vmem:[#allocation5 + $0xa0] sm:$0xff]
        %v2275 = vld [vmem:[#allocation5 + $0xa8] sm:$0xff]
        %v2276 = vld [vmem:[#allocation5 + $0xb0] sm:$0xff]
        %v2277 = vld [vmem:[#allocation5 + $0xb8] sm:$0xff]
        %v2278 = vld [vmem:[#allocation5 + $0xc0] sm:$0xff]
        %v2279 = vld [vmem:[#allocation5 + $0xc8] sm:$0xff]
        %v2280 = vld [vmem:[#allocation5 + $0xd0] sm:$0xff]
        %v2281 = vld [vmem:[#allocation5 + $0xd8] sm:$0xff]
        %v2282 = vld [vmem:[#allocation5 + $0xe0] sm:$0xff]
        %v2283 = vld [vmem:[#allocation5 + $0xe8] sm:$0xff]
        %v2284 = vld [vmem:[#allocation5 + $0xf0] sm:$0xff]
        %v2285 = vld [vmem:[#allocation5 + $0xf8] sm:$0xff]
        %v2286 = vld [vmem:[#allocation5 + $0x100] sm:$0xff]
        %v2287 = vld [vmem:[#allocation5 + $0x108] sm:$0xff]
        %v2288 = vld [vmem:[#allocation5 + $0x110] sm:$0xff]
        %v2289 = vld [vmem:[#allocation5 + $0x118] sm:$0xff]
        %v2290 = vld [vmem:[#allocation5 + $0x120] sm:$0xff]
        %v2291 = vld [vmem:[#allocation5 + $0x128] sm:$0xff]
        %v2292 = vld [vmem:[#allocation5 + $0x130] sm:$0xff]
        %v2293 = vld [vmem:[#allocation5 + $0x138] sm:$0xff]
        %v2294 = vld [vmem:[#allocation5 + $0x140] sm:$0xff]
        %v2295 = vld [vmem:[#allocation5 + $0x148] sm:$0xff]
        %v2296 = vld [vmem:[#allocation5 + $0x150] sm:$0xff]
        %v2297 = vld [vmem:[#allocation5 + $0x158] sm:$0xff]
        %v2298 = vld [vmem:[#allocation5 + $0x160] sm:$0xff]
        %v2299 = vld [vmem:[#allocation5 + $0x168] sm:$0xff]
        %v2300 = vld [vmem:[#allocation5 + $0x170] sm:$0xff]
        %v2301 = vld [vmem:[#allocation5 + $0x178] sm:$0xff]
        %v2302 = vld [vmem:[#allocation5 + $0x180] sm:$0xff]
        %v2303 = vld [vmem:[#allocation5 + $0x188] sm:$0xff]
        %v2304 = vld [vmem:[#allocation5 + $0x190] sm:$0xff]
        %v2305 = vld [vmem:[#allocation5 + $0x198] sm:$0xff]
        %v2306 = vld [vmem:[#allocation5 + $0x1a0] sm:$0xff]
        %v2307 = vld [vmem:[#allocation5 + $0x1a8] sm:$0xff]
        %v2308 = vld [vmem:[#allocation5 + $0x1b0] sm:$0xff]
        %v2309 = vld [vmem:[#allocation5 + $0x1b8] sm:$0xff]
        %v2310 = vld [vmem:[#allocation5 + $0x1c0] sm:$0xff]
        %v2311 = vld [vmem:[#allocation5 + $0x1c8] sm:$0xff]
        %v2312 = vld [vmem:[#allocation5 + $0x1d0] sm:$0xff]
        %v2313 = vld [vmem:[#allocation5 + $0x1d8] sm:$0xff]
        %v2314 = vld [vmem:[#allocation5 + $0x1e0] sm:$0xff]
        %v2315 = vld [vmem:[#allocation5 + $0x1e8] sm:$0xff]
        %v2316 = vld [vmem:[#allocation5 + $0x1f0] sm:$0xff]
        %v2317 = vld [vmem:[#allocation5 + $0x1f8] sm:$0xff]
        %v2382 = vunpack.c.l.b16 %v2254
        %v2383 = vunpack.c.h.b16 %v2254
        %v2384 = vunpack.c.l.b16 %v2255
        %v2385 = vunpack.c.h.b16 %v2255
        %v2386 = vunpack.c.l.b16 %v2256
        %v2387 = vunpack.c.h.b16 %v2256
        %v2388 = vunpack.c.l.b16 %v2257
        %v2389 = vunpack.c.h.b16 %v2257
        %v2390 = vunpack.c.l.b16 %v2258
        %v2391 = vunpack.c.h.b16 %v2258
        %v2392 = vunpack.c.l.b16 %v2259
        %v2393 = vunpack.c.h.b16 %v2259
        %v2394 = vunpack.c.l.b16 %v2260
        %v2395 = vunpack.c.h.b16 %v2260
        %v2396 = vunpack.c.l.b16 %v2261
        %v2397 = vunpack.c.h.b16 %v2261
        %v2398 = vunpack.c.l.b16 %v2262
        %v2399 = vunpack.c.h.b16 %v2262
        %v2400 = vunpack.c.l.b16 %v2263
        %v2401 = vunpack.c.h.b16 %v2263
        %v2402 = vunpack.c.l.b16 %v2264
        %v2403 = vunpack.c.h.b16 %v2264
        %v2404 = vunpack.c.l.b16 %v2265
        %v2405 = vunpack.c.h.b16 %v2265
        %v2406 = vunpack.c.l.b16 %v2266
        %v2407 = vunpack.c.h.b16 %v2266
        %v2408 = vunpack.c.l.b16 %v2267
        %v2409 = vunpack.c.h.b16 %v2267
        %v2410 = vunpack.c.l.b16 %v2268
        %v2411 = vunpack.c.h.b16 %v2268
        %v2412 = vunpack.c.l.b16 %v2269
        %v2413 = vunpack.c.h.b16 %v2269
        %v2414 = vunpack.c.l.b16 %v2270
        %v2415 = vunpack.c.h.b16 %v2270
        %v2416 = vunpack.c.l.b16 %v2271
        %v2417 = vunpack.c.h.b16 %v2271
        %v2418 = vunpack.c.l.b16 %v2272
        %v2419 = vunpack.c.h.b16 %v2272
        %v2420 = vunpack.c.l.b16 %v2273
        %v2421 = vunpack.c.h.b16 %v2273
        %v2422 = vunpack.c.l.b16 %v2274
        %v2423 = vunpack.c.h.b16 %v2274
        %v2424 = vunpack.c.l.b16 %v2275
        %v2425 = vunpack.c.h.b16 %v2275
        %v2426 = vunpack.c.l.b16 %v2276
        %v2427 = vunpack.c.h.b16 %v2276
        %v2428 = vunpack.c.l.b16 %v2277
        %v2429 = vunpack.c.h.b16 %v2277
        %v2430 = vunpack.c.l.b16 %v2278
        %v2431 = vunpack.c.h.b16 %v2278
        %v2432 = vunpack.c.l.b16 %v2279
        %v2433 = vunpack.c.h.b16 %v2279
        %v2434 = vunpack.c.l.b16 %v2280
        %v2435 = vunpack.c.h.b16 %v2280
        %v2436 = vunpack.c.l.b16 %v2281
        %v2437 = vunpack.c.h.b16 %v2281
        %v2438 = vunpack.c.l.b16 %v2282
        %v2439 = vunpack.c.h.b16 %v2282
        %v2440 = vunpack.c.l.b16 %v2283
        %v2441 = vunpack.c.h.b16 %v2283
        %v2442 = vunpack.c.l.b16 %v2284
        %v2443 = vunpack.c.h.b16 %v2284
        %v2444 = vunpack.c.l.b16 %v2285
        %v2445 = vunpack.c.h.b16 %v2285
        %v2446 = vunpack.c.l.b16 %v2286
        %v2447 = vunpack.c.h.b16 %v2286
        %v2448 = vunpack.c.l.b16 %v2287
        %v2449 = vunpack.c.h.b16 %v2287
        %v2450 = vunpack.c.l.b16 %v2288
        %v2451 = vunpack.c.h.b16 %v2288
        %v2452 = vunpack.c.l.b16 %v2289
        %v2453 = vunpack.c.h.b16 %v2289
        %v2454 = vunpack.c.l.b16 %v2290
        %v2455 = vunpack.c.h.b16 %v2290
        %v2456 = vunpack.c.l.b16 %v2291
        %v2457 = vunpack.c.h.b16 %v2291
        %v2458 = vunpack.c.l.b16 %v2292
        %v2459 = vunpack.c.h.b16 %v2292
        %v2460 = vunpack.c.l.b16 %v2293
        %v2461 = vunpack.c.h.b16 %v2293
        %v2462 = vunpack.c.l.b16 %v2294
        %v2463 = vunpack.c.h.b16 %v2294
        %v2464 = vunpack.c.l.b16 %v2295
        %v2465 = vunpack.c.h.b16 %v2295
        %v2466 = vunpack.c.l.b16 %v2296
        %v2467 = vunpack.c.h.b16 %v2296
        %v2468 = vunpack.c.l.b16 %v2297
        %v2469 = vunpack.c.h.b16 %v2297
        %v2470 = vunpack.c.l.b16 %v2298
        %v2471 = vunpack.c.h.b16 %v2298
        %v2472 = vunpack.c.l.b16 %v2299
        %v2473 = vunpack.c.h.b16 %v2299
        %v2474 = vunpack.c.l.b16 %v2300
        %v2475 = vunpack.c.h.b16 %v2300
        %v2476 = vunpack.c.l.b16 %v2301
        %v2477 = vunpack.c.h.b16 %v2301
        %v2478 = vunpack.c.l.b16 %v2302
        %v2479 = vunpack.c.h.b16 %v2302
        %v2480 = vunpack.c.l.b16 %v2303
        %v2481 = vunpack.c.h.b16 %v2303
        %v2482 = vunpack.c.l.b16 %v2304
        %v2483 = vunpack.c.h.b16 %v2304
        %v2484 = vunpack.c.l.b16 %v2305
        %v2485 = vunpack.c.h.b16 %v2305
        %v2486 = vunpack.c.l.b16 %v2306
        %v2487 = vunpack.c.h.b16 %v2306
        %v2488 = vunpack.c.l.b16 %v2307
        %v2489 = vunpack.c.h.b16 %v2307
        %v2490 = vunpack.c.l.b16 %v2308
        %v2491 = vunpack.c.h.b16 %v2308
        %v2492 = vunpack.c.l.b16 %v2309
        %v2493 = vunpack.c.h.b16 %v2309
        %v2494 = vunpack.c.l.b16 %v2310
        %v2495 = vunpack.c.h.b16 %v2310
        %v2496 = vunpack.c.l.b16 %v2311
        %v2497 = vunpack.c.h.b16 %v2311
        %v2498 = vunpack.c.l.b16 %v2312
        %v2499 = vunpack.c.h.b16 %v2312
        %v2500 = vunpack.c.l.b16 %v2313
        %v2501 = vunpack.c.h.b16 %v2313
        %v2502 = vunpack.c.l.b16 %v2314
        %v2503 = vunpack.c.h.b16 %v2314
        %v2504 = vunpack.c.l.b16 %v2315
        %v2505 = vunpack.c.h.b16 %v2315
        %v2506 = vunpack.c.l.b16 %v2316
        %v2507 = vunpack.c.h.b16 %v2316
        %v2508 = vunpack.c.l.b16 %v2317
        %v2509 = vunpack.c.h.b16 %v2317
        %v2510 = vpack.c.b16 %v2384, %v2382
        %v2511 = vpack.c.b16 %v2385, %v2383
        %v2512 = vpack.c.b16 %v2388, %v2386
        %v2513 = vpack.c.b16 %v2389, %v2387
        %v2514 = vpack.c.b16 %v2392, %v2390
        %v2515 = vpack.c.b16 %v2393, %v2391
        %v2516 = vpack.c.b16 %v2396, %v2394
        %v2517 = vpack.c.b16 %v2397, %v2395
        %v2518 = vpack.c.b16 %v2400, %v2398
        %v2519 = vpack.c.b16 %v2401, %v2399
        %v2520 = vpack.c.b16 %v2404, %v2402
        %v2521 = vpack.c.b16 %v2405, %v2403
        %v2522 = vpack.c.b16 %v2408, %v2406
        %v2523 = vpack.c.b16 %v2409, %v2407
        %v2524 = vpack.c.b16 %v2412, %v2410
        %v2525 = vpack.c.b16 %v2413, %v2411
        %v2526 = vpack.c.b16 %v2416, %v2414
        %v2527 = vpack.c.b16 %v2417, %v2415
        %v2528 = vpack.c.b16 %v2420, %v2418
        %v2529 = vpack.c.b16 %v2421, %v2419
        %v2530 = vpack.c.b16 %v2424, %v2422
        %v2531 = vpack.c.b16 %v2425, %v2423
        %v2532 = vpack.c.b16 %v2428, %v2426
        %v2533 = vpack.c.b16 %v2429, %v2427
        %v2534 = vpack.c.b16 %v2432, %v2430
        %v2535 = vpack.c.b16 %v2433, %v2431
        %v2536 = vpack.c.b16 %v2436, %v2434
        %v2537 = vpack.c.b16 %v2437, %v2435
        %v2538 = vpack.c.b16 %v2440, %v2438
        %v2539 = vpack.c.b16 %v2441, %v2439
        %v2540 = vpack.c.b16 %v2444, %v2442
        %v2541 = vpack.c.b16 %v2445, %v2443
        %v2542 = vpack.c.b16 %v2448, %v2446
        %v2543 = vpack.c.b16 %v2449, %v2447
        %v2544 = vpack.c.b16 %v2452, %v2450
        %v2545 = vpack.c.b16 %v2453, %v2451
        %v2546 = vpack.c.b16 %v2456, %v2454
        %v2547 = vpack.c.b16 %v2457, %v2455
        %v2548 = vpack.c.b16 %v2460, %v2458
        %v2549 = vpack.c.b16 %v2461, %v2459
        %v2550 = vpack.c.b16 %v2464, %v2462
        %v2551 = vpack.c.b16 %v2465, %v2463
        %v2552 = vpack.c.b16 %v2468, %v2466
        %v2553 = vpack.c.b16 %v2469, %v2467
        %v2554 = vpack.c.b16 %v2472, %v2470
        %v2555 = vpack.c.b16 %v2473, %v2471
        %v2556 = vpack.c.b16 %v2476, %v2474
        %v2557 = vpack.c.b16 %v2477, %v2475
        %v2558 = vpack.c.b16 %v2480, %v2478
        %v2559 = vpack.c.b16 %v2481, %v2479
        %v2560 = vpack.c.b16 %v2484, %v2482
        %v2561 = vpack.c.b16 %v2485, %v2483
        %v2562 = vpack.c.b16 %v2488, %v2486
        %v2563 = vpack.c.b16 %v2489, %v2487
        %v2564 = vpack.c.b16 %v2492, %v2490
        %v2565 = vpack.c.b16 %v2493, %v2491
        %v2566 = vpack.c.b16 %v2496, %v2494
        %v2567 = vpack.c.b16 %v2497, %v2495
        %v2568 = vpack.c.b16 %v2500, %v2498
        %v2569 = vpack.c.b16 %v2501, %v2499
        %v2570 = vpack.c.b16 %v2504, %v2502
        %v2571 = vpack.c.b16 %v2505, %v2503
        %v2572 = vpack.c.b16 %v2508, %v2506
        %v2573 = vpack.c.b16 %v2509, %v2507
        %2638 = vmatprep.subr.bf16.mxu0 %v2525
        %2639 = vmatpush1.bf16.msra.mxu0 %v2524
        %2640 = vmatprep.subr.bf16.mxu0 %v2523
        %2641 = vmatpush1.bf16.msra.mxu0 %v2522
        %2642 = vmatprep.subr.bf16.mxu0 %v2521
        %2643 = vmatpush1.bf16.msra.mxu0 %v2520
        %2644 = vmatprep.subr.bf16.mxu0 %v2519
        %2645 = vmatpush1.bf16.msra.mxu0 %v2518
        %2646 = vmatprep.subr.bf16.mxu0 %v2517
        %2647 = vmatpush1.bf16.msra.mxu0 %v2516
        %2648 = vmatprep.subr.bf16.mxu0 %v2515
        %2649 = vmatpush1.bf16.msra.mxu0 %v2514
        %2650 = vmatprep.subr.bf16.mxu0 %v2513
        %2651 = vmatpush1.bf16.msra.mxu0 %v2512
        %2652 = vmatprep.subr.bf16.mxu0 %v2511
        %2653 = vmatpush1.bf16.msra.mxu0 %v2510
        %2654 = vmatprep.subr.bf16.mxu0 %v2541
        %2655 = vmatpush2.bf16.msra.mxu0 %v2540
        %2656 = vmatprep.subr.bf16.mxu0 %v2539
        %2657 = vmatpush2.bf16.msra.mxu0 %v2538
        %2658 = vmatprep.subr.bf16.mxu0 %v2537
        %2659 = vmatpush2.bf16.msra.mxu0 %v2536
        %2660 = vmatprep.subr.bf16.mxu0 %v2535
        %2661 = vmatpush2.bf16.msra.mxu0 %v2534
        %2662 = vmatprep.subr.bf16.mxu0 %v2533
        %2663 = vmatpush2.bf16.msra.mxu0 %v2532
        %2664 = vmatprep.subr.bf16.mxu0 %v2531
        %2665 = vmatpush2.bf16.msra.mxu0 %v2530
        %2666 = vmatprep.subr.bf16.mxu0 %v2529
        %2667 = vmatpush2.bf16.msra.mxu0 %v2528
        %2668 = vmatprep.subr.bf16.mxu0 %v2527
        %2669 = vmatpush2.bf16.msra.mxu0 %v2526
        %2670 = vmatprep.mubr.bf16.mxu0 %v1751
        %2671 = vmatmul.mubr.bf16.gmra.mxu0 %v1750
        %v2672 = vpop.f32.mrf.mxu0
        %v2673 = vadd.f32 %v1831, %v2672
        %v2674 = vpop.f32.mrf.mxu0
        %v2675 = vadd.f32 %v1835, %v2674
        %v2676 = vpop.f32.mrf.mxu0
        %v2677 = vpop.f32.mrf.mxu0
        %2678 = vdwg.mxu0
        %2679 = vmatprep.subr.bf16.mxu0 %v2557
        %2680 = vmatpush1.bf16.msra.mxu0 %v2556
        %2681 = vmatprep.subr.bf16.mxu0 %v2555
        %2682 = vmatpush1.bf16.msra.mxu0 %v2554
        %2683 = vmatprep.subr.bf16.mxu0 %v2553
        %2684 = vmatpush1.bf16.msra.mxu0 %v2552
        %2685 = vmatprep.subr.bf16.mxu0 %v2551
        %2686 = vmatpush1.bf16.msra.mxu0 %v2550
        %2687 = vmatprep.subr.bf16.mxu0 %v2549
        %2688 = vmatpush1.bf16.msra.mxu0 %v2548
        %2689 = vmatprep.subr.bf16.mxu0 %v2547
        %2690 = vmatpush1.bf16.msra.mxu0 %v2546
        %2691 = vmatprep.subr.bf16.mxu0 %v2545
        %2692 = vmatpush1.bf16.msra.mxu0 %v2544
        %2693 = vmatprep.subr.bf16.mxu0 %v2543
        %2694 = vmatpush1.bf16.msra.mxu0 %v2542
        %2695 = vmatprep.subr.bf16.mxu0 %v2573
        %2696 = vmatpush2.bf16.msra.mxu0 %v2572
        %2697 = vmatprep.subr.bf16.mxu0 %v2571
        %2698 = vmatpush2.bf16.msra.mxu0 %v2570
        %2699 = vmatprep.subr.bf16.mxu0 %v2569
        %2700 = vmatpush2.bf16.msra.mxu0 %v2568
        %2701 = vmatprep.subr.bf16.mxu0 %v2567
        %2702 = vmatpush2.bf16.msra.mxu0 %v2566
        %2703 = vmatprep.subr.bf16.mxu0 %v2565
        %2704 = vmatpush2.bf16.msra.mxu0 %v2564
        %2705 = vmatprep.subr.bf16.mxu0 %v2563
        %2706 = vmatpush2.bf16.msra.mxu0 %v2562
        %2707 = vmatprep.subr.bf16.mxu0 %v2561
        %2708 = vmatpush2.bf16.msra.mxu0 %v2560
        %2709 = vmatprep.subr.bf16.mxu0 %v2559
        %2710 = vmatpush2.bf16.msra.mxu0 %v2558
        %2711 = vmatprep.mubr.bf16.mxu0 %v2253
        %2712 = vmatmul.mubr.bf16.gmra.mxu0 %v2252
        %v2713 = vpop.f32.mrf.mxu0
        %v2714 = vadd.f32 %v2673, %v2713
        %v2715 = vpop.f32.mrf.mxu0
        %v2716 = vadd.f32 %v2675, %v2715
        %v2717 = vpop.f32.mrf.mxu0
        %v2718 = vpop.f32.mrf.mxu0
        %2719 = vdwg.mxu0
        %vm2720 = vcmp.ge.f32.partialorder %v2714, 0.0
        %vm2721 = vcmp.ge.f32.partialorder %v2716, 0.0
        %v2722 = vmul.f32 %v2714, 0.2
        %v2723 = vmul.f32 %v2716, 0.2
        %v2724 = vsel %vm2720, %v2714, %v2722
        %v2725 = vsel %vm2721, %v2716, %v2723
        %v2726 = vpack.c.bf16 %v2244, %v2244
        %v2727 = vpack.c.bf16 %v2245, %v2245
        %v2728 = vpack.c.bf16 %v2724, %v2724
        %v2729 = vpack.c.bf16 %v2725, %v2725
        %v2730 = vld [vmem:[%s10] sm:$0x3]
        %v2733 = vrot.slane %v2724, 7
        %v2734 = vrot.slane %v2725, 7
        %v2737 = vsel %vm436, 0.0, %v2733
        %v2738 = vsel %vm436, 0.0, %v2734
        %v2739 = vpack.c.bf16 %v2737, %v2737
        %v2740 = vpack.c.bf16 %v2738, %v2738
        %v2741 = vld [vmem:[%s8] sm:$0xff]
        %v2742 = vld [vmem:[%s8 + $0x8] sm:$0xff]
        %v2743 = vld [vmem:[%s8 + $0x10] sm:$0xff]
        %v2744 = vld [vmem:[%s8 + $0x18] sm:$0xff]
        %v2745 = vld [vmem:[%s8 + $0x20] sm:$0xff]
        %v2746 = vld [vmem:[%s8 + $0x28] sm:$0xff]
        %v2747 = vld [vmem:[%s8 + $0x30] sm:$0xff]
        %v2748 = vld [vmem:[%s8 + $0x38] sm:$0xff]
        %v2749 = vld [vmem:[%s8 + $0x40] sm:$0xff]
        %v2750 = vld [vmem:[%s8 + $0x48] sm:$0xff]
        %v2751 = vld [vmem:[%s8 + $0x50] sm:$0xff]
        %v2752 = vld [vmem:[%s8 + $0x58] sm:$0xff]
        %v2753 = vld [vmem:[%s8 + $0x60] sm:$0xff]
        %v2754 = vld [vmem:[%s8 + $0x68] sm:$0xff]
        %v2755 = vld [vmem:[%s8 + $0x70] sm:$0xff]
        %v2756 = vld [vmem:[%s8 + $0x78] sm:$0xff]
        %v2757 = vld [vmem:[%s8 + $0x80] sm:$0xff]
        %v2758 = vld [vmem:[%s8 + $0x88] sm:$0xff]
        %v2759 = vld [vmem:[%s8 + $0x90] sm:$0xff]
        %v2760 = vld [vmem:[%s8 + $0x98] sm:$0xff]
        %v2761 = vld [vmem:[%s8 + $0xa0] sm:$0xff]
        %v2762 = vld [vmem:[%s8 + $0xa8] sm:$0xff]
        %v2763 = vld [vmem:[%s8 + $0xb0] sm:$0xff]
        %v2764 = vld [vmem:[%s8 + $0xb8] sm:$0xff]
        %v2765 = vld [vmem:[%s8 + $0xc0] sm:$0xff]
        %v2766 = vld [vmem:[%s8 + $0xc8] sm:$0xff]
        %v2767 = vld [vmem:[%s8 + $0xd0] sm:$0xff]
        %v2768 = vld [vmem:[%s8 + $0xd8] sm:$0xff]
        %v2769 = vld [vmem:[%s8 + $0xe0] sm:$0xff]
        %v2770 = vld [vmem:[%s8 + $0xe8] sm:$0xff]
        %v2771 = vld [vmem:[%s8 + $0xf0] sm:$0xff]
        %v2772 = vld [vmem:[%s8 + $0xf8] sm:$0xff]
        %v2773 = vld [vmem:[%s8 + $0x100] sm:$0xff]
        %v2774 = vld [vmem:[%s8 + $0x108] sm:$0xff]
        %v2775 = vld [vmem:[%s8 + $0x110] sm:$0xff]
        %v2776 = vld [vmem:[%s8 + $0x118] sm:$0xff]
        %v2777 = vld [vmem:[%s8 + $0x120] sm:$0xff]
        %v2778 = vld [vmem:[%s8 + $0x128] sm:$0xff]
        %v2779 = vld [vmem:[%s8 + $0x130] sm:$0xff]
        %v2780 = vld [vmem:[%s8 + $0x138] sm:$0xff]
        %v2781 = vld [vmem:[%s8 + $0x140] sm:$0xff]
        %v2782 = vld [vmem:[%s8 + $0x148] sm:$0xff]
        %v2783 = vld [vmem:[%s8 + $0x150] sm:$0xff]
        %v2784 = vld [vmem:[%s8 + $0x158] sm:$0xff]
        %v2785 = vld [vmem:[%s8 + $0x160] sm:$0xff]
        %v2786 = vld [vmem:[%s8 + $0x168] sm:$0xff]
        %v2787 = vld [vmem:[%s8 + $0x170] sm:$0xff]
        %v2788 = vld [vmem:[%s8 + $0x178] sm:$0xff]
        %v2789 = vld [vmem:[%s8 + $0x180] sm:$0xff]
        %v2790 = vld [vmem:[%s8 + $0x188] sm:$0xff]
        %v2791 = vld [vmem:[%s8 + $0x190] sm:$0xff]
        %v2792 = vld [vmem:[%s8 + $0x198] sm:$0xff]
        %v2793 = vld [vmem:[%s8 + $0x1a0] sm:$0xff]
        %v2794 = vld [vmem:[%s8 + $0x1a8] sm:$0xff]
        %v2795 = vld [vmem:[%s8 + $0x1b0] sm:$0xff]
        %v2796 = vld [vmem:[%s8 + $0x1b8] sm:$0xff]
        %v2797 = vld [vmem:[%s8 + $0x1c0] sm:$0xff]
        %v2798 = vld [vmem:[%s8 + $0x1c8] sm:$0xff]
        %v2799 = vld [vmem:[%s8 + $0x1d0] sm:$0xff]
        %v2800 = vld [vmem:[%s8 + $0x1d8] sm:$0xff]
        %v2801 = vld [vmem:[%s8 + $0x1e0] sm:$0xff]
        %v2802 = vld [vmem:[%s8 + $0x1e8] sm:$0xff]
        %v2803 = vld [vmem:[%s8 + $0x1f0] sm:$0xff]
        %v2804 = vld [vmem:[%s8 + $0x1f8] sm:$0xff]
        %v2806 = vlaneseq
        %v2807 = vshrl.u32 %v2806, 7
        %v2808 = vsub.s32 0, %v2807
        %v2809 = vrot.slane %v2730, %v2808
        %v2810 = vlaneseq
        %v2811 = vshrl.u32 %v2810, 7
        %v2812 = vsub.s32 1, %v2811
        %v2813 = vrot.slane %v2730, %v2812
        %v2880 = vunpack.c.l.b16 %v2741
        %v2881 = vunpack.c.h.b16 %v2741
        %v2882 = vunpack.c.l.b16 %v2742
        %v2883 = vunpack.c.h.b16 %v2742
        %v2884 = vunpack.c.l.b16 %v2743
        %v2885 = vunpack.c.h.b16 %v2743
        %v2886 = vunpack.c.l.b16 %v2744
        %v2887 = vunpack.c.h.b16 %v2744
        %v2888 = vunpack.c.l.b16 %v2745
        %v2889 = vunpack.c.h.b16 %v2745
        %v2890 = vunpack.c.l.b16 %v2746
        %v2891 = vunpack.c.h.b16 %v2746
        %v2892 = vunpack.c.l.b16 %v2747
        %v2893 = vunpack.c.h.b16 %v2747
        %v2894 = vunpack.c.l.b16 %v2748
        %v2895 = vunpack.c.h.b16 %v2748
        %v2896 = vunpack.c.l.b16 %v2749
        %v2897 = vunpack.c.h.b16 %v2749
        %v2898 = vunpack.c.l.b16 %v2750
        %v2899 = vunpack.c.h.b16 %v2750
        %v2900 = vunpack.c.l.b16 %v2751
        %v2901 = vunpack.c.h.b16 %v2751
        %v2902 = vunpack.c.l.b16 %v2752
        %v2903 = vunpack.c.h.b16 %v2752
        %v2904 = vunpack.c.l.b16 %v2753
        %v2905 = vunpack.c.h.b16 %v2753
        %v2906 = vunpack.c.l.b16 %v2754
        %v2907 = vunpack.c.h.b16 %v2754
        %v2908 = vunpack.c.l.b16 %v2755
        %v2909 = vunpack.c.h.b16 %v2755
        %v2910 = vunpack.c.l.b16 %v2756
        %v2911 = vunpack.c.h.b16 %v2756
        %v2912 = vunpack.c.l.b16 %v2757
        %v2913 = vunpack.c.h.b16 %v2757
        %v2914 = vunpack.c.l.b16 %v2758
        %v2915 = vunpack.c.h.b16 %v2758
        %v2916 = vunpack.c.l.b16 %v2759
        %v2917 = vunpack.c.h.b16 %v2759
        %v2918 = vunpack.c.l.b16 %v2760
        %v2919 = vunpack.c.h.b16 %v2760
        %v2920 = vunpack.c.l.b16 %v2761
        %v2921 = vunpack.c.h.b16 %v2761
        %v2922 = vunpack.c.l.b16 %v2762
        %v2923 = vunpack.c.h.b16 %v2762
        %v2924 = vunpack.c.l.b16 %v2763
        %v2925 = vunpack.c.h.b16 %v2763
        %v2926 = vunpack.c.l.b16 %v2764
        %v2927 = vunpack.c.h.b16 %v2764
        %v2928 = vunpack.c.l.b16 %v2765
        %v2929 = vunpack.c.h.b16 %v2765
        %v2930 = vunpack.c.l.b16 %v2766
        %v2931 = vunpack.c.h.b16 %v2766
        %v2932 = vunpack.c.l.b16 %v2767
        %v2933 = vunpack.c.h.b16 %v2767
        %v2934 = vunpack.c.l.b16 %v2768
        %v2935 = vunpack.c.h.b16 %v2768
        %v2936 = vunpack.c.l.b16 %v2769
        %v2937 = vunpack.c.h.b16 %v2769
        %v2938 = vunpack.c.l.b16 %v2770
        %v2939 = vunpack.c.h.b16 %v2770
        %v2940 = vunpack.c.l.b16 %v2771
        %v2941 = vunpack.c.h.b16 %v2771
        %v2942 = vunpack.c.l.b16 %v2772
        %v2943 = vunpack.c.h.b16 %v2772
        %v2944 = vunpack.c.l.b16 %v2773
        %v2945 = vunpack.c.h.b16 %v2773
        %v2946 = vunpack.c.l.b16 %v2774
        %v2947 = vunpack.c.h.b16 %v2774
        %v2948 = vunpack.c.l.b16 %v2775
        %v2949 = vunpack.c.h.b16 %v2775
        %v2950 = vunpack.c.l.b16 %v2776
        %v2951 = vunpack.c.h.b16 %v2776
        %v2952 = vunpack.c.l.b16 %v2777
        %v2953 = vunpack.c.h.b16 %v2777
        %v2954 = vunpack.c.l.b16 %v2778
        %v2955 = vunpack.c.h.b16 %v2778
        %v2956 = vunpack.c.l.b16 %v2779
        %v2957 = vunpack.c.h.b16 %v2779
        %v2958 = vunpack.c.l.b16 %v2780
        %v2959 = vunpack.c.h.b16 %v2780
        %v2960 = vunpack.c.l.b16 %v2781
        %v2961 = vunpack.c.h.b16 %v2781
        %v2962 = vunpack.c.l.b16 %v2782
        %v2963 = vunpack.c.h.b16 %v2782
        %v2964 = vunpack.c.l.b16 %v2783
        %v2965 = vunpack.c.h.b16 %v2783
        %v2966 = vunpack.c.l.b16 %v2784
        %v2967 = vunpack.c.h.b16 %v2784
        %v2968 = vunpack.c.l.b16 %v2785
        %v2969 = vunpack.c.h.b16 %v2785
        %v2970 = vunpack.c.l.b16 %v2786
        %v2971 = vunpack.c.h.b16 %v2786
        %v2972 = vunpack.c.l.b16 %v2787
        %v2973 = vunpack.c.h.b16 %v2787
        %v2974 = vunpack.c.l.b16 %v2788
        %v2975 = vunpack.c.h.b16 %v2788
        %v2976 = vunpack.c.l.b16 %v2789
        %v2977 = vunpack.c.h.b16 %v2789
        %v2978 = vunpack.c.l.b16 %v2790
        %v2979 = vunpack.c.h.b16 %v2790
        %v2980 = vunpack.c.l.b16 %v2791
        %v2981 = vunpack.c.h.b16 %v2791
        %v2982 = vunpack.c.l.b16 %v2792
        %v2983 = vunpack.c.h.b16 %v2792
        %v2984 = vunpack.c.l.b16 %v2793
        %v2985 = vunpack.c.h.b16 %v2793
        %v2986 = vunpack.c.l.b16 %v2794
        %v2987 = vunpack.c.h.b16 %v2794
        %v2988 = vunpack.c.l.b16 %v2795
        %v2989 = vunpack.c.h.b16 %v2795
        %v2990 = vunpack.c.l.b16 %v2796
        %v2991 = vunpack.c.h.b16 %v2796
        %v2992 = vunpack.c.l.b16 %v2797
        %v2993 = vunpack.c.h.b16 %v2797
        %v2994 = vunpack.c.l.b16 %v2798
        %v2995 = vunpack.c.h.b16 %v2798
        %v2996 = vunpack.c.l.b16 %v2799
        %v2997 = vunpack.c.h.b16 %v2799
        %v2998 = vunpack.c.l.b16 %v2800
        %v2999 = vunpack.c.h.b16 %v2800
        %v3000 = vunpack.c.l.b16 %v2801
        %v3001 = vunpack.c.h.b16 %v2801
        %v3002 = vunpack.c.l.b16 %v2802
        %v3003 = vunpack.c.h.b16 %v2802
        %v3004 = vunpack.c.l.b16 %v2803
        %v3005 = vunpack.c.h.b16 %v2803
        %v3006 = vunpack.c.l.b16 %v2804
        %v3007 = vunpack.c.h.b16 %v2804
        %v3008 = vpack.c.b16 %v2882, %v2880
        %v3009 = vpack.c.b16 %v2883, %v2881
        %v3010 = vpack.c.b16 %v2886, %v2884
        %v3011 = vpack.c.b16 %v2887, %v2885
        %v3012 = vpack.c.b16 %v2890, %v2888
        %v3013 = vpack.c.b16 %v2891, %v2889
        %v3014 = vpack.c.b16 %v2894, %v2892
        %v3015 = vpack.c.b16 %v2895, %v2893
        %v3016 = vpack.c.b16 %v2898, %v2896
        %v3017 = vpack.c.b16 %v2899, %v2897
        %v3018 = vpack.c.b16 %v2902, %v2900
        %v3019 = vpack.c.b16 %v2903, %v2901
        %v3020 = vpack.c.b16 %v2906, %v2904
        %v3021 = vpack.c.b16 %v2907, %v2905
        %v3022 = vpack.c.b16 %v2910, %v2908
        %v3023 = vpack.c.b16 %v2911, %v2909
        %v3024 = vpack.c.b16 %v2914, %v2912
        %v3025 = vpack.c.b16 %v2915, %v2913
        %v3026 = vpack.c.b16 %v2918, %v2916
        %v3027 = vpack.c.b16 %v2919, %v2917
        %v3028 = vpack.c.b16 %v2922, %v2920
        %v3029 = vpack.c.b16 %v2923, %v2921
        %v3030 = vpack.c.b16 %v2926, %v2924
        %v3031 = vpack.c.b16 %v2927, %v2925
        %v3032 = vpack.c.b16 %v2930, %v2928
        %v3033 = vpack.c.b16 %v2931, %v2929
        %v3034 = vpack.c.b16 %v2934, %v2932
        %v3035 = vpack.c.b16 %v2935, %v2933
        %v3036 = vpack.c.b16 %v2938, %v2936
        %v3037 = vpack.c.b16 %v2939, %v2937
        %v3038 = vpack.c.b16 %v2942, %v2940
        %v3039 = vpack.c.b16 %v2943, %v2941
        %v3040 = vpack.c.b16 %v2946, %v2944
        %v3041 = vpack.c.b16 %v2947, %v2945
        %v3042 = vpack.c.b16 %v2950, %v2948
        %v3043 = vpack.c.b16 %v2951, %v2949
        %v3044 = vpack.c.b16 %v2954, %v2952
        %v3045 = vpack.c.b16 %v2955, %v2953
        %v3046 = vpack.c.b16 %v2958, %v2956
        %v3047 = vpack.c.b16 %v2959, %v2957
        %v3048 = vpack.c.b16 %v2962, %v2960
        %v3049 = vpack.c.b16 %v2963, %v2961
        %v3050 = vpack.c.b16 %v2966, %v2964
        %v3051 = vpack.c.b16 %v2967, %v2965
        %v3052 = vpack.c.b16 %v2970, %v2968
        %v3053 = vpack.c.b16 %v2971, %v2969
        %v3054 = vpack.c.b16 %v2974, %v2972
        %v3055 = vpack.c.b16 %v2975, %v2973
        %v3056 = vpack.c.b16 %v2978, %v2976
        %v3057 = vpack.c.b16 %v2979, %v2977
        %v3058 = vpack.c.b16 %v2982, %v2980
        %v3059 = vpack.c.b16 %v2983, %v2981
        %v3060 = vpack.c.b16 %v2986, %v2984
        %v3061 = vpack.c.b16 %v2987, %v2985
        %v3062 = vpack.c.b16 %v2990, %v2988
        %v3063 = vpack.c.b16 %v2991, %v2989
        %v3064 = vpack.c.b16 %v2994, %v2992
        %v3065 = vpack.c.b16 %v2995, %v2993
        %v3066 = vpack.c.b16 %v2998, %v2996
        %v3067 = vpack.c.b16 %v2999, %v2997
        %v3068 = vpack.c.b16 %v3002, %v3000
        %v3069 = vpack.c.b16 %v3003, %v3001
        %v3070 = vpack.c.b16 %v3006, %v3004
        %v3071 = vpack.c.b16 %v3007, %v3005
        %3136 = vmatprep.subr.bf16.mxu0 %v3023
        %3137 = vmatpush1.bf16.msra.mxu0 %v3022
        %3138 = vmatprep.subr.bf16.mxu0 %v3021
        %3139 = vmatpush1.bf16.msra.mxu0 %v3020
        %3140 = vmatprep.subr.bf16.mxu0 %v3019
        %3141 = vmatpush1.bf16.msra.mxu0 %v3018
        %3142 = vmatprep.subr.bf16.mxu0 %v3017
        %3143 = vmatpush1.bf16.msra.mxu0 %v3016
        %3144 = vmatprep.subr.bf16.mxu0 %v3015
        %3145 = vmatpush1.bf16.msra.mxu0 %v3014
        %3146 = vmatprep.subr.bf16.mxu0 %v3013
        %3147 = vmatpush1.bf16.msra.mxu0 %v3012
        %3148 = vmatprep.subr.bf16.mxu0 %v3011
        %3149 = vmatpush1.bf16.msra.mxu0 %v3010
        %3150 = vmatprep.subr.bf16.mxu0 %v3009
        %3151 = vmatpush1.bf16.msra.mxu0 %v3008
        %3152 = vmatprep.subr.bf16.mxu0 %v3039
        %3153 = vmatpush2.bf16.msra.mxu0 %v3038
        %3154 = vmatprep.subr.bf16.mxu0 %v3037
        %3155 = vmatpush2.bf16.msra.mxu0 %v3036
        %3156 = vmatprep.subr.bf16.mxu0 %v3035
        %3157 = vmatpush2.bf16.msra.mxu0 %v3034
        %3158 = vmatprep.subr.bf16.mxu0 %v3033
        %3159 = vmatpush2.bf16.msra.mxu0 %v3032
        %3160 = vmatprep.subr.bf16.mxu0 %v3031
        %3161 = vmatpush2.bf16.msra.mxu0 %v3030
        %3162 = vmatprep.subr.bf16.mxu0 %v3029
        %3163 = vmatpush2.bf16.msra.mxu0 %v3028
        %3164 = vmatprep.subr.bf16.mxu0 %v3027
        %3165 = vmatpush2.bf16.msra.mxu0 %v3026
        %3166 = vmatprep.subr.bf16.mxu0 %v3025
        %3167 = vmatpush2.bf16.msra.mxu0 %v3024
        %3168 = vmatprep.mubr.bf16.mxu0 %v2740
        %3169 = vmatmul.mubr.bf16.gmra.mxu0 %v2739
        %v3170 = vpop.f32.mrf.mxu0
        %v3171 = vadd.f32 %v2809, %v3170
        %v3172 = vpop.f32.mrf.mxu0
        %v3173 = vadd.f32 %v2813, %v3172
        %v3174 = vpop.f32.mrf.mxu0
        %v3175 = vpop.f32.mrf.mxu0
        %3176 = vdwg.mxu0
        %3177 = vmatprep.subr.bf16.mxu0 %v3055
        %3178 = vmatpush1.bf16.msra.mxu0 %v3054
        %3179 = vmatprep.subr.bf16.mxu0 %v3053
        %3180 = vmatpush1.bf16.msra.mxu0 %v3052
        %3181 = vmatprep.subr.bf16.mxu0 %v3051
        %3182 = vmatpush1.bf16.msra.mxu0 %v3050
        %3183 = vmatprep.subr.bf16.mxu0 %v3049
        %3184 = vmatpush1.bf16.msra.mxu0 %v3048
        %3185 = vmatprep.subr.bf16.mxu0 %v3047
        %3186 = vmatpush1.bf16.msra.mxu0 %v3046
        %3187 = vmatprep.subr.bf16.mxu0 %v3045
        %3188 = vmatpush1.bf16.msra.mxu0 %v3044
        %3189 = vmatprep.subr.bf16.mxu0 %v3043
        %3190 = vmatpush1.bf16.msra.mxu0 %v3042
        %3191 = vmatprep.subr.bf16.mxu0 %v3041
        %3192 = vmatpush1.bf16.msra.mxu0 %v3040
        %3193 = vmatprep.subr.bf16.mxu0 %v3071
        %3194 = vmatpush2.bf16.msra.mxu0 %v3070
        %3195 = vmatprep.subr.bf16.mxu0 %v3069
        %3196 = vmatpush2.bf16.msra.mxu0 %v3068
        %3197 = vmatprep.subr.bf16.mxu0 %v3067
        %3198 = vmatpush2.bf16.msra.mxu0 %v3066
        %3199 = vmatprep.subr.bf16.mxu0 %v3065
        %3200 = vmatpush2.bf16.msra.mxu0 %v3064
        %3201 = vmatprep.subr.bf16.mxu0 %v3063
        %3202 = vmatpush2.bf16.msra.mxu0 %v3062
        %3203 = vmatprep.subr.bf16.mxu0 %v3061
        %3204 = vmatpush2.bf16.msra.mxu0 %v3060
        %3205 = vmatprep.subr.bf16.mxu0 %v3059
        %3206 = vmatpush2.bf16.msra.mxu0 %v3058
        %3207 = vmatprep.subr.bf16.mxu0 %v3057
        %3208 = vmatpush2.bf16.msra.mxu0 %v3056
        %3209 = vmatprep.mubr.bf16.mxu0 %v2727
        %3210 = vmatmul.mubr.bf16.gmra.mxu0 %v2726
        %v3211 = vpop.f32.mrf.mxu0
        %v3212 = vadd.f32 %v3171, %v3211
        %v3213 = vpop.f32.mrf.mxu0
        %v3214 = vadd.f32 %v3173, %v3213
        %v3215 = vpop.f32.mrf.mxu0
        %v3216 = vpop.f32.mrf.mxu0
        %3217 = vdwg.mxu0
        %v3218 = vld [vmem:[%s9] sm:$0xff]
        %v3219 = vld [vmem:[%s9 + $0x8] sm:$0xff]
        %v3220 = vld [vmem:[%s9 + $0x10] sm:$0xff]
        %v3221 = vld [vmem:[%s9 + $0x18] sm:$0xff]
        %v3222 = vld [vmem:[%s9 + $0x20] sm:$0xff]
        %v3223 = vld [vmem:[%s9 + $0x28] sm:$0xff]
        %v3224 = vld [vmem:[%s9 + $0x30] sm:$0xff]
        %v3225 = vld [vmem:[%s9 + $0x38] sm:$0xff]
        %v3226 = vld [vmem:[%s9 + $0x40] sm:$0xff]
        %v3227 = vld [vmem:[%s9 + $0x48] sm:$0xff]
        %v3228 = vld [vmem:[%s9 + $0x50] sm:$0xff]
        %v3229 = vld [vmem:[%s9 + $0x58] sm:$0xff]
        %v3230 = vld [vmem:[%s9 + $0x60] sm:$0xff]
        %v3231 = vld [vmem:[%s9 + $0x68] sm:$0xff]
        %v3232 = vld [vmem:[%s9 + $0x70] sm:$0xff]
        %v3233 = vld [vmem:[%s9 + $0x78] sm:$0xff]
        %v3234 = vld [vmem:[%s9 + $0x80] sm:$0xff]
        %v3235 = vld [vmem:[%s9 + $0x88] sm:$0xff]
        %v3236 = vld [vmem:[%s9 + $0x90] sm:$0xff]
        %v3237 = vld [vmem:[%s9 + $0x98] sm:$0xff]
        %v3238 = vld [vmem:[%s9 + $0xa0] sm:$0xff]
        %v3239 = vld [vmem:[%s9 + $0xa8] sm:$0xff]
        %v3240 = vld [vmem:[%s9 + $0xb0] sm:$0xff]
        %v3241 = vld [vmem:[%s9 + $0xb8] sm:$0xff]
        %v3242 = vld [vmem:[%s9 + $0xc0] sm:$0xff]
        %v3243 = vld [vmem:[%s9 + $0xc8] sm:$0xff]
        %v3244 = vld [vmem:[%s9 + $0xd0] sm:$0xff]
        %v3245 = vld [vmem:[%s9 + $0xd8] sm:$0xff]
        %v3246 = vld [vmem:[%s9 + $0xe0] sm:$0xff]
        %v3247 = vld [vmem:[%s9 + $0xe8] sm:$0xff]
        %v3248 = vld [vmem:[%s9 + $0xf0] sm:$0xff]
        %v3249 = vld [vmem:[%s9 + $0xf8] sm:$0xff]
        %v3250 = vld [vmem:[%s9 + $0x100] sm:$0xff]
        %v3251 = vld [vmem:[%s9 + $0x108] sm:$0xff]
        %v3252 = vld [vmem:[%s9 + $0x110] sm:$0xff]
        %v3253 = vld [vmem:[%s9 + $0x118] sm:$0xff]
        %v3254 = vld [vmem:[%s9 + $0x120] sm:$0xff]
        %v3255 = vld [vmem:[%s9 + $0x128] sm:$0xff]
        %v3256 = vld [vmem:[%s9 + $0x130] sm:$0xff]
        %v3257 = vld [vmem:[%s9 + $0x138] sm:$0xff]
        %v3258 = vld [vmem:[%s9 + $0x140] sm:$0xff]
        %v3259 = vld [vmem:[%s9 + $0x148] sm:$0xff]
        %v3260 = vld [vmem:[%s9 + $0x150] sm:$0xff]
        %v3261 = vld [vmem:[%s9 + $0x158] sm:$0xff]
        %v3262 = vld [vmem:[%s9 + $0x160] sm:$0xff]
        %v3263 = vld [vmem:[%s9 + $0x168] sm:$0xff]
        %v3264 = vld [vmem:[%s9 + $0x170] sm:$0xff]
        %v3265 = vld [vmem:[%s9 + $0x178] sm:$0xff]
        %v3266 = vld [vmem:[%s9 + $0x180] sm:$0xff]
        %v3267 = vld [vmem:[%s9 + $0x188] sm:$0xff]
        %v3268 = vld [vmem:[%s9 + $0x190] sm:$0xff]
        %v3269 = vld [vmem:[%s9 + $0x198] sm:$0xff]
        %v3270 = vld [vmem:[%s9 + $0x1a0] sm:$0xff]
        %v3271 = vld [vmem:[%s9 + $0x1a8] sm:$0xff]
        %v3272 = vld [vmem:[%s9 + $0x1b0] sm:$0xff]
        %v3273 = vld [vmem:[%s9 + $0x1b8] sm:$0xff]
        %v3274 = vld [vmem:[%s9 + $0x1c0] sm:$0xff]
        %v3275 = vld [vmem:[%s9 + $0x1c8] sm:$0xff]
        %v3276 = vld [vmem:[%s9 + $0x1d0] sm:$0xff]
        %v3277 = vld [vmem:[%s9 + $0x1d8] sm:$0xff]
        %v3278 = vld [vmem:[%s9 + $0x1e0] sm:$0xff]
        %v3279 = vld [vmem:[%s9 + $0x1e8] sm:$0xff]
        %v3280 = vld [vmem:[%s9 + $0x1f0] sm:$0xff]
        %v3281 = vld [vmem:[%s9 + $0x1f8] sm:$0xff]
        %v3346 = vunpack.c.l.b16 %v3218
        %v3347 = vunpack.c.h.b16 %v3218
        %v3348 = vunpack.c.l.b16 %v3219
        %v3349 = vunpack.c.h.b16 %v3219
        %v3350 = vunpack.c.l.b16 %v3220
        %v3351 = vunpack.c.h.b16 %v3220
        %v3352 = vunpack.c.l.b16 %v3221
        %v3353 = vunpack.c.h.b16 %v3221
        %v3354 = vunpack.c.l.b16 %v3222
        %v3355 = vunpack.c.h.b16 %v3222
        %v3356 = vunpack.c.l.b16 %v3223
        %v3357 = vunpack.c.h.b16 %v3223
        %v3358 = vunpack.c.l.b16 %v3224
        %v3359 = vunpack.c.h.b16 %v3224
        %v3360 = vunpack.c.l.b16 %v3225
        %v3361 = vunpack.c.h.b16 %v3225
        %v3362 = vunpack.c.l.b16 %v3226
        %v3363 = vunpack.c.h.b16 %v3226
        %v3364 = vunpack.c.l.b16 %v3227
        %v3365 = vunpack.c.h.b16 %v3227
        %v3366 = vunpack.c.l.b16 %v3228
        %v3367 = vunpack.c.h.b16 %v3228
        %v3368 = vunpack.c.l.b16 %v3229
        %v3369 = vunpack.c.h.b16 %v3229
        %v3370 = vunpack.c.l.b16 %v3230
        %v3371 = vunpack.c.h.b16 %v3230
        %v3372 = vunpack.c.l.b16 %v3231
        %v3373 = vunpack.c.h.b16 %v3231
        %v3374 = vunpack.c.l.b16 %v3232
        %v3375 = vunpack.c.h.b16 %v3232
        %v3376 = vunpack.c.l.b16 %v3233
        %v3377 = vunpack.c.h.b16 %v3233
        %v3378 = vunpack.c.l.b16 %v3234
        %v3379 = vunpack.c.h.b16 %v3234
        %v3380 = vunpack.c.l.b16 %v3235
        %v3381 = vunpack.c.h.b16 %v3235
        %v3382 = vunpack.c.l.b16 %v3236
        %v3383 = vunpack.c.h.b16 %v3236
        %v3384 = vunpack.c.l.b16 %v3237
        %v3385 = vunpack.c.h.b16 %v3237
        %v3386 = vunpack.c.l.b16 %v3238
        %v3387 = vunpack.c.h.b16 %v3238
        %v3388 = vunpack.c.l.b16 %v3239
        %v3389 = vunpack.c.h.b16 %v3239
        %v3390 = vunpack.c.l.b16 %v3240
        %v3391 = vunpack.c.h.b16 %v3240
        %v3392 = vunpack.c.l.b16 %v3241
        %v3393 = vunpack.c.h.b16 %v3241
        %v3394 = vunpack.c.l.b16 %v3242
        %v3395 = vunpack.c.h.b16 %v3242
        %v3396 = vunpack.c.l.b16 %v3243
        %v3397 = vunpack.c.h.b16 %v3243
        %v3398 = vunpack.c.l.b16 %v3244
        %v3399 = vunpack.c.h.b16 %v3244
        %v3400 = vunpack.c.l.b16 %v3245
        %v3401 = vunpack.c.h.b16 %v3245
        %v3402 = vunpack.c.l.b16 %v3246
        %v3403 = vunpack.c.h.b16 %v3246
        %v3404 = vunpack.c.l.b16 %v3247
        %v3405 = vunpack.c.h.b16 %v3247
        %v3406 = vunpack.c.l.b16 %v3248
        %v3407 = vunpack.c.h.b16 %v3248
        %v3408 = vunpack.c.l.b16 %v3249
        %v3409 = vunpack.c.h.b16 %v3249
        %v3410 = vunpack.c.l.b16 %v3250
        %v3411 = vunpack.c.h.b16 %v3250
        %v3412 = vunpack.c.l.b16 %v3251
        %v3413 = vunpack.c.h.b16 %v3251
        %v3414 = vunpack.c.l.b16 %v3252
        %v3415 = vunpack.c.h.b16 %v3252
        %v3416 = vunpack.c.l.b16 %v3253
        %v3417 = vunpack.c.h.b16 %v3253
        %v3418 = vunpack.c.l.b16 %v3254
        %v3419 = vunpack.c.h.b16 %v3254
        %v3420 = vunpack.c.l.b16 %v3255
        %v3421 = vunpack.c.h.b16 %v3255
        %v3422 = vunpack.c.l.b16 %v3256
        %v3423 = vunpack.c.h.b16 %v3256
        %v3424 = vunpack.c.l.b16 %v3257
        %v3425 = vunpack.c.h.b16 %v3257
        %v3426 = vunpack.c.l.b16 %v3258
        %v3427 = vunpack.c.h.b16 %v3258
        %v3428 = vunpack.c.l.b16 %v3259
        %v3429 = vunpack.c.h.b16 %v3259
        %v3430 = vunpack.c.l.b16 %v3260
        %v3431 = vunpack.c.h.b16 %v3260
        %v3432 = vunpack.c.l.b16 %v3261
        %v3433 = vunpack.c.h.b16 %v3261
        %v3434 = vunpack.c.l.b16 %v3262
        %v3435 = vunpack.c.h.b16 %v3262
        %v3436 = vunpack.c.l.b16 %v3263
        %v3437 = vunpack.c.h.b16 %v3263
        %v3438 = vunpack.c.l.b16 %v3264
        %v3439 = vunpack.c.h.b16 %v3264
        %v3440 = vunpack.c.l.b16 %v3265
        %v3441 = vunpack.c.h.b16 %v3265
        %v3442 = vunpack.c.l.b16 %v3266
        %v3443 = vunpack.c.h.b16 %v3266
        %v3444 = vunpack.c.l.b16 %v3267
        %v3445 = vunpack.c.h.b16 %v3267
        %v3446 = vunpack.c.l.b16 %v3268
        %v3447 = vunpack.c.h.b16 %v3268
        %v3448 = vunpack.c.l.b16 %v3269
        %v3449 = vunpack.c.h.b16 %v3269
        %v3450 = vunpack.c.l.b16 %v3270
        %v3451 = vunpack.c.h.b16 %v3270
        %v3452 = vunpack.c.l.b16 %v3271
        %v3453 = vunpack.c.h.b16 %v3271
        %v3454 = vunpack.c.l.b16 %v3272
        %v3455 = vunpack.c.h.b16 %v3272
        %v3456 = vunpack.c.l.b16 %v3273
        %v3457 = vunpack.c.h.b16 %v3273
        %v3458 = vunpack.c.l.b16 %v3274
        %v3459 = vunpack.c.h.b16 %v3274
        %v3460 = vunpack.c.l.b16 %v3275
        %v3461 = vunpack.c.h.b16 %v3275
        %v3462 = vunpack.c.l.b16 %v3276
        %v3463 = vunpack.c.h.b16 %v3276
        %v3464 = vunpack.c.l.b16 %v3277
        %v3465 = vunpack.c.h.b16 %v3277
        %v3466 = vunpack.c.l.b16 %v3278
        %v3467 = vunpack.c.h.b16 %v3278
        %v3468 = vunpack.c.l.b16 %v3279
        %v3469 = vunpack.c.h.b16 %v3279
        %v3470 = vunpack.c.l.b16 %v3280
        %v3471 = vunpack.c.h.b16 %v3280
        %v3472 = vunpack.c.l.b16 %v3281
        %v3473 = vunpack.c.h.b16 %v3281
        %v3474 = vpack.c.b16 %v3348, %v3346
        %v3475 = vpack.c.b16 %v3349, %v3347
        %v3476 = vpack.c.b16 %v3352, %v3350
        %v3477 = vpack.c.b16 %v3353, %v3351
        %v3478 = vpack.c.b16 %v3356, %v3354
        %v3479 = vpack.c.b16 %v3357, %v3355
        %v3480 = vpack.c.b16 %v3360, %v3358
        %v3481 = vpack.c.b16 %v3361, %v3359
        %v3482 = vpack.c.b16 %v3364, %v3362
        %v3483 = vpack.c.b16 %v3365, %v3363
        %v3484 = vpack.c.b16 %v3368, %v3366
        %v3485 = vpack.c.b16 %v3369, %v3367
        %v3486 = vpack.c.b16 %v3372, %v3370
        %v3487 = vpack.c.b16 %v3373, %v3371
        %v3488 = vpack.c.b16 %v3376, %v3374
        %v3489 = vpack.c.b16 %v3377, %v3375
        %v3490 = vpack.c.b16 %v3380, %v3378
        %v3491 = vpack.c.b16 %v3381, %v3379
        %v3492 = vpack.c.b16 %v3384, %v3382
        %v3493 = vpack.c.b16 %v3385, %v3383
        %v3494 = vpack.c.b16 %v3388, %v3386
        %v3495 = vpack.c.b16 %v3389, %v3387
        %v3496 = vpack.c.b16 %v3392, %v3390
        %v3497 = vpack.c.b16 %v3393, %v3391
        %v3498 = vpack.c.b16 %v3396, %v3394
        %v3499 = vpack.c.b16 %v3397, %v3395
        %v3500 = vpack.c.b16 %v3400, %v3398
        %v3501 = vpack.c.b16 %v3401, %v3399
        %v3502 = vpack.c.b16 %v3404, %v3402
        %v3503 = vpack.c.b16 %v3405, %v3403
        %v3504 = vpack.c.b16 %v3408, %v3406
        %v3505 = vpack.c.b16 %v3409, %v3407
        %v3506 = vpack.c.b16 %v3412, %v3410
        %v3507 = vpack.c.b16 %v3413, %v3411
        %v3508 = vpack.c.b16 %v3416, %v3414
        %v3509 = vpack.c.b16 %v3417, %v3415
        %v3510 = vpack.c.b16 %v3420, %v3418
        %v3511 = vpack.c.b16 %v3421, %v3419
        %v3512 = vpack.c.b16 %v3424, %v3422
        %v3513 = vpack.c.b16 %v3425, %v3423
        %v3514 = vpack.c.b16 %v3428, %v3426
        %v3515 = vpack.c.b16 %v3429, %v3427
        %v3516 = vpack.c.b16 %v3432, %v3430
        %v3517 = vpack.c.b16 %v3433, %v3431
        %v3518 = vpack.c.b16 %v3436, %v3434
        %v3519 = vpack.c.b16 %v3437, %v3435
        %v3520 = vpack.c.b16 %v3440, %v3438
        %v3521 = vpack.c.b16 %v3441, %v3439
        %v3522 = vpack.c.b16 %v3444, %v3442
        %v3523 = vpack.c.b16 %v3445, %v3443
        %v3524 = vpack.c.b16 %v3448, %v3446
        %v3525 = vpack.c.b16 %v3449, %v3447
        %v3526 = vpack.c.b16 %v3452, %v3450
        %v3527 = vpack.c.b16 %v3453, %v3451
        %v3528 = vpack.c.b16 %v3456, %v3454
        %v3529 = vpack.c.b16 %v3457, %v3455
        %v3530 = vpack.c.b16 %v3460, %v3458
        %v3531 = vpack.c.b16 %v3461, %v3459
        %v3532 = vpack.c.b16 %v3464, %v3462
        %v3533 = vpack.c.b16 %v3465, %v3463
        %v3534 = vpack.c.b16 %v3468, %v3466
        %v3535 = vpack.c.b16 %v3469, %v3467
        %v3536 = vpack.c.b16 %v3472, %v3470
        %v3537 = vpack.c.b16 %v3473, %v3471
        %3602 = vmatprep.subr.bf16.mxu0 %v3489
        %3603 = vmatpush1.bf16.msra.mxu0 %v3488
        %3604 = vmatprep.subr.bf16.mxu0 %v3487
        %3605 = vmatpush1.bf16.msra.mxu0 %v3486
        %3606 = vmatprep.subr.bf16.mxu0 %v3485
        %3607 = vmatpush1.bf16.msra.mxu0 %v3484
        %3608 = vmatprep.subr.bf16.mxu0 %v3483
        %3609 = vmatpush1.bf16.msra.mxu0 %v3482
        %3610 = vmatprep.subr.bf16.mxu0 %v3481
        %3611 = vmatpush1.bf16.msra.mxu0 %v3480
        %3612 = vmatprep.subr.bf16.mxu0 %v3479
        %3613 = vmatpush1.bf16.msra.mxu0 %v3478
        %3614 = vmatprep.subr.bf16.mxu0 %v3477
        %3615 = vmatpush1.bf16.msra.mxu0 %v3476
        %3616 = vmatprep.subr.bf16.mxu0 %v3475
        %3617 = vmatpush1.bf16.msra.mxu0 %v3474
        %3618 = vmatprep.subr.bf16.mxu0 %v3505
        %3619 = vmatpush2.bf16.msra.mxu0 %v3504
        %3620 = vmatprep.subr.bf16.mxu0 %v3503
        %3621 = vmatpush2.bf16.msra.mxu0 %v3502
        %3622 = vmatprep.subr.bf16.mxu0 %v3501
        %3623 = vmatpush2.bf16.msra.mxu0 %v3500
        %3624 = vmatprep.subr.bf16.mxu0 %v3499
        %3625 = vmatpush2.bf16.msra.mxu0 %v3498
        %3626 = vmatprep.subr.bf16.mxu0 %v3497
        %3627 = vmatpush2.bf16.msra.mxu0 %v3496
        %3628 = vmatprep.subr.bf16.mxu0 %v3495
        %3629 = vmatpush2.bf16.msra.mxu0 %v3494
        %3630 = vmatprep.subr.bf16.mxu0 %v3493
        %3631 = vmatpush2.bf16.msra.mxu0 %v3492
        %3632 = vmatprep.subr.bf16.mxu0 %v3491
        %3633 = vmatpush2.bf16.msra.mxu0 %v3490
        %3634 = vmatprep.mubr.bf16.mxu0 %v2727
        %3635 = vmatmul.mubr.bf16.gmra.mxu0 %v2726
        %v3636 = vpop.f32.mrf.mxu0
        %v3637 = vadd.f32 %v2809, %v3636
        %v3638 = vpop.f32.mrf.mxu0
        %v3639 = vadd.f32 %v2813, %v3638
        %v3640 = vpop.f32.mrf.mxu0
        %v3641 = vpop.f32.mrf.mxu0
        %3642 = vdwg.mxu0
        %3643 = vmatprep.subr.bf16.mxu0 %v3521
        %3644 = vmatpush1.bf16.msra.mxu0 %v3520
        %3645 = vmatprep.subr.bf16.mxu0 %v3519
        %3646 = vmatpush1.bf16.msra.mxu0 %v3518
        %3647 = vmatprep.subr.bf16.mxu0 %v3517
        %3648 = vmatpush1.bf16.msra.mxu0 %v3516
        %3649 = vmatprep.subr.bf16.mxu0 %v3515
        %3650 = vmatpush1.bf16.msra.mxu0 %v3514
        %3651 = vmatprep.subr.bf16.mxu0 %v3513
        %3652 = vmatpush1.bf16.msra.mxu0 %v3512
        %3653 = vmatprep.subr.bf16.mxu0 %v3511
        %3654 = vmatpush1.bf16.msra.mxu0 %v3510
        %3655 = vmatprep.subr.bf16.mxu0 %v3509
        %3656 = vmatpush1.bf16.msra.mxu0 %v3508
        %3657 = vmatprep.subr.bf16.mxu0 %v3507
        %3658 = vmatpush1.bf16.msra.mxu0 %v3506
        %3659 = vmatprep.subr.bf16.mxu0 %v3537
        %3660 = vmatpush2.bf16.msra.mxu0 %v3536
        %3661 = vmatprep.subr.bf16.mxu0 %v3535
        %3662 = vmatpush2.bf16.msra.mxu0 %v3534
        %3663 = vmatprep.subr.bf16.mxu0 %v3533
        %3664 = vmatpush2.bf16.msra.mxu0 %v3532
        %3665 = vmatprep.subr.bf16.mxu0 %v3531
        %3666 = vmatpush2.bf16.msra.mxu0 %v3530
        %3667 = vmatprep.subr.bf16.mxu0 %v3529
        %3668 = vmatpush2.bf16.msra.mxu0 %v3528
        %3669 = vmatprep.subr.bf16.mxu0 %v3527
        %3670 = vmatpush2.bf16.msra.mxu0 %v3526
        %3671 = vmatprep.subr.bf16.mxu0 %v3525
        %3672 = vmatpush2.bf16.msra.mxu0 %v3524
        %3673 = vmatprep.subr.bf16.mxu0 %v3523
        %3674 = vmatpush2.bf16.msra.mxu0 %v3522
        %3675 = vmatprep.mubr.bf16.mxu0 %v2729
        %3676 = vmatmul.mubr.bf16.gmra.mxu0 %v2728
        %v3677 = vpop.f32.mrf.mxu0
        %v3678 = vadd.f32 %v3637, %v3677
        %v3679 = vpop.f32.mrf.mxu0
        %v3680 = vadd.f32 %v3639, %v3679
        %v3681 = vpop.f32.mrf.mxu0
        %v3682 = vpop.f32.mrf.mxu0
        %3683 = vdwg.mxu0
        %3684 = vmatprep.subr.bf16.mxu0 %v3023
        %3685 = vmatpush1.bf16.msra.mxu0 %v3022
        %3686 = vmatprep.subr.bf16.mxu0 %v3021
        %3687 = vmatpush1.bf16.msra.mxu0 %v3020
        %3688 = vmatprep.subr.bf16.mxu0 %v3019
        %3689 = vmatpush1.bf16.msra.mxu0 %v3018
        %3690 = vmatprep.subr.bf16.mxu0 %v3017
        %3691 = vmatpush1.bf16.msra.mxu0 %v3016
        %3692 = vmatprep.subr.bf16.mxu0 %v3015
        %3693 = vmatpush1.bf16.msra.mxu0 %v3014
        %3694 = vmatprep.subr.bf16.mxu0 %v3013
        %3695 = vmatpush1.bf16.msra.mxu0 %v3012
        %3696 = vmatprep.subr.bf16.mxu0 %v3011
        %3697 = vmatpush1.bf16.msra.mxu0 %v3010
        %3698 = vmatprep.subr.bf16.mxu0 %v3009
        %3699 = vmatpush1.bf16.msra.mxu0 %v3008
        %3700 = vmatprep.subr.bf16.mxu0 %v3039
        %3701 = vmatpush2.bf16.msra.mxu0 %v3038
        %3702 = vmatprep.subr.bf16.mxu0 %v3037
        %3703 = vmatpush2.bf16.msra.mxu0 %v3036
        %3704 = vmatprep.subr.bf16.mxu0 %v3035
        %3705 = vmatpush2.bf16.msra.mxu0 %v3034
        %3706 = vmatprep.subr.bf16.mxu0 %v3033
        %3707 = vmatpush2.bf16.msra.mxu0 %v3032
        %3708 = vmatprep.subr.bf16.mxu0 %v3031
        %3709 = vmatpush2.bf16.msra.mxu0 %v3030
        %3710 = vmatprep.subr.bf16.mxu0 %v3029
        %3711 = vmatpush2.bf16.msra.mxu0 %v3028
        %3712 = vmatprep.subr.bf16.mxu0 %v3027
        %3713 = vmatpush2.bf16.msra.mxu0 %v3026
        %3714 = vmatprep.subr.bf16.mxu0 %v3025
        %3715 = vmatpush2.bf16.msra.mxu0 %v3024
        %3716 = vmatprep.mubr.bf16.mxu0 %v2727
        %3717 = vmatmul.mubr.bf16.gmra.mxu0 %v2726
        %v3718 = vpop.f32.mrf.mxu0
        %v3719 = vadd.f32 %v2809, %v3718
        %v3720 = vpop.f32.mrf.mxu0
        %v3721 = vadd.f32 %v2813, %v3720
        %v3722 = vpop.f32.mrf.mxu0
        %v3723 = vpop.f32.mrf.mxu0
        %3724 = vdwg.mxu0
        %3725 = vmatprep.subr.bf16.mxu0 %v3055
        %3726 = vmatpush1.bf16.msra.mxu0 %v3054
        %3727 = vmatprep.subr.bf16.mxu0 %v3053
        %3728 = vmatpush1.bf16.msra.mxu0 %v3052
        %3729 = vmatprep.subr.bf16.mxu0 %v3051
        %3730 = vmatpush1.bf16.msra.mxu0 %v3050
        %3731 = vmatprep.subr.bf16.mxu0 %v3049
        %3732 = vmatpush1.bf16.msra.mxu0 %v3048
        %3733 = vmatprep.subr.bf16.mxu0 %v3047
        %3734 = vmatpush1.bf16.msra.mxu0 %v3046
        %3735 = vmatprep.subr.bf16.mxu0 %v3045
        %3736 = vmatpush1.bf16.msra.mxu0 %v3044
        %3737 = vmatprep.subr.bf16.mxu0 %v3043
        %3738 = vmatpush1.bf16.msra.mxu0 %v3042
        %3739 = vmatprep.subr.bf16.mxu0 %v3041
        %3740 = vmatpush1.bf16.msra.mxu0 %v3040
        %3741 = vmatprep.subr.bf16.mxu0 %v3071
        %3742 = vmatpush2.bf16.msra.mxu0 %v3070
        %3743 = vmatprep.subr.bf16.mxu0 %v3069
        %3744 = vmatpush2.bf16.msra.mxu0 %v3068
        %3745 = vmatprep.subr.bf16.mxu0 %v3067
        %3746 = vmatpush2.bf16.msra.mxu0 %v3066
        %3747 = vmatprep.subr.bf16.mxu0 %v3065
        %3748 = vmatpush2.bf16.msra.mxu0 %v3064
        %3749 = vmatprep.subr.bf16.mxu0 %v3063
        %3750 = vmatpush2.bf16.msra.mxu0 %v3062
        %3751 = vmatprep.subr.bf16.mxu0 %v3061
        %3752 = vmatpush2.bf16.msra.mxu0 %v3060
        %3753 = vmatprep.subr.bf16.mxu0 %v3059
        %3754 = vmatpush2.bf16.msra.mxu0 %v3058
        %3755 = vmatprep.subr.bf16.mxu0 %v3057
        %3756 = vmatpush2.bf16.msra.mxu0 %v3056
        %3757 = vmatprep.mubr.bf16.mxu0 %v2729
        %3758 = vmatmul.mubr.bf16.gmra.mxu0 %v2728
        %v3759 = vpop.f32.mrf.mxu0
        %v3760 = vadd.f32 %v3719, %v3759
        %v3761 = vpop.f32.mrf.mxu0
        %v3762 = vadd.f32 %v3721, %v3761
        %v3763 = vpop.f32.mrf.mxu0
        %v3764 = vpop.f32.mrf.mxu0
        %3765 = vdwg.mxu0
        %v3768 = vrot.slane %v2244, 1
        %v3769 = vrot.slane %v2245, 1
        %v3772 = vsel %vm436, %v3768, 0.0
        %v3773 = vsel %vm436, %v3769, 0.0
        %v3774 = vpack.c.bf16 %v3772, %v3772
        %v3775 = vpack.c.bf16 %v3773, %v3773
        %3776 = vmatprep.subr.bf16.mxu0 %v3489
        %3777 = vmatpush1.bf16.msra.mxu0 %v3488
        %3778 = vmatprep.subr.bf16.mxu0 %v3487
        %3779 = vmatpush1.bf16.msra.mxu0 %v3486
        %3780 = vmatprep.subr.bf16.mxu0 %v3485
        %3781 = vmatpush1.bf16.msra.mxu0 %v3484
        %3782 = vmatprep.subr.bf16.mxu0 %v3483
        %3783 = vmatpush1.bf16.msra.mxu0 %v3482
        %3784 = vmatprep.subr.bf16.mxu0 %v3481
        %3785 = vmatpush1.bf16.msra.mxu0 %v3480
        %3786 = vmatprep.subr.bf16.mxu0 %v3479
        %3787 = vmatpush1.bf16.msra.mxu0 %v3478
        %3788 = vmatprep.subr.bf16.mxu0 %v3477
        %3789 = vmatpush1.bf16.msra.mxu0 %v3476
        %3790 = vmatprep.subr.bf16.mxu0 %v3475
        %3791 = vmatpush1.bf16.msra.mxu0 %v3474
        %3792 = vmatprep.subr.bf16.mxu0 %v3505
        %3793 = vmatpush2.bf16.msra.mxu0 %v3504
        %3794 = vmatprep.subr.bf16.mxu0 %v3503
        %3795 = vmatpush2.bf16.msra.mxu0 %v3502
        %3796 = vmatprep.subr.bf16.mxu0 %v3501
        %3797 = vmatpush2.bf16.msra.mxu0 %v3500
        %3798 = vmatprep.subr.bf16.mxu0 %v3499
        %3799 = vmatpush2.bf16.msra.mxu0 %v3498
        %3800 = vmatprep.subr.bf16.mxu0 %v3497
        %3801 = vmatpush2.bf16.msra.mxu0 %v3496
        %3802 = vmatprep.subr.bf16.mxu0 %v3495
        %3803 = vmatpush2.bf16.msra.mxu0 %v3494
        %3804 = vmatprep.subr.bf16.mxu0 %v3493
        %3805 = vmatpush2.bf16.msra.mxu0 %v3492
        %3806 = vmatprep.subr.bf16.mxu0 %v3491
        %3807 = vmatpush2.bf16.msra.mxu0 %v3490
        %3808 = vmatprep.mubr.bf16.mxu0 %v2729
        %3809 = vmatmul.mubr.bf16.gmra.mxu0 %v2728
        %v3810 = vpop.f32.mrf.mxu0
        %v3811 = vadd.f32 %v2809, %v3810
        %v3812 = vpop.f32.mrf.mxu0
        %v3813 = vadd.f32 %v2813, %v3812
        %v3814 = vpop.f32.mrf.mxu0
        %v3815 = vpop.f32.mrf.mxu0
        %3816 = vdwg.mxu0
        %3817 = vmatprep.subr.bf16.mxu0 %v3521
        %3818 = vmatpush1.bf16.msra.mxu0 %v3520
        %3819 = vmatprep.subr.bf16.mxu0 %v3519
        %3820 = vmatpush1.bf16.msra.mxu0 %v3518
        %3821 = vmatprep.subr.bf16.mxu0 %v3517
        %3822 = vmatpush1.bf16.msra.mxu0 %v3516
        %3823 = vmatprep.subr.bf16.mxu0 %v3515
        %3824 = vmatpush1.bf16.msra.mxu0 %v3514
        %3825 = vmatprep.subr.bf16.mxu0 %v3513
        %3826 = vmatpush1.bf16.msra.mxu0 %v3512
        %3827 = vmatprep.subr.bf16.mxu0 %v3511
        %3828 = vmatpush1.bf16.msra.mxu0 %v3510
        %3829 = vmatprep.subr.bf16.mxu0 %v3509
        %3830 = vmatpush1.bf16.msra.mxu0 %v3508
        %3831 = vmatprep.subr.bf16.mxu0 %v3507
        %3832 = vmatpush1.bf16.msra.mxu0 %v3506
        %3833 = vmatprep.subr.bf16.mxu0 %v3537
        %3834 = vmatpush2.bf16.msra.mxu0 %v3536
        %3835 = vmatprep.subr.bf16.mxu0 %v3535
        %3836 = vmatpush2.bf16.msra.mxu0 %v3534
        %3837 = vmatprep.subr.bf16.mxu0 %v3533
        %3838 = vmatpush2.bf16.msra.mxu0 %v3532
        %3839 = vmatprep.subr.bf16.mxu0 %v3531
        %3840 = vmatpush2.bf16.msra.mxu0 %v3530
        %3841 = vmatprep.subr.bf16.mxu0 %v3529
        %3842 = vmatpush2.bf16.msra.mxu0 %v3528
        %3843 = vmatprep.subr.bf16.mxu0 %v3527
        %3844 = vmatpush2.bf16.msra.mxu0 %v3526
        %3845 = vmatprep.subr.bf16.mxu0 %v3525
        %3846 = vmatpush2.bf16.msra.mxu0 %v3524
        %3847 = vmatprep.subr.bf16.mxu0 %v3523
        %3848 = vmatpush2.bf16.msra.mxu0 %v3522
        %3849 = vmatprep.mubr.bf16.mxu0 %v3775
        %3850 = vmatmul.mubr.bf16.gmra.mxu0 %v3774
        %v3851 = vpop.f32.mrf.mxu0
        %v3852 = vadd.f32 %v3811, %v3851
        %v3853 = vpop.f32.mrf.mxu0
        %v3854 = vadd.f32 %v3813, %v3853
        %v3855 = vpop.f32.mrf.mxu0
        %v3856 = vpop.f32.mrf.mxu0
        %3857 = vdwg.mxu0
        %3860 = vrot.lane.b32.xlu0 %v3678, 16
        %v3861 = vpop.permute.xlu0 %3860
        %3862 = vrot.lane.b32.xlu0 %v3680, 16
        %v3863 = vpop.permute.xlu0 %3862
        %v3864 = vsel %vm461, %v3861, %v3863
        %3869 = vrot.lane.b32.xlu0 %v3760, 32
        %v3870 = vpop.permute.xlu0 %3869
        %3871 = vrot.lane.b32.xlu0 %v3762, 32
        %v3872 = vpop.permute.xlu0 %3871
        %vm3873 = vcmask 261120
        %v3874 = vsel %vm3873, %v3870, %v3872
        %3879 = vrot.lane.b32.xlu0 %v3852, 48
        %v3880 = vpop.permute.xlu0 %3879
        %3881 = vrot.lane.b32.xlu0 %v3854, 48
        %v3882 = vpop.permute.xlu0 %3881
        %v3883 = vsel %vm808, %v3880, %v3882
        %v3885 = vsel %vm461, %v3214, %v3861
        %v3886 = vsel %vm3873, %v3864, %v3870
        %v3887 = vsel %vm808, %v3874, %v3880
        %v3892 = vcombine.low %v3212, %v3885
        %v3893 = vcombine.low %v3886, %v3887
        %v3895 = vunpack.c.l.s4 1983009808
        %v3896 = vunpack.c.0.s8 %v3895
        %v3897 = vlaneseq
        %v3898 = vshrl.u32 %v3897, 7
        %v3899 = vsub.s32 %v3896, %v3898
        %v3900 = vrot.slane %v3892, %v3899
        %v3902 = vunpack.c.l.s4 1983009808
        %v3903 = vunpack.c.0.s8 %v3902
        %v3904 = vlaneseq
        %v3905 = vshrl.u32 %v3904, 7
        %v3906 = vsub.s32 %v3903, %v3905
        %v3907 = vrot.slane %v3893, %v3906
        %v3908 = vcombine.low %v3900, %v3907
        %v3910 = vunpack.c.l.s4 1983009808
        %v3911 = vunpack.c.0.s8 %v3910
        %v3912 = vlaneseq
        %v3913 = vshrl.u32 %v3912, 7
        %v3914 = vsub.s32 %v3911, %v3913
        %v3915 = vrot.slane %v3883, %v3914
        %3918 = vst [vmem:[%s409] sm:$0xff] %v3908
        %vm3919 = vcmask 517120
        %3920 = vst.msk [vmem:[%s409 + $0x8] sm:$0x3] %vm3919, %v3915
        %s3921 = sand.u32 %s271, 1
        %s3922 = scalar_lea.sflag [#allocation4], %s3921
        %s3923 = sand.u32 %s271, 1
        %s3924 = smul.addr %s3923, 10
        %s3925 = scalar_lea.vmem [#allocation7], %s3924
        // Predicated region
        $region73: #{tpu_custom_call.1} parent=63 // pred_check
          %p3926 = pneg %p281
        $region74: #{tpu_custom_call.1} parent=63 // pred_check_branch
          %3928 = sbr.rel (%p3926) target = $region76
        $region75: #{tpu_custom_call.1} parent=63 // pred_region
          %s3930 = ssub.s32 160, 160
          %3931 = vsyncadd %s3922, %s3930
          %s3932 = smul.addr %s27, 5
          %s3933 = smul.addr %s3932, 32
          %s3934 = scalar_lea.hbm %s11, %s3933
          %s3936 = sshll.u32 %s3925, 4
          %s3937 = int_to_ptr.vmem [resolvable:$true] %s3936
          %3939 = dma.vmem_to_hbm [thread:$0]  %s3937, 160, %s3934, %s3922
        $region76: #{tpu_custom_call.1} parent=63 // pred_fallthru
          _
      $region64: #{tpu_custom_call.1} parent=5 // pred_fallthru
        _
      %p3940 = scmp.le.s32.totalorder 2, %s22
      // Predicated region
      $region77: #{tpu_custom_call.1} parent=5 // pred_check
        %p3941 = pneg %p3940
      $region78: #{tpu_custom_call.1} parent=5 // pred_check_branch
        %3943 = sbr.rel (%p3941) target = $region80
      $region79: #{tpu_custom_call.1} parent=5 // pred_region
        %s3944 = ssub.s32 %s22, 2
        // Predicated region
        $region81: #{tpu_custom_call.1} parent=79 // pred_check
          %p3945 = pneg %p287
        $region82: #{tpu_custom_call.1} parent=79 // pred_check_branch
          %3947 = sbr.rel (%p3945) target = $region84
        $region83: #{tpu_custom_call.1} parent=79 // pred_region
          %s3948 = sand.u32 %s272, 1
          %s3949 = scalar_lea.sflag [#allocation4], %s3948
          %s3950 = sand.u32 %s272, 1
          %s3951 = smul.addr %s3950, 10
          %s3952 = scalar_lea.vmem [#allocation7], %s3951
          %3953 = dma.done %s3949, 160
        $region84: #{tpu_custom_call.1} parent=79 // pred_fallthru
          _
      $region80: #{tpu_custom_call.1} parent=5 // pred_fallthru
        _
    $region6: #{tpu_custom_call.1} parent=1 // loop_footer
      %s26 = sadd.s32 1, %s22
    $region7: #{tpu_custom_call.1} parent=1 // loop_footer_branch
      %21 = sbr.rel target = $region3
    $region8: #{tpu_custom_call.1} parent=1 // loop_exit
      _
    %3954 = vsyncpa [#allocation3], 1
    %s3955 = scalar_lea.sflag [#allocation3], 1
    %3956 = vsyncpa %s3955, 1
    %3957 = vsyncpa [#allocation6], 1
    %3958 = vsyncpa [#allocation4], 1
    %s3959 = scalar_lea.sflag [#allocation4], 1
    %3960 = vsyncpa %s3959, 1

</llo_original>
